<compile_context>
chip_gen: v7x
topology: tpu7x:2x2x1
jax: 0.10.0
libtpu: 0.0.40
codegen_flags: <defaults>
</compile_context>

<pallas_src>
import jax
import jax.numpy as jnp
from jax.experimental import pallas as pl
from jax.experimental.pallas import tpu as pltpu


# ----------------------------------------------------------------------------
# Configuration (small but structurally faithful to the module)
# ----------------------------------------------------------------------------
EMB = 32              # embedding_size  (comp_embed_layer_sizes[-1])
LSTM_E = 16           # lstm_embedding_size (bidirectional -> 2*LSTM_E = 32)
LOOPS = 20            # loops_tensor_size
INPUT_SIZE = 74       # module's input_size arg (33 + 36 + 5)
COMP_SIZES = [INPUT_SIZE + 2 * LSTM_E, 64, 48, 32, EMB]   # comp_embedding layers
REG_SIZES = [EMB, 32, EMB]                                # regression layers
CAT_SIZES = [2 * EMB + LOOPS, 32, EMB]                    # concat layers
FEAT = 33 + 36 * 5 + 5                                    # comps_tensor last dim = 218
T_BI = 4                                                  # comps_embed LSTM seq length


# ----------------------------------------------------------------------------
# In-kernel helpers
# ----------------------------------------------------------------------------
def _elu(y):
    # jnp.where evaluates both branches; the min() only guards exp overflow.
    return jnp.where(y > 0, y, jnp.exp(jnp.minimum(y, 0.0)) - 1.0)


# ----------------------------------------------------------------------------
# Static (trace-time) tree analysis
# ----------------------------------------------------------------------------
def flatten_tree(tree):
    """Assign node ids, collect children / comps / loop indices, group by level."""
    nodes = []

    def visit(node):
        child_ids = [visit(c) for c in node["child_list"]]
        nid = len(nodes)
        level = 0 if not child_ids else 1 + max(nodes[c]["level"] for c in child_ids)
        comps = ([int(i) for i in list(node["computations_indices"])]
                 if node["has_comps"] else [])
        nodes.append({"id": nid, "children": child_ids, "comps": comps,
                      "loop": int(node["loop_index"][0]), "level": level})
        return nid

    root_id = visit(tree)
    depth = nodes[root_id]["level"]
    levels = [[n for n in nodes if n["level"] == lv] for lv in range(depth + 1)]
    return levels, root_id


# ----------------------------------------------------------------------------
# The single fused kernel (built per static tree shape)
# ----------------------------------------------------------------------------
def build_kernel(levels, root_id, names, B, N):
    NB = N * B
    H2 = 2 * LSTM_E           # combined [fwd|bwd] hidden width = 32

    def kernel(*refs):
        assert len(refs) == len(names) + 3
        xp_ref, loops_ref = refs[0], refs[1]
        o_ref = refs[-1]
        P = {k: r[...] for k, r in zip(names, refs[2:-1])}

        def dot(a, w):            # bf16 operands, f32 accumulation on the MXU
            return jnp.dot(a.astype(w.dtype), w, preferred_element_type=jnp.float32)

        # ============ prefix: seperate_vector + encode_vectors + bi-LSTM ========
        x = xp_ref[...]                                   # (N*B, 218), rows (comp, batch)
        first = x[:, :33]
        finalm = x[:, 33:69]
        third = x[:, 33 + 36 * 5:]
        vs = [x[:, 69 + 36 * t: 105 + 36 * t] for t in range(T_BI)]

        # encode_vectors for all 4 timesteps in ONE matmul (input-projection hoist)
        Xv = jnp.concatenate(vs, axis=0)                  # (4*NB, 36)
        E = dot(Xv, P["enc_w"]) + P["enc_b"]              # (4*NB, 36)

        # hoisted bi-LSTM input projection; gates interleaved on 8*H = 128 lanes
        Zf = dot(E, P["bi_wih_f"])                        # fwd-lane contributions
        Zb = dot(E, P["bi_wih_b"])                        # bwd-lane contributions

        h = jnp.zeros((NB, H2), jnp.float32)              # [h_fwd | h_bwd]
        c = jnp.zeros((NB, H2), jnp.float32)
        for s in range(T_BI):
            g = (Zf[s * NB:(s + 1) * NB]
                 + Zb[(T_BI - 1 - s) * NB:(T_BI - s) * NB]
                 + P["bi_b"]
                 + dot(h, P["bi_whh"]))                   # ONE 128-lane recurrent matmul
            i = jax.nn.sigmoid(g[:, 0 * H2:1 * H2])
            f = jax.nn.sigmoid(g[:, 1 * H2:2 * H2])
            gg = jnp.tanh(g[:, 2 * H2:3 * H2])
            o = jax.nn.sigmoid(g[:, 3 * H2:4 * H2])
            c = f * c + i * gg
            h = o * jnp.tanh(c)
        prog = h                                          # (NB, 32) == torch [h_fwd|h_bwd]

        # ========= comp_embedding MLP (first layer row-split: no lane concat) ===
        y = (dot(first, P["ce0_wa"]) + dot(finalm, P["ce0_wb"])
             + dot(prog, P["ce0_wc"]) + dot(third, P["ce0_wd"]) + P["ce0_b"])
        y = _elu(y)
        y = _elu(dot(y, P["ce1_w"]) + P["ce1_b"])
        y = _elu(dot(y, P["ce2_w"]) + P["ce2_b"])
        ce = _elu(dot(y, P["ce3_w"]) + P["ce3_b"])        # (NB, EMB) comps_embeddings

        no_nodes_b = jnp.broadcast_to(P["no_nodes"], (B, EMB))
        no_comps_b = jnp.broadcast_to(P["no_comps"], (B, EMB))
        zeros_b = jnp.zeros((B, EMB), jnp.float32)

        def lstm_level(seqs, wih, whh, bias):
            """Level-batched, lane-stacked LSTM over trace-time-static sequences.

            seqs: list (one per node) of lists of (B, EMB) arrays.
            Returns the list of final hidden states, one (B, EMB) per node.
            """
            n_nodes = len(seqs)
            T = max(len(s) for s in seqs)
            M = n_nodes * B
            xs, masks = [], []
            for t in range(T):
                xs.append(jnp.concatenate(
                    [s[t] if t < len(s) else zeros_b for s in seqs], axis=0))
                if all(t < len(s) for s in seqs):
                    masks.append(None)
                else:
                    vals = []
                    for s in seqs:
                        vals += [1.0 if t < len(s) else 0.0] * B
                    masks.append(jnp.asarray(vals, dtype=jnp.float32).reshape(M, 1))
            # hoisted input projection: ONE (T*M, EMB) x (EMB, 4*EMB) matmul
            Xall = jnp.concatenate(xs, axis=0) if T > 1 else xs[0]
            Z = dot(Xall, wih) + bias
            hh = jnp.zeros((M, EMB), jnp.float32)
            cc = jnp.zeros((M, EMB), jnp.float32)
            for t in range(T):
                g = Z[t * M:(t + 1) * M] + dot(hh, whh)   # ONE 128-lane recurrent matmul
                i = jax.nn.sigmoid(g[:, 0 * EMB:1 * EMB])
                f = jax.nn.sigmoid(g[:, 1 * EMB:2 * EMB])
                gg = jnp.tanh(g[:, 2 * EMB:3 * EMB])
                o = jax.nn.sigmoid(g[:, 3 * EMB:4 * EMB])
                c_new = f * cc + i * gg
                h_new = o * jnp.tanh(c_new)
                m = masks[t]
                if m is None:
                    hh, cc = h_new, c_new
                else:
                    hh = m * h_new + (1.0 - m) * hh
                    cc = m * c_new + (1.0 - m) * cc
            return [hh[k * B:(k + 1) * B] for k in range(n_nodes)]

        # ========== tree recursion: statically unrolled + level-batched =========
        node_h = {}
        for lvl in levels:
            ch_nodes = [n for n in lvl if n["children"]]
            nodes_h_map = {}
            if ch_nodes:
                seqs = [[node_h[cid] for cid in n["children"]] for n in ch_nodes]
                outs = lstm_level(seqs, P["nl_wih"], P["nl_whh"], P["nl_b"])
                nodes_h_map = {n["id"]: o for n, o in zip(ch_nodes, outs)}

            cp_nodes = [n for n in lvl if n["comps"]]
            comps_h_map = {}
            if cp_nodes:
                seqs = [[ce[cix * B:(cix + 1) * B] for cix in n["comps"]]
                        for n in cp_nodes]
                outs = lstm_level(seqs, P["cl_wih"], P["cl_whh"], P["cl_b"])
                comps_h_map = {n["id"]: o for n, o in zip(cp_nodes, outs)}

            # concat MLP for the whole level; first layer row-split [nodes|comps|loops]
            nh = jnp.concatenate(
                [nodes_h_map.get(n["id"], no_nodes_b) for n in lvl], axis=0)
            chh = jnp.concatenate(
                [comps_h_map.get(n["id"], no_comps_b) for n in lvl], axis=0)
            lp = jnp.concatenate([loops_ref[n["loop"]] for n in lvl], axis=0)
            y = (dot(nh, P["cat0_wa"]) + dot(chh, P["cat0_wb"])
                 + dot(lp, P["cat0_wc"]) + P["cat0_b"])
            y = _elu(y)
            y = _elu(dot(y, P["cat1_w"]) + P["cat1_b"])   # (len(lvl)*B, EMB)
            for k, n in enumerate(lvl):
                node_h[n["id"]] = y[k * B:(k + 1) * B]

        # ================= regression + predict + ReLU ==========================
        r = node_h[root_id]
        r = _elu(dot(r, P["reg0_w"]) + P["reg0_b"])
        r = _elu(dot(r, P["reg1_w"]) + P["reg1_b"])
        out = dot(r, P["pred_w"]) + P["pred_b"]           # (B, 1)
        o_ref[...] = jnp.maximum(out, 0.0)

    return kernel


# ----------------------------------------------------------------------------
# Parameters (PyTorch layout) + one-time re-layout for the kernel
# ----------------------------------------------------------------------------
def init_params(key):
    """Random parameters in PyTorch layout (Linear: (out,in); LSTM: (4H, in))."""
    keys = iter(jax.random.split(key, 64))

    def lin(dout, din):
        return (0.1 * jax.random.normal(next(keys), (dout, din), jnp.float32),
                0.1 * jax.random.normal(next(keys), (dout,), jnp.float32))

    def lstm(din, h):
        w_ih, b_ih = lin(4 * h, din)
        w_hh, b_hh = lin(4 * h, h)
        return (w_ih, w_hh, b_ih, b_hh)

    p = {}
    p["enc"] = lin(36, 36)                                # encode_vectors
    p["ce_f"] = lstm(36, LSTM_E)                          # comps_embed fwd
    p["ce_b"] = lstm(36, LSTM_E)                          # comps_embed bwd
    p["comp_embed"] = [lin(COMP_SIZES[i + 1], COMP_SIZES[i])
                       for i in range(len(COMP_SIZES) - 1)]
    p["regression"] = [lin(REG_SIZES[i + 1], REG_SIZES[i])
                       for i in range(len(REG_SIZES) - 1)]
    p["concat"] = [lin(CAT_SIZES[i + 1], CAT_SIZES[i])
                   for i in range(len(CAT_SIZES) - 1)]
    p["predict"] = lin(1, REG_SIZES[-1])
    p["nodes_lstm"] = lstm(EMB, EMB)
    p["comps_lstm"] = lstm(EMB, EMB)
    p["no_comps"] = 0.1 * jax.random.normal(next(keys), (1, EMB), jnp.float32)
    p["no_nodes"] = 0.1 * jax.random.normal(next(keys), (1, EMB), jnp.float32)
    return p


def _pack_lstm(lstm_p):
    """Unidirectional LSTM -> lane-stacked gates: Wih (Din,4H), Whh (H,4H), b (1,4H)."""
    w_ih, w_hh, b_ih, b_hh = lstm_p
    bf = jnp.bfloat16
    return (jnp.transpose(w_ih).astype(bf),
            jnp.transpose(w_hh).astype(bf),
            (b_ih + b_hh).reshape(1, -1).astype(jnp.float32))


def _pack_bilstm(fwd_p, bwd_p, h):
    """Bidirectional LSTM -> interleaved 8h-lane gate layout
    [i_f i_b f_f f_b g_f g_b o_f o_b]: both directions advance on the combined
    [h_fwd|h_bwd] state with ONE (2h, 8h) recurrent matmul per step."""
    bf = jnp.bfloat16
    wih_f, whh_f, bih_f, bhh_f = fwd_p
    wih_b, whh_b, bih_b, bhh_b = bwd_p
    din = wih_f.shape[1]
    wf = jnp.zeros((din, 8 * h), jnp.float32)
    wb = jnp.zeros((din, 8 * h), jnp.float32)
    whh = jnp.zeros((2 * h, 8 * h), jnp.float32)
    bias = jnp.zeros((1, 8 * h), jnp.float32)
    wihfT, wihbT = jnp.transpose(wih_f), jnp.transpose(wih_b)
    whhfT, whhbT = jnp.transpose(whh_f), jnp.transpose(whh_b)
    bsf, bsb = bih_f + bhh_f, bih_b + bhh_b
    for g in range(4):                     # torch gate order [i, f, g, o]
        cf, cb = 2 * g * h, 2 * g * h + h
        wf = wf.at[:, cf:cf + h].set(wihfT[:, g * h:(g + 1) * h])
        wb = wb.at[:, cb:cb + h].set(wihbT[:, g * h:(g + 1) * h])
        whh = whh.at[:h, cf:cf + h].set(whhfT[:, g * h:(g + 1) * h])
        whh = whh.at[h:, cb:cb + h].set(whhbT[:, g * h:(g + 1) * h])
        bias = bias.at[0, cf:cf + h].set(bsf[g * h:(g + 1) * h])
        bias = bias.at[0, cb:cb + h].set(bsb[g * h:(g + 1) * h])
    return wf.astype(bf), wb.astype(bf), whh.astype(bf), bias


def prep_params(p):
    """One-time weight re-layout: transposes, gate packing, row splits, bf16 casts."""
    bf = jnp.bfloat16
    q = {}

    def lin_prep(name, wb):
        w, b = wb
        q[name + "_w"] = jnp.transpose(w).astype(bf)
        q[name + "_b"] = b.reshape(1, -1).astype(jnp.float32)

    lin_prep("enc", p["enc"])
    q["bi_wih_f"], q["bi_wih_b"], q["bi_whh"], q["bi_b"] = _pack_bilstm(
        p["ce_f"], p["ce_b"], LSTM_E)

    # comp_embedding layer 0: row split into [first(33)|final_matrix(36)|prog(32)|third(5)]
    w0, b0 = p["comp_embed"][0]
    w0T = jnp.transpose(w0)
    q["ce0_wa"] = w0T[:33].astype(bf)
    q["ce0_wb"] = w0T[33:69].astype(bf)
    q["ce0_wc"] = w0T[69:69 + 2 * LSTM_E].astype(bf)
    q["ce0_wd"] = w0T[69 + 2 * LSTM_E:].astype(bf)
    q["ce0_b"] = b0.reshape(1, -1).astype(jnp.float32)
    for i in range(1, len(p["comp_embed"])):
        lin_prep("ce%d" % i, p["comp_embed"][i])

    q["nl_wih"], q["nl_whh"], q["nl_b"] = _pack_lstm(p["nodes_lstm"])
    q["cl_wih"], q["cl_whh"], q["cl_b"] = _pack_lstm(p["comps_lstm"])
    q["no_nodes"] = p["no_nodes"].astype(jnp.float32)
    q["no_comps"] = p["no_comps"].astype(jnp.float32)

    # concat layer 0: row split into [nodes_h(32)|comps_h(32)|loop(20)]
    cw0, cb0 = p["concat"][0]
    cw0T = jnp.transpose(cw0)
    q["cat0_wa"] = cw0T[:EMB].astype(bf)
    q["cat0_wb"] = cw0T[EMB:2 * EMB].astype(bf)
    q["cat0_wc"] = cw0T[2 * EMB:].astype(bf)
    q["cat0_b"] = cb0.reshape(1, -1).astype(jnp.float32)
    lin_prep("cat1", p["concat"][1])

    lin_prep("reg0", p["regression"][0])
    lin_prep("reg1", p["regression"][1])
    lin_prep("pred", p["predict"])
    return q


# ----------------------------------------------------------------------------
# Cost estimate (advisory, for XLA scheduling around the fused call)
# ----------------------------------------------------------------------------
def _estimate_cost(levels, B, N):
    NB = N * B
    flops, trans = 0, 0
    flops += 2 * (4 * NB) * 36 * 36                        # encode_vectors
    flops += 2 * 2 * (4 * NB) * 36 * (8 * LSTM_E)          # hoisted bi-LSTM input proj
    flops += 2 * T_BI * NB * (2 * LSTM_E) * (8 * LSTM_E)   # bi-LSTM recurrence
    trans += T_BI * NB * (8 * LSTM_E)
    flops += 2 * NB * sum(a * b for a, b in zip(COMP_SIZES[:-1], COMP_SIZES[1:]))
    trans += NB * sum(COMP_SIZES[1:])
    for lvl in levels:
        L = len(lvl)
        for key in ("children", "comps"):
            sub = [n for n in lvl if n[key]]
            if sub:
                T = max(len(n[key]) for n in sub)
                M = len(sub) * B
                flops += 2 * 2 * T * M * EMB * 4 * EMB
                trans += T * M * 4 * EMB
        flops += 2 * L * B * (2 * EMB * EMB + LOOPS * EMB + EMB * EMB)
        trans += 2 * L * B * EMB
    flops += 2 * B * (2 * EMB * EMB + EMB)
    trans += 2 * B * EMB
    return int(flops), int(trans)


# ----------------------------------------------------------------------------
# Forward wrapper: one pallas_call for the whole model
# ----------------------------------------------------------------------------
def make_forward(q, tree, B, N, n_loop_slots):
    names = tuple(q.keys())
    levels, root_id = flatten_tree(tree)
    kernel = build_kernel(levels, root_id, names, B, N)
    flops, trans = _estimate_cost(levels, B, N)
    param_bytes = sum(int(q[k].size) * q[k].dtype.itemsize for k in names)
    bytes_accessed = (param_bytes + 4 * B * N * FEAT
                      + 4 * n_loop_slots * B * LOOPS + 4 * B)

    n_inputs = 2 + len(names)
    call = pl.pallas_call(
        kernel,
        out_shape=jax.ShapeDtypeStruct((B, 1), jnp.float32),
        in_specs=[pl.BlockSpec(memory_space=pltpu.MemorySpace.VMEM)] * n_inputs,
        cost_estimate=pl.CostEstimate(flops=flops, transcendentals=trans,
                                      bytes_accessed=int(bytes_accessed)),
    )

    def forward(comps_tensor, loops_tensor, *params):
        # comp-major row order (c*B + b): per-comp (B, EMB) slabs stay contiguous
        xp = jnp.transpose(comps_tensor, (1, 0, 2)).reshape(N * B, FEAT)
        lt = jnp.transpose(loops_tensor, (1, 0, 2))        # (n_loop_slots, B, LOOPS)
        return call(xp, lt, *params)[:, 0]

    return forward, names


# ----------------------------------------------------------------------------
# Example run
# ----------------------------------------------------------------------------
if __name__ == "__main__":
    key = jax.random.PRNGKey(0)
    kp, kc, kl = jax.random.split(key, 3)

    raw = init_params(kp)
    params = prep_params(raw)       # one-time weight re-layout (outside forward pass)

    B, N, NLOOP = 2, 3, 4
    comps_tensor = jax.random.normal(kc, (B, N, FEAT), jnp.float32)        # (2, 3, 218)
    loops_tensor = jax.random.normal(kl, (B, NLOOP, LOOPS), jnp.float32)   # (2, 4, 20)

    # Small recursive tree (same structure the torch recursion walks).
    leaf = {"child_list": [], "has_comps": False, "loop_index": [3]}
    node1 = {"child_list": [], "has_comps": True,
             "computations_indices": [0, 1], "loop_index": [1]}
    node2 = {"child_list": [leaf], "has_comps": True,
             "computations_indices": [2], "loop_index": [2]}
    tree = {"child_list": [node1, node2], "has_comps": False, "loop_index": [0]}

    forward, names = make_forward(params, tree, B, N, NLOOP)
    fwd = jax.jit(forward)
    out = jax.block_until_ready(
        fwd(comps_tensor, loops_tensor, *[params[k] for k in names]))

    assert out.shape == (B,), out.shape
    assert bool(jnp.all(jnp.isfinite(out)))
    assert bool(jnp.all(out >= 0.0))
    print("KERNEL_OK")
</pallas_src>

<mosaic_0001>
module attributes {stable_mosaic.version = 11 : i64} {
  func.func @kernel(%arg0: memref<6x218xf32, #tpu.memory_space<vmem>>, %arg1: memref<4x2x20xf32, #tpu.memory_space<vmem>>, %arg2: memref<36x36xbf16, #tpu.memory_space<vmem>>, %arg3: memref<1x36xf32, #tpu.memory_space<vmem>>, %arg4: memref<36x128xbf16, #tpu.memory_space<vmem>>, %arg5: memref<36x128xbf16, #tpu.memory_space<vmem>>, %arg6: memref<32x128xbf16, #tpu.memory_space<vmem>>, %arg7: memref<1x128xf32, #tpu.memory_space<vmem>>, %arg8: memref<33x64xbf16, #tpu.memory_space<vmem>>, %arg9: memref<36x64xbf16, #tpu.memory_space<vmem>>, %arg10: memref<32x64xbf16, #tpu.memory_space<vmem>>, %arg11: memref<5x64xbf16, #tpu.memory_space<vmem>>, %arg12: memref<1x64xf32, #tpu.memory_space<vmem>>, %arg13: memref<64x48xbf16, #tpu.memory_space<vmem>>, %arg14: memref<1x48xf32, #tpu.memory_space<vmem>>, %arg15: memref<48x32xbf16, #tpu.memory_space<vmem>>, %arg16: memref<1x32xf32, #tpu.memory_space<vmem>>, %arg17: memref<32x32xbf16, #tpu.memory_space<vmem>>, %arg18: memref<1x32xf32, #tpu.memory_space<vmem>>, %arg19: memref<32x128xbf16, #tpu.memory_space<vmem>>, %arg20: memref<32x128xbf16, #tpu.memory_space<vmem>>, %arg21: memref<1x128xf32, #tpu.memory_space<vmem>>, %arg22: memref<32x128xbf16, #tpu.memory_space<vmem>>, %arg23: memref<32x128xbf16, #tpu.memory_space<vmem>>, %arg24: memref<1x128xf32, #tpu.memory_space<vmem>>, %arg25: memref<1x32xf32, #tpu.memory_space<vmem>>, %arg26: memref<1x32xf32, #tpu.memory_space<vmem>>, %arg27: memref<32x32xbf16, #tpu.memory_space<vmem>>, %arg28: memref<32x32xbf16, #tpu.memory_space<vmem>>, %arg29: memref<20x32xbf16, #tpu.memory_space<vmem>>, %arg30: memref<1x32xf32, #tpu.memory_space<vmem>>, %arg31: memref<32x32xbf16, #tpu.memory_space<vmem>>, %arg32: memref<1x32xf32, #tpu.memory_space<vmem>>, %arg33: memref<32x32xbf16, #tpu.memory_space<vmem>>, %arg34: memref<1x32xf32, #tpu.memory_space<vmem>>, %arg35: memref<32x32xbf16, #tpu.memory_space<vmem>>, %arg36: memref<1x32xf32, #tpu.memory_space<vmem>>, %arg37: memref<32x1xbf16, #tpu.memory_space<vmem>>, %arg38: memref<1x1xf32, #tpu.memory_space<vmem>>, %arg39: memref<2x1xf32, #tpu.memory_space<vmem>>) attributes {dimension_semantics = [], scalar_prefetch = 0 : i64, scratch_operands = 0 : i64, tpu.core_type = #tpu.core_type<tc>} {
    %c0 = arith.constant 0 : index
    %c0_0 = arith.constant 0 : index
    %0 = vector.load %arg2[%c0, %c0_0] : memref<36x36xbf16, #tpu.memory_space<vmem>>, vector<36x36xbf16>
    %c0_1 = arith.constant 0 : index
    %c0_2 = arith.constant 0 : index
    %1 = vector.load %arg3[%c0_1, %c0_2] : memref<1x36xf32, #tpu.memory_space<vmem>>, vector<1x36xf32>
    %c0_3 = arith.constant 0 : index
    %c0_4 = arith.constant 0 : index
    %2 = vector.load %arg4[%c0_3, %c0_4] : memref<36x128xbf16, #tpu.memory_space<vmem>>, vector<36x128xbf16>
    %c0_5 = arith.constant 0 : index
    %c0_6 = arith.constant 0 : index
    %3 = vector.load %arg5[%c0_5, %c0_6] : memref<36x128xbf16, #tpu.memory_space<vmem>>, vector<36x128xbf16>
    %c0_7 = arith.constant 0 : index
    %c0_8 = arith.constant 0 : index
    %4 = vector.load %arg6[%c0_7, %c0_8] : memref<32x128xbf16, #tpu.memory_space<vmem>>, vector<32x128xbf16>
    %c0_9 = arith.constant 0 : index
    %c0_10 = arith.constant 0 : index
    %5 = vector.load %arg7[%c0_9, %c0_10] : memref<1x128xf32, #tpu.memory_space<vmem>>, vector<1x128xf32>
    %c0_11 = arith.constant 0 : index
    %c0_12 = arith.constant 0 : index
    %6 = vector.load %arg8[%c0_11, %c0_12] : memref<33x64xbf16, #tpu.memory_space<vmem>>, vector<33x64xbf16>
    %c0_13 = arith.constant 0 : index
    %c0_14 = arith.constant 0 : index
    %7 = vector.load %arg9[%c0_13, %c0_14] : memref<36x64xbf16, #tpu.memory_space<vmem>>, vector<36x64xbf16>
    %c0_15 = arith.constant 0 : index
    %c0_16 = arith.constant 0 : index
    %8 = vector.load %arg10[%c0_15, %c0_16] : memref<32x64xbf16, #tpu.memory_space<vmem>>, vector<32x64xbf16>
    %c0_17 = arith.constant 0 : index
    %c0_18 = arith.constant 0 : index
    %9 = vector.load %arg11[%c0_17, %c0_18] : memref<5x64xbf16, #tpu.memory_space<vmem>>, vector<5x64xbf16>
    %c0_19 = arith.constant 0 : index
    %c0_20 = arith.constant 0 : index
    %10 = vector.load %arg12[%c0_19, %c0_20] : memref<1x64xf32, #tpu.memory_space<vmem>>, vector<1x64xf32>
    %c0_21 = arith.constant 0 : index
    %c0_22 = arith.constant 0 : index
    %11 = vector.load %arg13[%c0_21, %c0_22] : memref<64x48xbf16, #tpu.memory_space<vmem>>, vector<64x48xbf16>
    %c0_23 = arith.constant 0 : index
    %c0_24 = arith.constant 0 : index
    %12 = vector.load %arg14[%c0_23, %c0_24] : memref<1x48xf32, #tpu.memory_space<vmem>>, vector<1x48xf32>
    %c0_25 = arith.constant 0 : index
    %c0_26 = arith.constant 0 : index
    %13 = vector.load %arg15[%c0_25, %c0_26] : memref<48x32xbf16, #tpu.memory_space<vmem>>, vector<48x32xbf16>
    %c0_27 = arith.constant 0 : index
    %c0_28 = arith.constant 0 : index
    %14 = vector.load %arg16[%c0_27, %c0_28] : memref<1x32xf32, #tpu.memory_space<vmem>>, vector<1x32xf32>
    %c0_29 = arith.constant 0 : index
    %c0_30 = arith.constant 0 : index
    %15 = vector.load %arg17[%c0_29, %c0_30] : memref<32x32xbf16, #tpu.memory_space<vmem>>, vector<32x32xbf16>
    %c0_31 = arith.constant 0 : index
    %c0_32 = arith.constant 0 : index
    %16 = vector.load %arg18[%c0_31, %c0_32] : memref<1x32xf32, #tpu.memory_space<vmem>>, vector<1x32xf32>
    %c0_33 = arith.constant 0 : index
    %c0_34 = arith.constant 0 : index
    %17 = vector.load %arg19[%c0_33, %c0_34] : memref<32x128xbf16, #tpu.memory_space<vmem>>, vector<32x128xbf16>
    %c0_35 = arith.constant 0 : index
    %c0_36 = arith.constant 0 : index
    %18 = vector.load %arg20[%c0_35, %c0_36] : memref<32x128xbf16, #tpu.memory_space<vmem>>, vector<32x128xbf16>
    %c0_37 = arith.constant 0 : index
    %c0_38 = arith.constant 0 : index
    %19 = vector.load %arg21[%c0_37, %c0_38] : memref<1x128xf32, #tpu.memory_space<vmem>>, vector<1x128xf32>
    %c0_39 = arith.constant 0 : index
    %c0_40 = arith.constant 0 : index
    %20 = vector.load %arg22[%c0_39, %c0_40] : memref<32x128xbf16, #tpu.memory_space<vmem>>, vector<32x128xbf16>
    %c0_41 = arith.constant 0 : index
    %c0_42 = arith.constant 0 : index
    %21 = vector.load %arg23[%c0_41, %c0_42] : memref<32x128xbf16, #tpu.memory_space<vmem>>, vector<32x128xbf16>
    %c0_43 = arith.constant 0 : index
    %c0_44 = arith.constant 0 : index
    %22 = vector.load %arg24[%c0_43, %c0_44] : memref<1x128xf32, #tpu.memory_space<vmem>>, vector<1x128xf32>
    %c0_45 = arith.constant 0 : index
    %c0_46 = arith.constant 0 : index
    %23 = vector.load %arg25[%c0_45, %c0_46] : memref<1x32xf32, #tpu.memory_space<vmem>>, vector<1x32xf32>
    %c0_47 = arith.constant 0 : index
    %c0_48 = arith.constant 0 : index
    %24 = vector.load %arg26[%c0_47, %c0_48] : memref<1x32xf32, #tpu.memory_space<vmem>>, vector<1x32xf32>
    %c0_49 = arith.constant 0 : index
    %c0_50 = arith.constant 0 : index
    %25 = vector.load %arg27[%c0_49, %c0_50] : memref<32x32xbf16, #tpu.memory_space<vmem>>, vector<32x32xbf16>
    %c0_51 = arith.constant 0 : index
    %c0_52 = arith.constant 0 : index
    %26 = vector.load %arg28[%c0_51, %c0_52] : memref<32x32xbf16, #tpu.memory_space<vmem>>, vector<32x32xbf16>
    %c0_53 = arith.constant 0 : index
    %c0_54 = arith.constant 0 : index
    %27 = vector.load %arg29[%c0_53, %c0_54] : memref<20x32xbf16, #tpu.memory_space<vmem>>, vector<20x32xbf16>
    %c0_55 = arith.constant 0 : index
    %c0_56 = arith.constant 0 : index
    %28 = vector.load %arg30[%c0_55, %c0_56] : memref<1x32xf32, #tpu.memory_space<vmem>>, vector<1x32xf32>
    %c0_57 = arith.constant 0 : index
    %c0_58 = arith.constant 0 : index
    %29 = vector.load %arg31[%c0_57, %c0_58] : memref<32x32xbf16, #tpu.memory_space<vmem>>, vector<32x32xbf16>
    %c0_59 = arith.constant 0 : index
    %c0_60 = arith.constant 0 : index
    %30 = vector.load %arg32[%c0_59, %c0_60] : memref<1x32xf32, #tpu.memory_space<vmem>>, vector<1x32xf32>
    %c0_61 = arith.constant 0 : index
    %c0_62 = arith.constant 0 : index
    %31 = vector.load %arg33[%c0_61, %c0_62] : memref<32x32xbf16, #tpu.memory_space<vmem>>, vector<32x32xbf16>
    %c0_63 = arith.constant 0 : index
    %c0_64 = arith.constant 0 : index
    %32 = vector.load %arg34[%c0_63, %c0_64] : memref<1x32xf32, #tpu.memory_space<vmem>>, vector<1x32xf32>
    %c0_65 = arith.constant 0 : index
    %c0_66 = arith.constant 0 : index
    %33 = vector.load %arg35[%c0_65, %c0_66] : memref<32x32xbf16, #tpu.memory_space<vmem>>, vector<32x32xbf16>
    %c0_67 = arith.constant 0 : index
    %c0_68 = arith.constant 0 : index
    %34 = vector.load %arg36[%c0_67, %c0_68] : memref<1x32xf32, #tpu.memory_space<vmem>>, vector<1x32xf32>
    %c0_69 = arith.constant 0 : index
    %c0_70 = arith.constant 0 : index
    %35 = vector.load %arg37[%c0_69, %c0_70] : memref<32x1xbf16, #tpu.memory_space<vmem>>, vector<32x1xbf16>
    %c0_71 = arith.constant 0 : index
    %c0_72 = arith.constant 0 : index
    %36 = vector.load %arg38[%c0_71, %c0_72] : memref<1x1xf32, #tpu.memory_space<vmem>>, vector<1x1xf32>
    %c0_73 = arith.constant 0 : index
    %c0_74 = arith.constant 0 : index
    %37 = vector.load %arg0[%c0_73, %c0_74] : memref<6x218xf32, #tpu.memory_space<vmem>>, vector<6x218xf32>
    %38 = vector.extract_strided_slice %37 {offsets = [0, 0], sizes = [6, 33], strides = [1, 1]} : vector<6x218xf32> to vector<6x33xf32>
    %39 = vector.extract_strided_slice %37 {offsets = [0, 33], sizes = [6, 36], strides = [1, 1]} : vector<6x218xf32> to vector<6x36xf32>
    %40 = vector.extract_strided_slice %37 {offsets = [0, 213], sizes = [6, 5], strides = [1, 1]} : vector<6x218xf32> to vector<6x5xf32>
    %41 = vector.extract_strided_slice %37 {offsets = [0, 69], sizes = [6, 36], strides = [1, 1]} : vector<6x218xf32> to vector<6x36xf32>
    %42 = vector.extract_strided_slice %37 {offsets = [0, 105], sizes = [6, 36], strides = [1, 1]} : vector<6x218xf32> to vector<6x36xf32>
    %43 = vector.extract_strided_slice %37 {offsets = [0, 141], sizes = [6, 36], strides = [1, 1]} : vector<6x218xf32> to vector<6x36xf32>
    %44 = vector.extract_strided_slice %37 {offsets = [0, 177], sizes = [6, 36], strides = [1, 1]} : vector<6x218xf32> to vector<6x36xf32>
    %45 = tpu.concatenate %41, %42, %43, %44 in 0 : vector<6x36xf32>, vector<6x36xf32>, vector<6x36xf32>, vector<6x36xf32> -> vector<24x36xf32>
    %46 = arith.truncf %45 : vector<24x36xf32> to vector<24x36xbf16>
    %cst = arith.constant dense<0.000000e+00> : vector<24x36xf32>
    %47 = tpu.matmul %46, %0, %cst {dimension_numbers = #tpu.dot_dimension_numbers<[1], [0], [0], [1], [0, 0, 1, 1], [], []>} : vector<24x36xbf16>, vector<36x36xbf16>, vector<24x36xf32> -> vector<24x36xf32>
    %48 = vector.broadcast %1 : vector<1x36xf32> to vector<24x36xf32>
    %49 = arith.addf %47, %48 : vector<24x36xf32>
    %50 = arith.truncf %49 : vector<24x36xf32> to vector<24x36xbf16>
    %cst_75 = arith.constant dense<0.000000e+00> : vector<24x128xf32>
    %51 = tpu.matmul %50, %2, %cst_75 {dimension_numbers = #tpu.dot_dimension_numbers<[1], [0], [0], [1], [0, 0, 1, 1], [], []>} : vector<24x36xbf16>, vector<36x128xbf16>, vector<24x128xf32> -> vector<24x128xf32>
    %52 = arith.truncf %49 : vector<24x36xf32> to vector<24x36xbf16>
    %cst_76 = arith.constant dense<0.000000e+00> : vector<24x128xf32>
    %53 = tpu.matmul %52, %3, %cst_76 {dimension_numbers = #tpu.dot_dimension_numbers<[1], [0], [0], [1], [0, 0, 1, 1], [], []>} : vector<24x36xbf16>, vector<36x128xbf16>, vector<24x128xf32> -> vector<24x128xf32>
    %cst_77 = arith.constant 0.000000e+00 : f32
    %54 = vector.broadcast %cst_77 : f32 to vector<6x32xf32>
    %cst_78 = arith.constant 0.000000e+00 : f32
    %55 = vector.broadcast %cst_78 : f32 to vector<6x32xf32>
    %56 = vector.extract_strided_slice %51 {offsets = [0, 0], sizes = [6, 128], strides = [1, 1]} : vector<24x128xf32> to vector<6x128xf32>
    %57 = vector.extract_strided_slice %53 {offsets = [18, 0], sizes = [6, 128], strides = [1, 1]} : vector<24x128xf32> to vector<6x128xf32>
    %58 = arith.addf %56, %57 : vector<6x128xf32>
    %59 = vector.broadcast %5 : vector<1x128xf32> to vector<6x128xf32>
    %60 = arith.addf %58, %59 : vector<6x128xf32>
    %61 = arith.truncf %54 : vector<6x32xf32> to vector<6x32xbf16>
    %cst_79 = arith.constant dense<0.000000e+00> : vector<6x128xf32>
    %62 = tpu.matmul %61, %4, %cst_79 {dimension_numbers = #tpu.dot_dimension_numbers<[1], [0], [0], [1], [0, 0, 1, 1], [], []>} : vector<6x32xbf16>, vector<32x128xbf16>, vector<6x128xf32> -> vector<6x128xf32>
    %63 = arith.addf %60, %62 : vector<6x128xf32>
    %64 = vector.extract_strided_slice %63 {offsets = [0, 0], sizes = [6, 32], strides = [1, 1]} : vector<6x128xf32> to vector<6x32xf32>
    %65 = arith.negf %64 : vector<6x32xf32>
    %66 = math.exp %65 : vector<6x32xf32>
    %cst_80 = arith.constant 1.000000e+00 : f32
    %67 = vector.broadcast %cst_80 : f32 to vector<6x32xf32>
    %68 = arith.addf %67, %66 : vector<6x32xf32>
    %69 = arith.divf %67, %68 : vector<6x32xf32>
    %70 = vector.extract_strided_slice %63 {offsets = [0, 32], sizes = [6, 32], strides = [1, 1]} : vector<6x128xf32> to vector<6x32xf32>
    %71 = arith.negf %70 : vector<6x32xf32>
    %72 = math.exp %71 : vector<6x32xf32>
    %cst_81 = arith.constant 1.000000e+00 : f32
    %73 = vector.broadcast %cst_81 : f32 to vector<6x32xf32>
    %74 = arith.addf %73, %72 : vector<6x32xf32>
    %75 = arith.divf %73, %74 : vector<6x32xf32>
    %76 = vector.extract_strided_slice %63 {offsets = [0, 64], sizes = [6, 32], strides = [1, 1]} : vector<6x128xf32> to vector<6x32xf32>
    %77 = math.tanh %76 : vector<6x32xf32>
    %78 = vector.extract_strided_slice %63 {offsets = [0, 96], sizes = [6, 32], strides = [1, 1]} : vector<6x128xf32> to vector<6x32xf32>
    %79 = arith.negf %78 : vector<6x32xf32>
    %80 = math.exp %79 : vector<6x32xf32>
    %cst_82 = arith.constant 1.000000e+00 : f32
    %81 = vector.broadcast %cst_82 : f32 to vector<6x32xf32>
    %82 = arith.addf %81, %80 : vector<6x32xf32>
    %83 = arith.divf %81, %82 : vector<6x32xf32>
    %84 = arith.mulf %75, %55 : vector<6x32xf32>
    %85 = arith.mulf %69, %77 : vector<6x32xf32>
    %86 = arith.addf %84, %85 : vector<6x32xf32>
    %87 = math.tanh %86 : vector<6x32xf32>
    %88 = arith.mulf %83, %87 : vector<6x32xf32>
    %89 = vector.extract_strided_slice %51 {offsets = [6, 0], sizes = [6, 128], strides = [1, 1]} : vector<24x128xf32> to vector<6x128xf32>
    %90 = vector.extract_strided_slice %53 {offsets = [12, 0], sizes = [6, 128], strides = [1, 1]} : vector<24x128xf32> to vector<6x128xf32>
    %91 = arith.addf %89, %90 : vector<6x128xf32>
    %92 = vector.broadcast %5 : vector<1x128xf32> to vector<6x128xf32>
    %93 = arith.addf %91, %92 : vector<6x128xf32>
    %94 = arith.truncf %88 : vector<6x32xf32> to vector<6x32xbf16>
    %cst_83 = arith.constant dense<0.000000e+00> : vector<6x128xf32>
    %95 = tpu.matmul %94, %4, %cst_83 {dimension_numbers = #tpu.dot_dimension_numbers<[1], [0], [0], [1], [0, 0, 1, 1], [], []>} : vector<6x32xbf16>, vector<32x128xbf16>, vector<6x128xf32> -> vector<6x128xf32>
    %96 = arith.addf %93, %95 : vector<6x128xf32>
    %97 = vector.extract_strided_slice %96 {offsets = [0, 0], sizes = [6, 32], strides = [1, 1]} : vector<6x128xf32> to vector<6x32xf32>
    %98 = arith.negf %97 : vector<6x32xf32>
    %99 = math.exp %98 : vector<6x32xf32>
    %cst_84 = arith.constant 1.000000e+00 : f32
    %100 = vector.broadcast %cst_84 : f32 to vector<6x32xf32>
    %101 = arith.addf %100, %99 : vector<6x32xf32>
    %102 = arith.divf %100, %101 : vector<6x32xf32>
    %103 = vector.extract_strided_slice %96 {offsets = [0, 32], sizes = [6, 32], strides = [1, 1]} : vector<6x128xf32> to vector<6x32xf32>
    %104 = arith.negf %103 : vector<6x32xf32>
    %105 = math.exp %104 : vector<6x32xf32>
    %cst_85 = arith.constant 1.000000e+00 : f32
    %106 = vector.broadcast %cst_85 : f32 to vector<6x32xf32>
    %107 = arith.addf %106, %105 : vector<6x32xf32>
    %108 = arith.divf %106, %107 : vector<6x32xf32>
    %109 = vector.extract_strided_slice %96 {offsets = [0, 64], sizes = [6, 32], strides = [1, 1]} : vector<6x128xf32> to vector<6x32xf32>
    %110 = math.tanh %109 : vector<6x32xf32>
    %111 = vector.extract_strided_slice %96 {offsets = [0, 96], sizes = [6, 32], strides = [1, 1]} : vector<6x128xf32> to vector<6x32xf32>
    %112 = arith.negf %111 : vector<6x32xf32>
    %113 = math.exp %112 : vector<6x32xf32>
    %cst_86 = arith.constant 1.000000e+00 : f32
    %114 = vector.broadcast %cst_86 : f32 to vector<6x32xf32>
    %115 = arith.addf %114, %113 : vector<6x32xf32>
    %116 = arith.divf %114, %115 : vector<6x32xf32>
    %117 = arith.mulf %108, %86 : vector<6x32xf32>
    %118 = arith.mulf %102, %110 : vector<6x32xf32>
    %119 = arith.addf %117, %118 : vector<6x32xf32>
    %120 = math.tanh %119 : vector<6x32xf32>
    %121 = arith.mulf %116, %120 : vector<6x32xf32>
    %122 = vector.extract_strided_slice %51 {offsets = [12, 0], sizes = [6, 128], strides = [1, 1]} : vector<24x128xf32> to vector<6x128xf32>
    %123 = vector.extract_strided_slice %53 {offsets = [6, 0], sizes = [6, 128], strides = [1, 1]} : vector<24x128xf32> to vector<6x128xf32>
    %124 = arith.addf %122, %123 : vector<6x128xf32>
    %125 = vector.broadcast %5 : vector<1x128xf32> to vector<6x128xf32>
    %126 = arith.addf %124, %125 : vector<6x128xf32>
    %127 = arith.truncf %121 : vector<6x32xf32> to vector<6x32xbf16>
    %cst_87 = arith.constant dense<0.000000e+00> : vector<6x128xf32>
    %128 = tpu.matmul %127, %4, %cst_87 {dimension_numbers = #tpu.dot_dimension_numbers<[1], [0], [0], [1], [0, 0, 1, 1], [], []>} : vector<6x32xbf16>, vector<32x128xbf16>, vector<6x128xf32> -> vector<6x128xf32>
    %129 = arith.addf %126, %128 : vector<6x128xf32>
    %130 = vector.extract_strided_slice %129 {offsets = [0, 0], sizes = [6, 32], strides = [1, 1]} : vector<6x128xf32> to vector<6x32xf32>
    %131 = arith.negf %130 : vector<6x32xf32>
    %132 = math.exp %131 : vector<6x32xf32>
    %cst_88 = arith.constant 1.000000e+00 : f32
    %133 = vector.broadcast %cst_88 : f32 to vector<6x32xf32>
    %134 = arith.addf %133, %132 : vector<6x32xf32>
    %135 = arith.divf %133, %134 : vector<6x32xf32>
    %136 = vector.extract_strided_slice %129 {offsets = [0, 32], sizes = [6, 32], strides = [1, 1]} : vector<6x128xf32> to vector<6x32xf32>
    %137 = arith.negf %136 : vector<6x32xf32>
    %138 = math.exp %137 : vector<6x32xf32>
    %cst_89 = arith.constant 1.000000e+00 : f32
    %139 = vector.broadcast %cst_89 : f32 to vector<6x32xf32>
    %140 = arith.addf %139, %138 : vector<6x32xf32>
    %141 = arith.divf %139, %140 : vector<6x32xf32>
    %142 = vector.extract_strided_slice %129 {offsets = [0, 64], sizes = [6, 32], strides = [1, 1]} : vector<6x128xf32> to vector<6x32xf32>
    %143 = math.tanh %142 : vector<6x32xf32>
    %144 = vector.extract_strided_slice %129 {offsets = [0, 96], sizes = [6, 32], strides = [1, 1]} : vector<6x128xf32> to vector<6x32xf32>
    %145 = arith.negf %144 : vector<6x32xf32>
    %146 = math.exp %145 : vector<6x32xf32>
    %cst_90 = arith.constant 1.000000e+00 : f32
    %147 = vector.broadcast %cst_90 : f32 to vector<6x32xf32>
    %148 = arith.addf %147, %146 : vector<6x32xf32>
    %149 = arith.divf %147, %148 : vector<6x32xf32>
    %150 = arith.mulf %141, %119 : vector<6x32xf32>
    %151 = arith.mulf %135, %143 : vector<6x32xf32>
    %152 = arith.addf %150, %151 : vector<6x32xf32>
    %153 = math.tanh %152 : vector<6x32xf32>
    %154 = arith.mulf %149, %153 : vector<6x32xf32>
    %155 = vector.extract_strided_slice %51 {offsets = [18, 0], sizes = [6, 128], strides = [1, 1]} : vector<24x128xf32> to vector<6x128xf32>
    %156 = vector.extract_strided_slice %53 {offsets = [0, 0], sizes = [6, 128], strides = [1, 1]} : vector<24x128xf32> to vector<6x128xf32>
    %157 = arith.addf %155, %156 : vector<6x128xf32>
    %158 = vector.broadcast %5 : vector<1x128xf32> to vector<6x128xf32>
    %159 = arith.addf %157, %158 : vector<6x128xf32>
    %160 = arith.truncf %154 : vector<6x32xf32> to vector<6x32xbf16>
    %cst_91 = arith.constant dense<0.000000e+00> : vector<6x128xf32>
    %161 = tpu.matmul %160, %4, %cst_91 {dimension_numbers = #tpu.dot_dimension_numbers<[1], [0], [0], [1], [0, 0, 1, 1], [], []>} : vector<6x32xbf16>, vector<32x128xbf16>, vector<6x128xf32> -> vector<6x128xf32>
    %162 = arith.addf %159, %161 : vector<6x128xf32>
    %163 = vector.extract_strided_slice %162 {offsets = [0, 0], sizes = [6, 32], strides = [1, 1]} : vector<6x128xf32> to vector<6x32xf32>
    %164 = arith.negf %163 : vector<6x32xf32>
    %165 = math.exp %164 : vector<6x32xf32>
    %cst_92 = arith.constant 1.000000e+00 : f32
    %166 = vector.broadcast %cst_92 : f32 to vector<6x32xf32>
    %167 = arith.addf %166, %165 : vector<6x32xf32>
    %168 = arith.divf %166, %167 : vector<6x32xf32>
    %169 = vector.extract_strided_slice %162 {offsets = [0, 32], sizes = [6, 32], strides = [1, 1]} : vector<6x128xf32> to vector<6x32xf32>
    %170 = arith.negf %169 : vector<6x32xf32>
    %171 = math.exp %170 : vector<6x32xf32>
    %cst_93 = arith.constant 1.000000e+00 : f32
    %172 = vector.broadcast %cst_93 : f32 to vector<6x32xf32>
    %173 = arith.addf %172, %171 : vector<6x32xf32>
    %174 = arith.divf %172, %173 : vector<6x32xf32>
    %175 = vector.extract_strided_slice %162 {offsets = [0, 64], sizes = [6, 32], strides = [1, 1]} : vector<6x128xf32> to vector<6x32xf32>
    %176 = math.tanh %175 : vector<6x32xf32>
    %177 = vector.extract_strided_slice %162 {offsets = [0, 96], sizes = [6, 32], strides = [1, 1]} : vector<6x128xf32> to vector<6x32xf32>
    %178 = arith.negf %177 : vector<6x32xf32>
    %179 = math.exp %178 : vector<6x32xf32>
    %cst_94 = arith.constant 1.000000e+00 : f32
    %180 = vector.broadcast %cst_94 : f32 to vector<6x32xf32>
    %181 = arith.addf %180, %179 : vector<6x32xf32>
    %182 = arith.divf %180, %181 : vector<6x32xf32>
    %183 = arith.mulf %174, %152 : vector<6x32xf32>
    %184 = arith.mulf %168, %176 : vector<6x32xf32>
    %185 = arith.addf %183, %184 : vector<6x32xf32>
    %186 = math.tanh %185 : vector<6x32xf32>
    %187 = arith.mulf %182, %186 : vector<6x32xf32>
    %188 = arith.truncf %38 : vector<6x33xf32> to vector<6x33xbf16>
    %cst_95 = arith.constant dense<0.000000e+00> : vector<6x64xf32>
    %189 = tpu.matmul %188, %6, %cst_95 {dimension_numbers = #tpu.dot_dimension_numbers<[1], [0], [0], [1], [0, 0, 1, 1], [], []>} : vector<6x33xbf16>, vector<33x64xbf16>, vector<6x64xf32> -> vector<6x64xf32>
    %190 = arith.truncf %39 : vector<6x36xf32> to vector<6x36xbf16>
    %cst_96 = arith.constant dense<0.000000e+00> : vector<6x64xf32>
    %191 = tpu.matmul %190, %7, %cst_96 {dimension_numbers = #tpu.dot_dimension_numbers<[1], [0], [0], [1], [0, 0, 1, 1], [], []>} : vector<6x36xbf16>, vector<36x64xbf16>, vector<6x64xf32> -> vector<6x64xf32>
    %192 = arith.addf %189, %191 : vector<6x64xf32>
    %193 = arith.truncf %187 : vector<6x32xf32> to vector<6x32xbf16>
    %cst_97 = arith.constant dense<0.000000e+00> : vector<6x64xf32>
    %194 = tpu.matmul %193, %8, %cst_97 {dimension_numbers = #tpu.dot_dimension_numbers<[1], [0], [0], [1], [0, 0, 1, 1], [], []>} : vector<6x32xbf16>, vector<32x64xbf16>, vector<6x64xf32> -> vector<6x64xf32>
    %195 = arith.addf %192, %194 : vector<6x64xf32>
    %196 = arith.truncf %40 : vector<6x5xf32> to vector<6x5xbf16>
    %cst_98 = arith.constant dense<0.000000e+00> : vector<6x64xf32>
    %197 = tpu.matmul %196, %9, %cst_98 {dimension_numbers = #tpu.dot_dimension_numbers<[1], [0], [0], [1], [0, 0, 1, 1], [], []>} : vector<6x5xbf16>, vector<5x64xbf16>, vector<6x64xf32> -> vector<6x64xf32>
    %198 = arith.addf %195, %197 : vector<6x64xf32>
    %199 = vector.broadcast %10 : vector<1x64xf32> to vector<6x64xf32>
    %200 = arith.addf %198, %199 : vector<6x64xf32>
    %cst_99 = arith.constant 0.000000e+00 : f32
    %201 = vector.broadcast %cst_99 : f32 to vector<6x64xf32>
    %202 = arith.cmpf ogt, %200, %201 : vector<6x64xf32>
    %cst_100 = arith.constant 0.000000e+00 : f32
    %203 = vector.broadcast %cst_100 : f32 to vector<6x64xf32>
    %204 = arith.minimumf %200, %203 : vector<6x64xf32>
    %205 = math.exp %204 : vector<6x64xf32>
    %cst_101 = arith.constant 1.000000e+00 : f32
    %206 = vector.broadcast %cst_101 : f32 to vector<6x64xf32>
    %207 = arith.subf %205, %206 : vector<6x64xf32>
    %208 = arith.select %202, %200, %207 : vector<6x64xi1>, vector<6x64xf32>
    %209 = arith.truncf %208 : vector<6x64xf32> to vector<6x64xbf16>
    %cst_102 = arith.constant dense<0.000000e+00> : vector<6x48xf32>
    %210 = tpu.matmul %209, %11, %cst_102 {dimension_numbers = #tpu.dot_dimension_numbers<[1], [0], [0], [1], [0, 0, 1, 1], [], []>} : vector<6x64xbf16>, vector<64x48xbf16>, vector<6x48xf32> -> vector<6x48xf32>
    %211 = vector.broadcast %12 : vector<1x48xf32> to vector<6x48xf32>
    %212 = arith.addf %210, %211 : vector<6x48xf32>
    %cst_103 = arith.constant 0.000000e+00 : f32
    %213 = vector.broadcast %cst_103 : f32 to vector<6x48xf32>
    %214 = arith.cmpf ogt, %212, %213 : vector<6x48xf32>
    %cst_104 = arith.constant 0.000000e+00 : f32
    %215 = vector.broadcast %cst_104 : f32 to vector<6x48xf32>
    %216 = arith.minimumf %212, %215 : vector<6x48xf32>
    %217 = math.exp %216 : vector<6x48xf32>
    %cst_105 = arith.constant 1.000000e+00 : f32
    %218 = vector.broadcast %cst_105 : f32 to vector<6x48xf32>
    %219 = arith.subf %217, %218 : vector<6x48xf32>
    %220 = arith.select %214, %212, %219 : vector<6x48xi1>, vector<6x48xf32>
    %221 = arith.truncf %220 : vector<6x48xf32> to vector<6x48xbf16>
    %cst_106 = arith.constant dense<0.000000e+00> : vector<6x32xf32>
    %222 = tpu.matmul %221, %13, %cst_106 {dimension_numbers = #tpu.dot_dimension_numbers<[1], [0], [0], [1], [0, 0, 1, 1], [], []>} : vector<6x48xbf16>, vector<48x32xbf16>, vector<6x32xf32> -> vector<6x32xf32>
    %223 = vector.broadcast %14 : vector<1x32xf32> to vector<6x32xf32>
    %224 = arith.addf %222, %223 : vector<6x32xf32>
    %cst_107 = arith.constant 0.000000e+00 : f32
    %225 = vector.broadcast %cst_107 : f32 to vector<6x32xf32>
    %226 = arith.cmpf ogt, %224, %225 : vector<6x32xf32>
    %cst_108 = arith.constant 0.000000e+00 : f32
    %227 = vector.broadcast %cst_108 : f32 to vector<6x32xf32>
    %228 = arith.minimumf %224, %227 : vector<6x32xf32>
    %229 = math.exp %228 : vector<6x32xf32>
    %cst_109 = arith.constant 1.000000e+00 : f32
    %230 = vector.broadcast %cst_109 : f32 to vector<6x32xf32>
    %231 = arith.subf %229, %230 : vector<6x32xf32>
    %232 = arith.select %226, %224, %231 : vector<6x32xi1>, vector<6x32xf32>
    %233 = arith.truncf %232 : vector<6x32xf32> to vector<6x32xbf16>
    %cst_110 = arith.constant dense<0.000000e+00> : vector<6x32xf32>
    %234 = tpu.matmul %233, %15, %cst_110 {dimension_numbers = #tpu.dot_dimension_numbers<[1], [0], [0], [1], [0, 0, 1, 1], [], []>} : vector<6x32xbf16>, vector<32x32xbf16>, vector<6x32xf32> -> vector<6x32xf32>
    %235 = vector.broadcast %16 : vector<1x32xf32> to vector<6x32xf32>
    %236 = arith.addf %234, %235 : vector<6x32xf32>
    %cst_111 = arith.constant 0.000000e+00 : f32
    %237 = vector.broadcast %cst_111 : f32 to vector<6x32xf32>
    %238 = arith.cmpf ogt, %236, %237 : vector<6x32xf32>
    %cst_112 = arith.constant 0.000000e+00 : f32
    %239 = vector.broadcast %cst_112 : f32 to vector<6x32xf32>
    %240 = arith.minimumf %236, %239 : vector<6x32xf32>
    %241 = math.exp %240 : vector<6x32xf32>
    %cst_113 = arith.constant 1.000000e+00 : f32
    %242 = vector.broadcast %cst_113 : f32 to vector<6x32xf32>
    %243 = arith.subf %241, %242 : vector<6x32xf32>
    %244 = arith.select %238, %236, %243 : vector<6x32xi1>, vector<6x32xf32>
    %245 = vector.shape_cast %23 : vector<1x32xf32> to vector<1x32xf32>
    %246 = vector.broadcast %245 : vector<1x32xf32> to vector<2x32xf32>
    %247 = vector.shape_cast %24 : vector<1x32xf32> to vector<1x32xf32>
    %248 = vector.broadcast %247 : vector<1x32xf32> to vector<2x32xf32>
    %249 = vector.extract_strided_slice %244 {offsets = [0, 0], sizes = [2, 32], strides = [1, 1]} : vector<6x32xf32> to vector<2x32xf32>
    %250 = vector.extract_strided_slice %244 {offsets = [2, 0], sizes = [2, 32], strides = [1, 1]} : vector<6x32xf32> to vector<2x32xf32>
    %251 = tpu.concatenate %249, %250 in 0 : vector<2x32xf32>, vector<2x32xf32> -> vector<4x32xf32>
    %252 = arith.truncf %251 : vector<4x32xf32> to vector<4x32xbf16>
    %cst_114 = arith.constant dense<0.000000e+00> : vector<4x128xf32>
    %253 = tpu.matmul %252, %20, %cst_114 {dimension_numbers = #tpu.dot_dimension_numbers<[1], [0], [0], [1], [0, 0, 1, 1], [], []>} : vector<4x32xbf16>, vector<32x128xbf16>, vector<4x128xf32> -> vector<4x128xf32>
    %254 = vector.broadcast %22 : vector<1x128xf32> to vector<4x128xf32>
    %255 = arith.addf %253, %254 : vector<4x128xf32>
    %cst_115 = arith.constant 0.000000e+00 : f32
    %256 = vector.broadcast %cst_115 : f32 to vector<2x32xf32>
    %cst_116 = arith.constant 0.000000e+00 : f32
    %257 = vector.broadcast %cst_116 : f32 to vector<2x32xf32>
    %258 = vector.extract_strided_slice %255 {offsets = [0, 0], sizes = [2, 128], strides = [1, 1]} : vector<4x128xf32> to vector<2x128xf32>
    %259 = arith.truncf %256 : vector<2x32xf32> to vector<2x32xbf16>
    %cst_117 = arith.constant dense<0.000000e+00> : vector<2x128xf32>
    %260 = tpu.matmul %259, %21, %cst_117 {dimension_numbers = #tpu.dot_dimension_numbers<[1], [0], [0], [1], [0, 0, 1, 1], [], []>} : vector<2x32xbf16>, vector<32x128xbf16>, vector<2x128xf32> -> vector<2x128xf32>
    %261 = arith.addf %258, %260 : vector<2x128xf32>
    %262 = vector.extract_strided_slice %261 {offsets = [0, 0], sizes = [2, 32], strides = [1, 1]} : vector<2x128xf32> to vector<2x32xf32>
    %263 = arith.negf %262 : vector<2x32xf32>
    %264 = math.exp %263 : vector<2x32xf32>
    %cst_118 = arith.constant 1.000000e+00 : f32
    %265 = vector.broadcast %cst_118 : f32 to vector<2x32xf32>
    %266 = arith.addf %265, %264 : vector<2x32xf32>
    %267 = arith.divf %265, %266 : vector<2x32xf32>
    %268 = vector.extract_strided_slice %261 {offsets = [0, 32], sizes = [2, 32], strides = [1, 1]} : vector<2x128xf32> to vector<2x32xf32>
    %269 = arith.negf %268 : vector<2x32xf32>
    %270 = math.exp %269 : vector<2x32xf32>
    %cst_119 = arith.constant 1.000000e+00 : f32
    %271 = vector.broadcast %cst_119 : f32 to vector<2x32xf32>
    %272 = arith.addf %271, %270 : vector<2x32xf32>
    %273 = arith.divf %271, %272 : vector<2x32xf32>
    %274 = vector.extract_strided_slice %261 {offsets = [0, 64], sizes = [2, 32], strides = [1, 1]} : vector<2x128xf32> to vector<2x32xf32>
    %275 = math.tanh %274 : vector<2x32xf32>
    %276 = vector.extract_strided_slice %261 {offsets = [0, 96], sizes = [2, 32], strides = [1, 1]} : vector<2x128xf32> to vector<2x32xf32>
    %277 = arith.negf %276 : vector<2x32xf32>
    %278 = math.exp %277 : vector<2x32xf32>
    %cst_120 = arith.constant 1.000000e+00 : f32
    %279 = vector.broadcast %cst_120 : f32 to vector<2x32xf32>
    %280 = arith.addf %279, %278 : vector<2x32xf32>
    %281 = arith.divf %279, %280 : vector<2x32xf32>
    %282 = arith.mulf %273, %257 : vector<2x32xf32>
    %283 = arith.mulf %267, %275 : vector<2x32xf32>
    %284 = arith.addf %282, %283 : vector<2x32xf32>
    %285 = math.tanh %284 : vector<2x32xf32>
    %286 = arith.mulf %281, %285 : vector<2x32xf32>
    %287 = vector.extract_strided_slice %255 {offsets = [2, 0], sizes = [2, 128], strides = [1, 1]} : vector<4x128xf32> to vector<2x128xf32>
    %288 = arith.truncf %286 : vector<2x32xf32> to vector<2x32xbf16>
    %cst_121 = arith.constant dense<0.000000e+00> : vector<2x128xf32>
    %289 = tpu.matmul %288, %21, %cst_121 {dimension_numbers = #tpu.dot_dimension_numbers<[1], [0], [0], [1], [0, 0, 1, 1], [], []>} : vector<2x32xbf16>, vector<32x128xbf16>, vector<2x128xf32> -> vector<2x128xf32>
    %290 = arith.addf %287, %289 : vector<2x128xf32>
    %291 = vector.extract_strided_slice %290 {offsets = [0, 0], sizes = [2, 32], strides = [1, 1]} : vector<2x128xf32> to vector<2x32xf32>
    %292 = arith.negf %291 : vector<2x32xf32>
    %293 = math.exp %292 : vector<2x32xf32>
    %cst_122 = arith.constant 1.000000e+00 : f32
    %294 = vector.broadcast %cst_122 : f32 to vector<2x32xf32>
    %295 = arith.addf %294, %293 : vector<2x32xf32>
    %296 = arith.divf %294, %295 : vector<2x32xf32>
    %297 = vector.extract_strided_slice %290 {offsets = [0, 32], sizes = [2, 32], strides = [1, 1]} : vector<2x128xf32> to vector<2x32xf32>
    %298 = arith.negf %297 : vector<2x32xf32>
    %299 = math.exp %298 : vector<2x32xf32>
    %cst_123 = arith.constant 1.000000e+00 : f32
    %300 = vector.broadcast %cst_123 : f32 to vector<2x32xf32>
    %301 = arith.addf %300, %299 : vector<2x32xf32>
    %302 = arith.divf %300, %301 : vector<2x32xf32>
    %303 = vector.extract_strided_slice %290 {offsets = [0, 64], sizes = [2, 32], strides = [1, 1]} : vector<2x128xf32> to vector<2x32xf32>
    %304 = math.tanh %303 : vector<2x32xf32>
    %305 = vector.extract_strided_slice %290 {offsets = [0, 96], sizes = [2, 32], strides = [1, 1]} : vector<2x128xf32> to vector<2x32xf32>
    %306 = arith.negf %305 : vector<2x32xf32>
    %307 = math.exp %306 : vector<2x32xf32>
    %cst_124 = arith.constant 1.000000e+00 : f32
    %308 = vector.broadcast %cst_124 : f32 to vector<2x32xf32>
    %309 = arith.addf %308, %307 : vector<2x32xf32>
    %310 = arith.divf %308, %309 : vector<2x32xf32>
    %311 = arith.mulf %302, %284 : vector<2x32xf32>
    %312 = arith.mulf %296, %304 : vector<2x32xf32>
    %313 = arith.addf %311, %312 : vector<2x32xf32>
    %314 = math.tanh %313 : vector<2x32xf32>
    %315 = arith.mulf %310, %314 : vector<2x32xf32>
    %316 = tpu.concatenate %246, %246 in 0 : vector<2x32xf32>, vector<2x32xf32> -> vector<4x32xf32>
    %317 = tpu.concatenate %315, %248 in 0 : vector<2x32xf32>, vector<2x32xf32> -> vector<4x32xf32>
    %c1 = arith.constant 1 : index
    %c0_125 = arith.constant 0 : index
    %c0_126 = arith.constant 0 : index
    %318 = vector.load %arg1[%c1, %c0_125, %c0_126] : memref<4x2x20xf32, #tpu.memory_space<vmem>>, vector<1x2x20xf32>
    %319 = vector.shape_cast %318 : vector<1x2x20xf32> to vector<2x20xf32>
    %c3 = arith.constant 3 : index
    %c0_127 = arith.constant 0 : index
    %c0_128 = arith.constant 0 : index
    %320 = vector.load %arg1[%c3, %c0_127, %c0_128] : memref<4x2x20xf32, #tpu.memory_space<vmem>>, vector<1x2x20xf32>
    %321 = vector.shape_cast %320 : vector<1x2x20xf32> to vector<2x20xf32>
    %322 = tpu.concatenate %319, %321 in 0 : vector<2x20xf32>, vector<2x20xf32> -> vector<4x20xf32>
    %323 = arith.truncf %316 : vector<4x32xf32> to vector<4x32xbf16>
    %cst_129 = arith.constant dense<0.000000e+00> : vector<4x32xf32>
    %324 = tpu.matmul %323, %25, %cst_129 {dimension_numbers = #tpu.dot_dimension_numbers<[1], [0], [0], [1], [0, 0, 1, 1], [], []>} : vector<4x32xbf16>, vector<32x32xbf16>, vector<4x32xf32> -> vector<4x32xf32>
    %325 = arith.truncf %317 : vector<4x32xf32> to vector<4x32xbf16>
    %cst_130 = arith.constant dense<0.000000e+00> : vector<4x32xf32>
    %326 = tpu.matmul %325, %26, %cst_130 {dimension_numbers = #tpu.dot_dimension_numbers<[1], [0], [0], [1], [0, 0, 1, 1], [], []>} : vector<4x32xbf16>, vector<32x32xbf16>, vector<4x32xf32> -> vector<4x32xf32>
    %327 = arith.addf %324, %326 : vector<4x32xf32>
    %328 = arith.truncf %322 : vector<4x20xf32> to vector<4x20xbf16>
    %cst_131 = arith.constant dense<0.000000e+00> : vector<4x32xf32>
    %329 = tpu.matmul %328, %27, %cst_131 {dimension_numbers = #tpu.dot_dimension_numbers<[1], [0], [0], [1], [0, 0, 1, 1], [], []>} : vector<4x20xbf16>, vector<20x32xbf16>, vector<4x32xf32> -> vector<4x32xf32>
    %330 = arith.addf %327, %329 : vector<4x32xf32>
    %331 = vector.broadcast %28 : vector<1x32xf32> to vector<4x32xf32>
    %332 = arith.addf %330, %331 : vector<4x32xf32>
    %cst_132 = arith.constant 0.000000e+00 : f32
    %333 = vector.broadcast %cst_132 : f32 to vector<4x32xf32>
    %334 = arith.cmpf ogt, %332, %333 : vector<4x32xf32>
    %cst_133 = arith.constant 0.000000e+00 : f32
    %335 = vector.broadcast %cst_133 : f32 to vector<4x32xf32>
    %336 = arith.minimumf %332, %335 : vector<4x32xf32>
    %337 = math.exp %336 : vector<4x32xf32>
    %cst_134 = arith.constant 1.000000e+00 : f32
    %338 = vector.broadcast %cst_134 : f32 to vector<4x32xf32>
    %339 = arith.subf %337, %338 : vector<4x32xf32>
    %340 = arith.select %334, %332, %339 : vector<4x32xi1>, vector<4x32xf32>
    %341 = arith.truncf %340 : vector<4x32xf32> to vector<4x32xbf16>
    %cst_135 = arith.constant dense<0.000000e+00> : vector<4x32xf32>
    %342 = tpu.matmul %341, %29, %cst_135 {dimension_numbers = #tpu.dot_dimension_numbers<[1], [0], [0], [1], [0, 0, 1, 1], [], []>} : vector<4x32xbf16>, vector<32x32xbf16>, vector<4x32xf32> -> vector<4x32xf32>
    %343 = vector.broadcast %30 : vector<1x32xf32> to vector<4x32xf32>
    %344 = arith.addf %342, %343 : vector<4x32xf32>
    %cst_136 = arith.constant 0.000000e+00 : f32
    %345 = vector.broadcast %cst_136 : f32 to vector<4x32xf32>
    %346 = arith.cmpf ogt, %344, %345 : vector<4x32xf32>
    %cst_137 = arith.constant 0.000000e+00 : f32
    %347 = vector.broadcast %cst_137 : f32 to vector<4x32xf32>
    %348 = arith.minimumf %344, %347 : vector<4x32xf32>
    %349 = math.exp %348 : vector<4x32xf32>
    %cst_138 = arith.constant 1.000000e+00 : f32
    %350 = vector.broadcast %cst_138 : f32 to vector<4x32xf32>
    %351 = arith.subf %349, %350 : vector<4x32xf32>
    %352 = arith.select %346, %344, %351 : vector<4x32xi1>, vector<4x32xf32>
    %353 = vector.extract_strided_slice %352 {offsets = [0, 0], sizes = [2, 32], strides = [1, 1]} : vector<4x32xf32> to vector<2x32xf32>
    %354 = vector.extract_strided_slice %352 {offsets = [2, 0], sizes = [2, 32], strides = [1, 1]} : vector<4x32xf32> to vector<2x32xf32>
    %355 = arith.truncf %354 : vector<2x32xf32> to vector<2x32xbf16>
    %cst_139 = arith.constant dense<0.000000e+00> : vector<2x128xf32>
    %356 = tpu.matmul %355, %17, %cst_139 {dimension_numbers = #tpu.dot_dimension_numbers<[1], [0], [0], [1], [0, 0, 1, 1], [], []>} : vector<2x32xbf16>, vector<32x128xbf16>, vector<2x128xf32> -> vector<2x128xf32>
    %357 = vector.broadcast %19 : vector<1x128xf32> to vector<2x128xf32>
    %358 = arith.addf %356, %357 : vector<2x128xf32>
    %cst_140 = arith.constant 0.000000e+00 : f32
    %359 = vector.broadcast %cst_140 : f32 to vector<2x32xf32>
    %cst_141 = arith.constant 0.000000e+00 : f32
    %360 = vector.broadcast %cst_141 : f32 to vector<2x32xf32>
    %361 = arith.truncf %359 : vector<2x32xf32> to vector<2x32xbf16>
    %cst_142 = arith.constant dense<0.000000e+00> : vector<2x128xf32>
    %362 = tpu.matmul %361, %18, %cst_142 {dimension_numbers = #tpu.dot_dimension_numbers<[1], [0], [0], [1], [0, 0, 1, 1], [], []>} : vector<2x32xbf16>, vector<32x128xbf16>, vector<2x128xf32> -> vector<2x128xf32>
    %363 = arith.addf %358, %362 : vector<2x128xf32>
    %364 = vector.extract_strided_slice %363 {offsets = [0, 0], sizes = [2, 32], strides = [1, 1]} : vector<2x128xf32> to vector<2x32xf32>
    %365 = arith.negf %364 : vector<2x32xf32>
    %366 = math.exp %365 : vector<2x32xf32>
    %cst_143 = arith.constant 1.000000e+00 : f32
    %367 = vector.broadcast %cst_143 : f32 to vector<2x32xf32>
    %368 = arith.addf %367, %366 : vector<2x32xf32>
    %369 = arith.divf %367, %368 : vector<2x32xf32>
    %370 = vector.extract_strided_slice %363 {offsets = [0, 32], sizes = [2, 32], strides = [1, 1]} : vector<2x128xf32> to vector<2x32xf32>
    %371 = arith.negf %370 : vector<2x32xf32>
    %372 = math.exp %371 : vector<2x32xf32>
    %cst_144 = arith.constant 1.000000e+00 : f32
    %373 = vector.broadcast %cst_144 : f32 to vector<2x32xf32>
    %374 = arith.addf %373, %372 : vector<2x32xf32>
    %375 = arith.divf %373, %374 : vector<2x32xf32>
    %376 = vector.extract_strided_slice %363 {offsets = [0, 64], sizes = [2, 32], strides = [1, 1]} : vector<2x128xf32> to vector<2x32xf32>
    %377 = math.tanh %376 : vector<2x32xf32>
    %378 = vector.extract_strided_slice %363 {offsets = [0, 96], sizes = [2, 32], strides = [1, 1]} : vector<2x128xf32> to vector<2x32xf32>
    %379 = arith.negf %378 : vector<2x32xf32>
    %380 = math.exp %379 : vector<2x32xf32>
    %cst_145 = arith.constant 1.000000e+00 : f32
    %381 = vector.broadcast %cst_145 : f32 to vector<2x32xf32>
    %382 = arith.addf %381, %380 : vector<2x32xf32>
    %383 = arith.divf %381, %382 : vector<2x32xf32>
    %384 = arith.mulf %375, %360 : vector<2x32xf32>
    %385 = arith.mulf %369, %377 : vector<2x32xf32>
    %386 = arith.addf %384, %385 : vector<2x32xf32>
    %387 = math.tanh %386 : vector<2x32xf32>
    %388 = arith.mulf %383, %387 : vector<2x32xf32>
    %389 = vector.extract_strided_slice %244 {offsets = [4, 0], sizes = [2, 32], strides = [1, 1]} : vector<6x32xf32> to vector<2x32xf32>
    %390 = arith.truncf %389 : vector<2x32xf32> to vector<2x32xbf16>
    %cst_146 = arith.constant dense<0.000000e+00> : vector<2x128xf32>
    %391 = tpu.matmul %390, %20, %cst_146 {dimension_numbers = #tpu.dot_dimension_numbers<[1], [0], [0], [1], [0, 0, 1, 1], [], []>} : vector<2x32xbf16>, vector<32x128xbf16>, vector<2x128xf32> -> vector<2x128xf32>
    %392 = vector.broadcast %22 : vector<1x128xf32> to vector<2x128xf32>
    %393 = arith.addf %391, %392 : vector<2x128xf32>
    %cst_147 = arith.constant 0.000000e+00 : f32
    %394 = vector.broadcast %cst_147 : f32 to vector<2x32xf32>
    %cst_148 = arith.constant 0.000000e+00 : f32
    %395 = vector.broadcast %cst_148 : f32 to vector<2x32xf32>
    %396 = arith.truncf %394 : vector<2x32xf32> to vector<2x32xbf16>
    %cst_149 = arith.constant dense<0.000000e+00> : vector<2x128xf32>
    %397 = tpu.matmul %396, %21, %cst_149 {dimension_numbers = #tpu.dot_dimension_numbers<[1], [0], [0], [1], [0, 0, 1, 1], [], []>} : vector<2x32xbf16>, vector<32x128xbf16>, vector<2x128xf32> -> vector<2x128xf32>
    %398 = arith.addf %393, %397 : vector<2x128xf32>
    %399 = vector.extract_strided_slice %398 {offsets = [0, 0], sizes = [2, 32], strides = [1, 1]} : vector<2x128xf32> to vector<2x32xf32>
    %400 = arith.negf %399 : vector<2x32xf32>
    %401 = math.exp %400 : vector<2x32xf32>
    %cst_150 = arith.constant 1.000000e+00 : f32
    %402 = vector.broadcast %cst_150 : f32 to vector<2x32xf32>
    %403 = arith.addf %402, %401 : vector<2x32xf32>
    %404 = arith.divf %402, %403 : vector<2x32xf32>
    %405 = vector.extract_strided_slice %398 {offsets = [0, 32], sizes = [2, 32], strides = [1, 1]} : vector<2x128xf32> to vector<2x32xf32>
    %406 = arith.negf %405 : vector<2x32xf32>
    %407 = math.exp %406 : vector<2x32xf32>
    %cst_151 = arith.constant 1.000000e+00 : f32
    %408 = vector.broadcast %cst_151 : f32 to vector<2x32xf32>
    %409 = arith.addf %408, %407 : vector<2x32xf32>
    %410 = arith.divf %408, %409 : vector<2x32xf32>
    %411 = vector.extract_strided_slice %398 {offsets = [0, 64], sizes = [2, 32], strides = [1, 1]} : vector<2x128xf32> to vector<2x32xf32>
    %412 = math.tanh %411 : vector<2x32xf32>
    %413 = vector.extract_strided_slice %398 {offsets = [0, 96], sizes = [2, 32], strides = [1, 1]} : vector<2x128xf32> to vector<2x32xf32>
    %414 = arith.negf %413 : vector<2x32xf32>
    %415 = math.exp %414 : vector<2x32xf32>
    %cst_152 = arith.constant 1.000000e+00 : f32
    %416 = vector.broadcast %cst_152 : f32 to vector<2x32xf32>
    %417 = arith.addf %416, %415 : vector<2x32xf32>
    %418 = arith.divf %416, %417 : vector<2x32xf32>
    %419 = arith.mulf %410, %395 : vector<2x32xf32>
    %420 = arith.mulf %404, %412 : vector<2x32xf32>
    %421 = arith.addf %419, %420 : vector<2x32xf32>
    %422 = math.tanh %421 : vector<2x32xf32>
    %423 = arith.mulf %418, %422 : vector<2x32xf32>
    %c2 = arith.constant 2 : index
    %c0_153 = arith.constant 0 : index
    %c0_154 = arith.constant 0 : index
    %424 = vector.load %arg1[%c2, %c0_153, %c0_154] : memref<4x2x20xf32, #tpu.memory_space<vmem>>, vector<1x2x20xf32>
    %425 = vector.shape_cast %424 : vector<1x2x20xf32> to vector<2x20xf32>
    %426 = arith.truncf %388 : vector<2x32xf32> to vector<2x32xbf16>
    %cst_155 = arith.constant dense<0.000000e+00> : vector<2x32xf32>
    %427 = tpu.matmul %426, %25, %cst_155 {dimension_numbers = #tpu.dot_dimension_numbers<[1], [0], [0], [1], [0, 0, 1, 1], [], []>} : vector<2x32xbf16>, vector<32x32xbf16>, vector<2x32xf32> -> vector<2x32xf32>
    %428 = arith.truncf %423 : vector<2x32xf32> to vector<2x32xbf16>
    %cst_156 = arith.constant dense<0.000000e+00> : vector<2x32xf32>
    %429 = tpu.matmul %428, %26, %cst_156 {dimension_numbers = #tpu.dot_dimension_numbers<[1], [0], [0], [1], [0, 0, 1, 1], [], []>} : vector<2x32xbf16>, vector<32x32xbf16>, vector<2x32xf32> -> vector<2x32xf32>
    %430 = arith.addf %427, %429 : vector<2x32xf32>
    %431 = arith.truncf %425 : vector<2x20xf32> to vector<2x20xbf16>
    %cst_157 = arith.constant dense<0.000000e+00> : vector<2x32xf32>
    %432 = tpu.matmul %431, %27, %cst_157 {dimension_numbers = #tpu.dot_dimension_numbers<[1], [0], [0], [1], [0, 0, 1, 1], [], []>} : vector<2x20xbf16>, vector<20x32xbf16>, vector<2x32xf32> -> vector<2x32xf32>
    %433 = arith.addf %430, %432 : vector<2x32xf32>
    %434 = vector.broadcast %28 : vector<1x32xf32> to vector<2x32xf32>
    %435 = arith.addf %433, %434 : vector<2x32xf32>
    %cst_158 = arith.constant 0.000000e+00 : f32
    %436 = vector.broadcast %cst_158 : f32 to vector<2x32xf32>
    %437 = arith.cmpf ogt, %435, %436 : vector<2x32xf32>
    %cst_159 = arith.constant 0.000000e+00 : f32
    %438 = vector.broadcast %cst_159 : f32 to vector<2x32xf32>
    %439 = arith.minimumf %435, %438 : vector<2x32xf32>
    %440 = math.exp %439 : vector<2x32xf32>
    %cst_160 = arith.constant 1.000000e+00 : f32
    %441 = vector.broadcast %cst_160 : f32 to vector<2x32xf32>
    %442 = arith.subf %440, %441 : vector<2x32xf32>
    %443 = arith.select %437, %435, %442 : vector<2x32xi1>, vector<2x32xf32>
    %444 = arith.truncf %443 : vector<2x32xf32> to vector<2x32xbf16>
    %cst_161 = arith.constant dense<0.000000e+00> : vector<2x32xf32>
    %445 = tpu.matmul %444, %29, %cst_161 {dimension_numbers = #tpu.dot_dimension_numbers<[1], [0], [0], [1], [0, 0, 1, 1], [], []>} : vector<2x32xbf16>, vector<32x32xbf16>, vector<2x32xf32> -> vector<2x32xf32>
    %446 = vector.broadcast %30 : vector<1x32xf32> to vector<2x32xf32>
    %447 = arith.addf %445, %446 : vector<2x32xf32>
    %cst_162 = arith.constant 0.000000e+00 : f32
    %448 = vector.broadcast %cst_162 : f32 to vector<2x32xf32>
    %449 = arith.cmpf ogt, %447, %448 : vector<2x32xf32>
    %cst_163 = arith.constant 0.000000e+00 : f32
    %450 = vector.broadcast %cst_163 : f32 to vector<2x32xf32>
    %451 = arith.minimumf %447, %450 : vector<2x32xf32>
    %452 = math.exp %451 : vector<2x32xf32>
    %cst_164 = arith.constant 1.000000e+00 : f32
    %453 = vector.broadcast %cst_164 : f32 to vector<2x32xf32>
    %454 = arith.subf %452, %453 : vector<2x32xf32>
    %455 = arith.select %449, %447, %454 : vector<2x32xi1>, vector<2x32xf32>
    %456 = tpu.concatenate %353, %455 in 0 : vector<2x32xf32>, vector<2x32xf32> -> vector<4x32xf32>
    %457 = arith.truncf %456 : vector<4x32xf32> to vector<4x32xbf16>
    %cst_165 = arith.constant dense<0.000000e+00> : vector<4x128xf32>
    %458 = tpu.matmul %457, %17, %cst_165 {dimension_numbers = #tpu.dot_dimension_numbers<[1], [0], [0], [1], [0, 0, 1, 1], [], []>} : vector<4x32xbf16>, vector<32x128xbf16>, vector<4x128xf32> -> vector<4x128xf32>
    %459 = vector.broadcast %19 : vector<1x128xf32> to vector<4x128xf32>
    %460 = arith.addf %458, %459 : vector<4x128xf32>
    %cst_166 = arith.constant 0.000000e+00 : f32
    %461 = vector.broadcast %cst_166 : f32 to vector<2x32xf32>
    %cst_167 = arith.constant 0.000000e+00 : f32
    %462 = vector.broadcast %cst_167 : f32 to vector<2x32xf32>
    %463 = vector.extract_strided_slice %460 {offsets = [0, 0], sizes = [2, 128], strides = [1, 1]} : vector<4x128xf32> to vector<2x128xf32>
    %464 = arith.truncf %461 : vector<2x32xf32> to vector<2x32xbf16>
    %cst_168 = arith.constant dense<0.000000e+00> : vector<2x128xf32>
    %465 = tpu.matmul %464, %18, %cst_168 {dimension_numbers = #tpu.dot_dimension_numbers<[1], [0], [0], [1], [0, 0, 1, 1], [], []>} : vector<2x32xbf16>, vector<32x128xbf16>, vector<2x128xf32> -> vector<2x128xf32>
    %466 = arith.addf %463, %465 : vector<2x128xf32>
    %467 = vector.extract_strided_slice %466 {offsets = [0, 0], sizes = [2, 32], strides = [1, 1]} : vector<2x128xf32> to vector<2x32xf32>
    %468 = arith.negf %467 : vector<2x32xf32>
    %469 = math.exp %468 : vector<2x32xf32>
    %cst_169 = arith.constant 1.000000e+00 : f32
    %470 = vector.broadcast %cst_169 : f32 to vector<2x32xf32>
    %471 = arith.addf %470, %469 : vector<2x32xf32>
    %472 = arith.divf %470, %471 : vector<2x32xf32>
    %473 = vector.extract_strided_slice %466 {offsets = [0, 32], sizes = [2, 32], strides = [1, 1]} : vector<2x128xf32> to vector<2x32xf32>
    %474 = arith.negf %473 : vector<2x32xf32>
    %475 = math.exp %474 : vector<2x32xf32>
    %cst_170 = arith.constant 1.000000e+00 : f32
    %476 = vector.broadcast %cst_170 : f32 to vector<2x32xf32>
    %477 = arith.addf %476, %475 : vector<2x32xf32>
    %478 = arith.divf %476, %477 : vector<2x32xf32>
    %479 = vector.extract_strided_slice %466 {offsets = [0, 64], sizes = [2, 32], strides = [1, 1]} : vector<2x128xf32> to vector<2x32xf32>
    %480 = math.tanh %479 : vector<2x32xf32>
    %481 = vector.extract_strided_slice %466 {offsets = [0, 96], sizes = [2, 32], strides = [1, 1]} : vector<2x128xf32> to vector<2x32xf32>
    %482 = arith.negf %481 : vector<2x32xf32>
    %483 = math.exp %482 : vector<2x32xf32>
    %cst_171 = arith.constant 1.000000e+00 : f32
    %484 = vector.broadcast %cst_171 : f32 to vector<2x32xf32>
    %485 = arith.addf %484, %483 : vector<2x32xf32>
    %486 = arith.divf %484, %485 : vector<2x32xf32>
    %487 = arith.mulf %478, %462 : vector<2x32xf32>
    %488 = arith.mulf %472, %480 : vector<2x32xf32>
    %489 = arith.addf %487, %488 : vector<2x32xf32>
    %490 = math.tanh %489 : vector<2x32xf32>
    %491 = arith.mulf %486, %490 : vector<2x32xf32>
    %492 = vector.extract_strided_slice %460 {offsets = [2, 0], sizes = [2, 128], strides = [1, 1]} : vector<4x128xf32> to vector<2x128xf32>
    %493 = arith.truncf %491 : vector<2x32xf32> to vector<2x32xbf16>
    %cst_172 = arith.constant dense<0.000000e+00> : vector<2x128xf32>
    %494 = tpu.matmul %493, %18, %cst_172 {dimension_numbers = #tpu.dot_dimension_numbers<[1], [0], [0], [1], [0, 0, 1, 1], [], []>} : vector<2x32xbf16>, vector<32x128xbf16>, vector<2x128xf32> -> vector<2x128xf32>
    %495 = arith.addf %492, %494 : vector<2x128xf32>
    %496 = vector.extract_strided_slice %495 {offsets = [0, 0], sizes = [2, 32], strides = [1, 1]} : vector<2x128xf32> to vector<2x32xf32>
    %497 = arith.negf %496 : vector<2x32xf32>
    %498 = math.exp %497 : vector<2x32xf32>
    %cst_173 = arith.constant 1.000000e+00 : f32
    %499 = vector.broadcast %cst_173 : f32 to vector<2x32xf32>
    %500 = arith.addf %499, %498 : vector<2x32xf32>
    %501 = arith.divf %499, %500 : vector<2x32xf32>
    %502 = vector.extract_strided_slice %495 {offsets = [0, 32], sizes = [2, 32], strides = [1, 1]} : vector<2x128xf32> to vector<2x32xf32>
    %503 = arith.negf %502 : vector<2x32xf32>
    %504 = math.exp %503 : vector<2x32xf32>
    %cst_174 = arith.constant 1.000000e+00 : f32
    %505 = vector.broadcast %cst_174 : f32 to vector<2x32xf32>
    %506 = arith.addf %505, %504 : vector<2x32xf32>
    %507 = arith.divf %505, %506 : vector<2x32xf32>
    %508 = vector.extract_strided_slice %495 {offsets = [0, 64], sizes = [2, 32], strides = [1, 1]} : vector<2x128xf32> to vector<2x32xf32>
    %509 = math.tanh %508 : vector<2x32xf32>
    %510 = vector.extract_strided_slice %495 {offsets = [0, 96], sizes = [2, 32], strides = [1, 1]} : vector<2x128xf32> to vector<2x32xf32>
    %511 = arith.negf %510 : vector<2x32xf32>
    %512 = math.exp %511 : vector<2x32xf32>
    %cst_175 = arith.constant 1.000000e+00 : f32
    %513 = vector.broadcast %cst_175 : f32 to vector<2x32xf32>
    %514 = arith.addf %513, %512 : vector<2x32xf32>
    %515 = arith.divf %513, %514 : vector<2x32xf32>
    %516 = arith.mulf %507, %489 : vector<2x32xf32>
    %517 = arith.mulf %501, %509 : vector<2x32xf32>
    %518 = arith.addf %516, %517 : vector<2x32xf32>
    %519 = math.tanh %518 : vector<2x32xf32>
    %520 = arith.mulf %515, %519 : vector<2x32xf32>
    %c0_176 = arith.constant 0 : index
    %c0_177 = arith.constant 0 : index
    %c0_178 = arith.constant 0 : index
    %521 = vector.load %arg1[%c0_176, %c0_177, %c0_178] : memref<4x2x20xf32, #tpu.memory_space<vmem>>, vector<1x2x20xf32>
    %522 = vector.shape_cast %521 : vector<1x2x20xf32> to vector<2x20xf32>
    %523 = arith.truncf %520 : vector<2x32xf32> to vector<2x32xbf16>
    %cst_179 = arith.constant dense<0.000000e+00> : vector<2x32xf32>
    %524 = tpu.matmul %523, %25, %cst_179 {dimension_numbers = #tpu.dot_dimension_numbers<[1], [0], [0], [1], [0, 0, 1, 1], [], []>} : vector<2x32xbf16>, vector<32x32xbf16>, vector<2x32xf32> -> vector<2x32xf32>
    %525 = arith.truncf %248 : vector<2x32xf32> to vector<2x32xbf16>
    %cst_180 = arith.constant dense<0.000000e+00> : vector<2x32xf32>
    %526 = tpu.matmul %525, %26, %cst_180 {dimension_numbers = #tpu.dot_dimension_numbers<[1], [0], [0], [1], [0, 0, 1, 1], [], []>} : vector<2x32xbf16>, vector<32x32xbf16>, vector<2x32xf32> -> vector<2x32xf32>
    %527 = arith.addf %524, %526 : vector<2x32xf32>
    %528 = arith.truncf %522 : vector<2x20xf32> to vector<2x20xbf16>
    %cst_181 = arith.constant dense<0.000000e+00> : vector<2x32xf32>
    %529 = tpu.matmul %528, %27, %cst_181 {dimension_numbers = #tpu.dot_dimension_numbers<[1], [0], [0], [1], [0, 0, 1, 1], [], []>} : vector<2x20xbf16>, vector<20x32xbf16>, vector<2x32xf32> -> vector<2x32xf32>
    %530 = arith.addf %527, %529 : vector<2x32xf32>
    %531 = vector.broadcast %28 : vector<1x32xf32> to vector<2x32xf32>
    %532 = arith.addf %530, %531 : vector<2x32xf32>
    %cst_182 = arith.constant 0.000000e+00 : f32
    %533 = vector.broadcast %cst_182 : f32 to vector<2x32xf32>
    %534 = arith.cmpf ogt, %532, %533 : vector<2x32xf32>
    %cst_183 = arith.constant 0.000000e+00 : f32
    %535 = vector.broadcast %cst_183 : f32 to vector<2x32xf32>
    %536 = arith.minimumf %532, %535 : vector<2x32xf32>
    %537 = math.exp %536 : vector<2x32xf32>
    %cst_184 = arith.constant 1.000000e+00 : f32
    %538 = vector.broadcast %cst_184 : f32 to vector<2x32xf32>
    %539 = arith.subf %537, %538 : vector<2x32xf32>
    %540 = arith.select %534, %532, %539 : vector<2x32xi1>, vector<2x32xf32>
    %541 = arith.truncf %540 : vector<2x32xf32> to vector<2x32xbf16>
    %cst_185 = arith.constant dense<0.000000e+00> : vector<2x32xf32>
    %542 = tpu.matmul %541, %29, %cst_185 {dimension_numbers = #tpu.dot_dimension_numbers<[1], [0], [0], [1], [0, 0, 1, 1], [], []>} : vector<2x32xbf16>, vector<32x32xbf16>, vector<2x32xf32> -> vector<2x32xf32>
    %543 = vector.broadcast %30 : vector<1x32xf32> to vector<2x32xf32>
    %544 = arith.addf %542, %543 : vector<2x32xf32>
    %cst_186 = arith.constant 0.000000e+00 : f32
    %545 = vector.broadcast %cst_186 : f32 to vector<2x32xf32>
    %546 = arith.cmpf ogt, %544, %545 : vector<2x32xf32>
    %cst_187 = arith.constant 0.000000e+00 : f32
    %547 = vector.broadcast %cst_187 : f32 to vector<2x32xf32>
    %548 = arith.minimumf %544, %547 : vector<2x32xf32>
    %549 = math.exp %548 : vector<2x32xf32>
    %cst_188 = arith.constant 1.000000e+00 : f32
    %550 = vector.broadcast %cst_188 : f32 to vector<2x32xf32>
    %551 = arith.subf %549, %550 : vector<2x32xf32>
    %552 = arith.select %546, %544, %551 : vector<2x32xi1>, vector<2x32xf32>
    %553 = arith.truncf %552 : vector<2x32xf32> to vector<2x32xbf16>
    %cst_189 = arith.constant dense<0.000000e+00> : vector<2x32xf32>
    %554 = tpu.matmul %553, %31, %cst_189 {dimension_numbers = #tpu.dot_dimension_numbers<[1], [0], [0], [1], [0, 0, 1, 1], [], []>} : vector<2x32xbf16>, vector<32x32xbf16>, vector<2x32xf32> -> vector<2x32xf32>
    %555 = vector.broadcast %32 : vector<1x32xf32> to vector<2x32xf32>
    %556 = arith.addf %554, %555 : vector<2x32xf32>
    %cst_190 = arith.constant 0.000000e+00 : f32
    %557 = vector.broadcast %cst_190 : f32 to vector<2x32xf32>
    %558 = arith.cmpf ogt, %556, %557 : vector<2x32xf32>
    %cst_191 = arith.constant 0.000000e+00 : f32
    %559 = vector.broadcast %cst_191 : f32 to vector<2x32xf32>
    %560 = arith.minimumf %556, %559 : vector<2x32xf32>
    %561 = math.exp %560 : vector<2x32xf32>
    %cst_192 = arith.constant 1.000000e+00 : f32
    %562 = vector.broadcast %cst_192 : f32 to vector<2x32xf32>
    %563 = arith.subf %561, %562 : vector<2x32xf32>
    %564 = arith.select %558, %556, %563 : vector<2x32xi1>, vector<2x32xf32>
    %565 = arith.truncf %564 : vector<2x32xf32> to vector<2x32xbf16>
    %cst_193 = arith.constant dense<0.000000e+00> : vector<2x32xf32>
    %566 = tpu.matmul %565, %33, %cst_193 {dimension_numbers = #tpu.dot_dimension_numbers<[1], [0], [0], [1], [0, 0, 1, 1], [], []>} : vector<2x32xbf16>, vector<32x32xbf16>, vector<2x32xf32> -> vector<2x32xf32>
    %567 = vector.broadcast %34 : vector<1x32xf32> to vector<2x32xf32>
    %568 = arith.addf %566, %567 : vector<2x32xf32>
    %cst_194 = arith.constant 0.000000e+00 : f32
    %569 = vector.broadcast %cst_194 : f32 to vector<2x32xf32>
    %570 = arith.cmpf ogt, %568, %569 : vector<2x32xf32>
    %cst_195 = arith.constant 0.000000e+00 : f32
    %571 = vector.broadcast %cst_195 : f32 to vector<2x32xf32>
    %572 = arith.minimumf %568, %571 : vector<2x32xf32>
    %573 = math.exp %572 : vector<2x32xf32>
    %cst_196 = arith.constant 1.000000e+00 : f32
    %574 = vector.broadcast %cst_196 : f32 to vector<2x32xf32>
    %575 = arith.subf %573, %574 : vector<2x32xf32>
    %576 = arith.select %570, %568, %575 : vector<2x32xi1>, vector<2x32xf32>
    %577 = arith.truncf %576 : vector<2x32xf32> to vector<2x32xbf16>
    %cst_197 = arith.constant dense<0.000000e+00> : vector<2x1xf32>
    %578 = tpu.matmul %577, %35, %cst_197 {dimension_numbers = #tpu.dot_dimension_numbers<[1], [0], [0], [1], [0, 0, 1, 1], [], []>} : vector<2x32xbf16>, vector<32x1xbf16>, vector<2x1xf32> -> vector<2x1xf32>
    %579 = vector.broadcast %36 : vector<1x1xf32> to vector<2x1xf32>
    %580 = arith.addf %578, %579 : vector<2x1xf32>
    %cst_198 = arith.constant 0.000000e+00 : f32
    %581 = vector.broadcast %cst_198 : f32 to vector<2x1xf32>
    %582 = arith.maximumf %580, %581 : vector<2x1xf32>
    %c0_199 = arith.constant 0 : index
    %c0_200 = arith.constant 0 : index
    %583 = vector.load %arg39[%c0_199, %c0_200] : memref<2x1xf32, #tpu.memory_space<vmem>>, vector<2x1xf32>
    tpu.vector_store %arg39[%c0_199, %c0_200], %582 {strides = array<i32>} : memref<2x1xf32, #tpu.memory_space<vmem>>, vector<2x1xf32>,
    return
  }
}

</mosaic_0001>

<llo_original>
// kernel: forward.1
$region0: #{forward.1}
  #allocation0 [shape = 'u32[]', space=smem, size = 0x4, offset = 0x4, fixed_abs, tag = 'smem constant byte address 0x4 - core index']
  #allocation1 [shape = 'u32[144,128]{1,0:T(1,128)}', space=vmem, size = 0x12000, scoped, tag = 'internal scratch']
  #allocation2 [shape = 'f32[1,1]{1,0:T(1,128)S(1)}', space=vmem, size = 0x200, scoped, tag = 'scoped memory for forward.1']
  %s0 = inlined_call_operand.smem [shape: u32[40], index: -1, kind: input, shape index: {}]
  %s1 = sld [smem:[%s0]]
  %s2 = scalar_lea.smem %s0, 1
  %s3 = sld [smem:[%s2]]
  %s4 = scalar_lea.smem %s0, 2
  %s5 = sld [smem:[%s4]]
  %s6 = scalar_lea.smem %s0, 3
  %s7 = sld [smem:[%s6]]
  %s8 = scalar_lea.smem %s0, 4
  %s9 = sld [smem:[%s8]]
  %s10 = scalar_lea.smem %s0, 5
  %s11 = sld [smem:[%s10]]
  %s12 = scalar_lea.smem %s0, 6
  %s13 = sld [smem:[%s12]]
  %s14 = scalar_lea.smem %s0, 7
  %s15 = sld [smem:[%s14]]
  %s16 = scalar_lea.smem %s0, 8
  %s17 = sld [smem:[%s16]]
  %s18 = scalar_lea.smem %s0, 9
  %s19 = sld [smem:[%s18]]
  %s20 = scalar_lea.smem %s0, 10
  %s21 = sld [smem:[%s20]]
  %s22 = scalar_lea.smem %s0, 11
  %s23 = sld [smem:[%s22]]
  %s24 = scalar_lea.smem %s0, 12
  %s25 = sld [smem:[%s24]]
  %s26 = scalar_lea.smem %s0, 13
  %s27 = sld [smem:[%s26]]
  %s28 = scalar_lea.smem %s0, 14
  %s29 = sld [smem:[%s28]]
  %s30 = scalar_lea.smem %s0, 15
  %s31 = sld [smem:[%s30]]
  %s32 = scalar_lea.smem %s0, 16
  %s33 = sld [smem:[%s32]]
  %s34 = scalar_lea.smem %s0, 17
  %s35 = sld [smem:[%s34]]
  %s36 = scalar_lea.smem %s0, 18
  %s37 = sld [smem:[%s36]]
  %s38 = scalar_lea.smem %s0, 19
  %s39 = sld [smem:[%s38]]
  %s40 = scalar_lea.smem %s0, 20
  %s41 = sld [smem:[%s40]]
  %s42 = scalar_lea.smem %s0, 21
  %s43 = sld [smem:[%s42]]
  %s44 = scalar_lea.smem %s0, 22
  %s45 = sld [smem:[%s44]]
  %s46 = scalar_lea.smem %s0, 23
  %s47 = sld [smem:[%s46]]
  %s48 = scalar_lea.smem %s0, 24
  %s49 = sld [smem:[%s48]]
  %s50 = scalar_lea.smem %s0, 25
  %s51 = sld [smem:[%s50]]
  %s52 = scalar_lea.smem %s0, 26
  %s53 = sld [smem:[%s52]]
  %s54 = scalar_lea.smem %s0, 27
  %s55 = sld [smem:[%s54]]
  %s56 = scalar_lea.smem %s0, 28
  %s57 = sld [smem:[%s56]]
  %s58 = scalar_lea.smem %s0, 29
  %s59 = sld [smem:[%s58]]
  %s60 = scalar_lea.smem %s0, 30
  %s61 = sld [smem:[%s60]]
  %s62 = scalar_lea.smem %s0, 31
  %s63 = sld [smem:[%s62]]
  %s64 = scalar_lea.smem %s0, 32
  %s65 = sld [smem:[%s64]]
  %s66 = scalar_lea.smem %s0, 33
  %s67 = sld [smem:[%s66]]
  %s68 = scalar_lea.smem %s0, 34
  %s69 = sld [smem:[%s68]]
  %s70 = scalar_lea.smem %s0, 35
  %s71 = sld [smem:[%s70]]
  %s72 = scalar_lea.smem %s0, 36
  %s73 = sld [smem:[%s72]]
  %s74 = scalar_lea.smem %s0, 37
  %s75 = sld [smem:[%s74]]
  %s76 = scalar_lea.smem %s0, 38
  %s77 = sld [smem:[%s76]]
  %s78 = scalar_lea.smem %s0, 39
  %s79 = sld [smem:[%s78]]
  %s80 = sld [smem:[#allocation0]]
  $region230: #{forward.1} parent=0
    _
  %s82 = ssub.s32 1, %s80
  %s83 = scalar_select 0, %s82, %s80
  %v84 = vstv %s77
  %85 = vst [vmem:[#allocation2] sm:$0x1] %v84
  $region1: #{forward.1} parent=0
    #allocation3 [shape = 'u8[512]{0}', space=vmem, size = 0x400, scoped, tag = 'input window, operand 3, single buffered']
    #allocation4 [shape = 's32[1]{0}', space=sflag, size = 0x4, scoped, tag = 'scoped memory for forward.1']
    #allocation5 [shape = 'u8[512]{0}', space=vmem, size = 0x400, scoped, tag = 'input window, operand 7, single buffered']
    #allocation6 [shape = 's32[1]{0}', space=sflag, size = 0x4, scoped, tag = 'scoped memory for forward.1']
    #allocation7 [shape = 'u8[2048]{0}', space=vmem, size = 0x800, scoped, tag = 'input window, operand 11, single buffered']
    #allocation8 [shape = 'u8[512]{0}', space=vmem, size = 0x400, scoped, tag = 'input window, operand 12, single buffered']
    #allocation9 [shape = 's32[1]{0}', space=sflag, size = 0x4, scoped, tag = 'scoped memory for forward.1']
    #allocation10 [shape = 'u8[512]{0}', space=vmem, size = 0x400, scoped, tag = 'input window, operand 14, single buffered']
    #allocation11 [shape = 'u8[512]{0}', space=vmem, size = 0x400, scoped, tag = 'input window, operand 16, single buffered']
    #allocation12 [shape = 's32[1]{0}', space=sflag, size = 0x4, scoped, tag = 'scoped memory for forward.1']
    #allocation13 [shape = 'u8[512]{0}', space=vmem, size = 0x400, scoped, tag = 'input window, operand 18, single buffered']
    #allocation14 [shape = 'u8[8192]{0}', space=vmem, size = 0x2000, scoped, tag = 'input window, operand 23, single buffered']
    #allocation15 [shape = 's32[1]{0}', space=sflag, size = 0x4, scoped, tag = 'scoped memory for forward.1']
    #allocation16 [shape = 'u8[512]{0}', space=vmem, size = 0x400, scoped, tag = 'input window, operand 24, single buffered']
    #allocation17 [shape = 'u8[512]{0}', space=vmem, size = 0x400, scoped, tag = 'input window, operand 25, single buffered']
    #allocation18 [shape = 's32[1]{0}', space=sflag, size = 0x4, scoped, tag = 'scoped memory for forward.1']
    #allocation19 [shape = 'u8[512]{0}', space=vmem, size = 0x400, scoped, tag = 'input window, operand 26, single buffered']
    #allocation20 [shape = 'u8[6144]{0}', space=vmem, size = 0x1800, scoped, tag = 'input window, operand 29, single buffered']
    #allocation21 [shape = 's32[1]{0}', space=sflag, size = 0x4, scoped, tag = 'scoped memory for forward.1']
    #allocation22 [shape = 'u8[512]{0}', space=vmem, size = 0x400, scoped, tag = 'input window, operand 30, single buffered']
    #allocation23 [shape = 'u8[8192]{0}', space=vmem, size = 0x2000, scoped, tag = 'input window, operand 31, single buffered']
    #allocation24 [shape = 's32[1]{0}', space=sflag, size = 0x4, scoped, tag = 'scoped memory for forward.1']
    #allocation25 [shape = 'u8[512]{0}', space=vmem, size = 0x400, scoped, tag = 'input window, operand 32, single buffered']
    #allocation26 [shape = 'u8[8192]{0}', space=vmem, size = 0x2000, scoped, tag = 'input window, operand 35, single buffered']
    #allocation27 [shape = 's32[1]{0}', space=sflag, size = 0x4, scoped, tag = 'scoped memory for forward.1']
    %86 = vsyncpa [#allocation4], 0
    %87 = vsyncpa [#allocation6], 0
    %88 = vsyncpa [#allocation9], 0
    %89 = vsyncpa [#allocation12], 0
    %90 = vsyncpa [#allocation15], 0
    %91 = vsyncpa [#allocation18], 0
    %92 = vsyncpa [#allocation21], 0
    %93 = vsyncpa [#allocation24], 0
    %94 = vsyncpa [#allocation27], 0
    // Predicated region
    $region2: #{forward.1} parent=1 // pred_check
      _
    $region3: #{forward.1} parent=1 // pred_check_branch
      %96 = sbr.rel (0) target = $region5
    $region4: #{forward.1} parent=1 // pred_region
      _
    $region5: #{forward.1} parent=1 // pred_fallthru
      _
    // Predicated region
    $region6: #{forward.1} parent=1 // pred_check
      _
    $region7: #{forward.1} parent=1 // pred_check_branch
      %98 = sbr.rel (0) target = $region9
    $region8: #{forward.1} parent=1 // pred_region
      _
    $region9: #{forward.1} parent=1 // pred_fallthru
      _
    // Predicated region
    $region10: #{forward.1} parent=1 // pred_check
      _
    $region11: #{forward.1} parent=1 // pred_check_branch
      %100 = sbr.rel (0) target = $region13
    $region12: #{forward.1} parent=1 // pred_region
      _
    $region13: #{forward.1} parent=1 // pred_fallthru
      _
    // Predicated region
    $region14: #{forward.1} parent=1 // pred_check
      _
    $region15: #{forward.1} parent=1 // pred_check_branch
      %102 = sbr.rel (0) target = $region17
    $region16: #{forward.1} parent=1 // pred_region
      %s104 = ssub.s32 16, 16
      %105 = vsyncadd [#allocation4], %s104
      %s107 = sshll.u32 [#allocation3], 4
      %s108 = int_to_ptr.vmem [resolvable:$true] %s107
      %110 = dma.hbm_to_vmem [thread:$0]  %s7, 16, %s108, [#allocation4]
    $region17: #{forward.1} parent=1 // pred_fallthru
      _
    // Predicated region
    $region18: #{forward.1} parent=1 // pred_check
      _
    $region19: #{forward.1} parent=1 // pred_check_branch
      %112 = sbr.rel (0) target = $region21
    $region20: #{forward.1} parent=1 // pred_region
      _
    $region21: #{forward.1} parent=1 // pred_fallthru
      _
    // Predicated region
    $region22: #{forward.1} parent=1 // pred_check
      _
    $region23: #{forward.1} parent=1 // pred_check_branch
      %114 = sbr.rel (0) target = $region25
    $region24: #{forward.1} parent=1 // pred_region
      _
    $region25: #{forward.1} parent=1 // pred_fallthru
      _
    // Predicated region
    $region26: #{forward.1} parent=1 // pred_check
      _
    $region27: #{forward.1} parent=1 // pred_check_branch
      %116 = sbr.rel (0) target = $region29
    $region28: #{forward.1} parent=1 // pred_region
      _
    $region29: #{forward.1} parent=1 // pred_fallthru
      _
    // Predicated region
    $region30: #{forward.1} parent=1 // pred_check
      _
    $region31: #{forward.1} parent=1 // pred_check_branch
      %118 = sbr.rel (0) target = $region33
    $region32: #{forward.1} parent=1 // pred_region
      %s120 = ssub.s32 16, 16
      %121 = vsyncadd [#allocation6], %s120
      %s123 = sshll.u32 [#allocation5], 4
      %s124 = int_to_ptr.vmem [resolvable:$true] %s123
      %126 = dma.hbm_to_vmem [thread:$0]  %s15, 16, %s124, [#allocation6]
    $region33: #{forward.1} parent=1 // pred_fallthru
      _
    // Predicated region
    $region34: #{forward.1} parent=1 // pred_check
      _
    $region35: #{forward.1} parent=1 // pred_check_branch
      %128 = sbr.rel (0) target = $region37
    $region36: #{forward.1} parent=1 // pred_region
      _
    $region37: #{forward.1} parent=1 // pred_fallthru
      _
    // Predicated region
    $region38: #{forward.1} parent=1 // pred_check
      _
    $region39: #{forward.1} parent=1 // pred_check_branch
      %130 = sbr.rel (0) target = $region41
    $region40: #{forward.1} parent=1 // pred_region
      _
    $region41: #{forward.1} parent=1 // pred_fallthru
      _
    // Predicated region
    $region42: #{forward.1} parent=1 // pred_check
      _
    $region43: #{forward.1} parent=1 // pred_check_branch
      %132 = sbr.rel (0) target = $region45
    $region44: #{forward.1} parent=1 // pred_region
      _
    $region45: #{forward.1} parent=1 // pred_fallthru
      _
    // Predicated region
    $region46: #{forward.1} parent=1 // pred_check
      _
    $region47: #{forward.1} parent=1 // pred_check_branch
      %134 = sbr.rel (0) target = $region49
    $region48: #{forward.1} parent=1 // pred_region
      %s136 = ssub.s32 64, 64
      %137 = vsyncadd [#allocation6], %s136
      %s139 = sshll.u32 [#allocation7], 4
      %s140 = int_to_ptr.vmem [resolvable:$true] %s139
      %142 = dma.hbm_to_vmem [thread:$0]  %s23, 64, %s140, [#allocation6]
    $region49: #{forward.1} parent=1 // pred_fallthru
      _
    // Predicated region
    $region50: #{forward.1} parent=1 // pred_check
      _
    $region51: #{forward.1} parent=1 // pred_check_branch
      %144 = sbr.rel (0) target = $region53
    $region52: #{forward.1} parent=1 // pred_region
      %s146 = ssub.s32 16, 16
      %147 = vsyncadd [#allocation9], %s146
      %s149 = sshll.u32 [#allocation8], 4
      %s150 = int_to_ptr.vmem [resolvable:$true] %s149
      %152 = dma.hbm_to_vmem [thread:$0]  %s25, 16, %s150, [#allocation9]
    $region53: #{forward.1} parent=1 // pred_fallthru
      _
    // Predicated region
    $region54: #{forward.1} parent=1 // pred_check
      _
    $region55: #{forward.1} parent=1 // pred_check_branch
      %154 = sbr.rel (0) target = $region57
    $region56: #{forward.1} parent=1 // pred_region
      _
    $region57: #{forward.1} parent=1 // pred_fallthru
      _
    // Predicated region
    $region58: #{forward.1} parent=1 // pred_check
      _
    $region59: #{forward.1} parent=1 // pred_check_branch
      %156 = sbr.rel (0) target = $region61
    $region60: #{forward.1} parent=1 // pred_region
      %s158 = ssub.s32 16, 16
      %159 = vsyncadd [#allocation9], %s158
      %s161 = sshll.u32 [#allocation10], 4
      %s162 = int_to_ptr.vmem [resolvable:$true] %s161
      %164 = dma.hbm_to_vmem [thread:$0]  %s29, 16, %s162, [#allocation9]
    $region61: #{forward.1} parent=1 // pred_fallthru
      _
    // Predicated region
    $region62: #{forward.1} parent=1 // pred_check
      _
    $region63: #{forward.1} parent=1 // pred_check_branch
      %166 = sbr.rel (0) target = $region65
    $region64: #{forward.1} parent=1 // pred_region
      _
    $region65: #{forward.1} parent=1 // pred_fallthru
      _
    // Predicated region
    $region66: #{forward.1} parent=1 // pred_check
      _
    $region67: #{forward.1} parent=1 // pred_check_branch
      %168 = sbr.rel (0) target = $region69
    $region68: #{forward.1} parent=1 // pred_region
      %s170 = ssub.s32 16, 16
      %171 = vsyncadd [#allocation12], %s170
      %s173 = sshll.u32 [#allocation11], 4
      %s174 = int_to_ptr.vmem [resolvable:$true] %s173
      %176 = dma.hbm_to_vmem [thread:$0]  %s33, 16, %s174, [#allocation12]
    $region69: #{forward.1} parent=1 // pred_fallthru
      _
    // Predicated region
    $region70: #{forward.1} parent=1 // pred_check
      _
    $region71: #{forward.1} parent=1 // pred_check_branch
      %178 = sbr.rel (0) target = $region73
    $region72: #{forward.1} parent=1 // pred_region
      _
    $region73: #{forward.1} parent=1 // pred_fallthru
      _
    // Predicated region
    $region74: #{forward.1} parent=1 // pred_check
      _
    $region75: #{forward.1} parent=1 // pred_check_branch
      %180 = sbr.rel (0) target = $region77
    $region76: #{forward.1} parent=1 // pred_region
      %s182 = ssub.s32 16, 16
      %183 = vsyncadd [#allocation12], %s182
      %s185 = sshll.u32 [#allocation13], 4
      %s186 = int_to_ptr.vmem [resolvable:$true] %s185
      %188 = dma.hbm_to_vmem [thread:$0]  %s37, 16, %s186, [#allocation12]
    $region77: #{forward.1} parent=1 // pred_fallthru
      _
    // Predicated region
    $region78: #{forward.1} parent=1 // pred_check
      _
    $region79: #{forward.1} parent=1 // pred_check_branch
      %190 = sbr.rel (0) target = $region81
    $region80: #{forward.1} parent=1 // pred_region
      _
    $region81: #{forward.1} parent=1 // pred_fallthru
      _
    // Predicated region
    $region82: #{forward.1} parent=1 // pred_check
      _
    $region83: #{forward.1} parent=1 // pred_check_branch
      %192 = sbr.rel (0) target = $region85
    $region84: #{forward.1} parent=1 // pred_region
      _
    $region85: #{forward.1} parent=1 // pred_fallthru
      _
    // Predicated region
    $region86: #{forward.1} parent=1 // pred_check
      _
    $region87: #{forward.1} parent=1 // pred_check_branch
      %194 = sbr.rel (0) target = $region89
    $region88: #{forward.1} parent=1 // pred_region
      _
    $region89: #{forward.1} parent=1 // pred_fallthru
      _
    // Predicated region
    $region90: #{forward.1} parent=1 // pred_check
      _
    $region91: #{forward.1} parent=1 // pred_check_branch
      %196 = sbr.rel (0) target = $region93
    $region92: #{forward.1} parent=1 // pred_region
      _
    $region93: #{forward.1} parent=1 // pred_fallthru
      _
    // Predicated region
    $region94: #{forward.1} parent=1 // pred_check
      _
    $region95: #{forward.1} parent=1 // pred_check_branch
      %198 = sbr.rel (0) target = $region97
    $region96: #{forward.1} parent=1 // pred_region
      %s200 = ssub.s32 256, 256
      %201 = vsyncadd [#allocation15], %s200
      %s202 = sshll.u32 [#allocation14], 4
      %s203 = int_to_ptr.vmem [resolvable:$true] %s202
      %208 = dma.hbm_to_vmem [thread:$0]  %s47, 256, %s203, [#allocation15], 64, 64, 4
    $region97: #{forward.1} parent=1 // pred_fallthru
      _
    // Predicated region
    $region98: #{forward.1} parent=1 // pred_check
      _
    $region99: #{forward.1} parent=1 // pred_check_branch
      %210 = sbr.rel (0) target = $region101
    $region100: #{forward.1} parent=1 // pred_region
      %s212 = ssub.s32 16, 16
      %213 = vsyncadd [#allocation15], %s212
      %s215 = sshll.u32 [#allocation16], 4
      %s216 = int_to_ptr.vmem [resolvable:$true] %s215
      %218 = dma.hbm_to_vmem [thread:$0]  %s49, 16, %s216, [#allocation15]
    $region101: #{forward.1} parent=1 // pred_fallthru
      _
    // Predicated region
    $region102: #{forward.1} parent=1 // pred_check
      _
    $region103: #{forward.1} parent=1 // pred_check_branch
      %220 = sbr.rel (0) target = $region105
    $region104: #{forward.1} parent=1 // pred_region
      %s222 = ssub.s32 16, 16
      %223 = vsyncadd [#allocation18], %s222
      %s225 = sshll.u32 [#allocation17], 4
      %s226 = int_to_ptr.vmem [resolvable:$true] %s225
      %228 = dma.hbm_to_vmem [thread:$0]  %s51, 16, %s226, [#allocation18]
    $region105: #{forward.1} parent=1 // pred_fallthru
      _
    // Predicated region
    $region106: #{forward.1} parent=1 // pred_check
      _
    $region107: #{forward.1} parent=1 // pred_check_branch
      %230 = sbr.rel (0) target = $region109
    $region108: #{forward.1} parent=1 // pred_region
      %s232 = ssub.s32 16, 16
      %233 = vsyncadd [#allocation18], %s232
      %s235 = sshll.u32 [#allocation19], 4
      %s236 = int_to_ptr.vmem [resolvable:$true] %s235
      %238 = dma.hbm_to_vmem [thread:$0]  %s53, 16, %s236, [#allocation18]
    $region109: #{forward.1} parent=1 // pred_fallthru
      _
    // Predicated region
    $region110: #{forward.1} parent=1 // pred_check
      _
    $region111: #{forward.1} parent=1 // pred_check_branch
      %240 = sbr.rel (0) target = $region113
    $region112: #{forward.1} parent=1 // pred_region
      _
    $region113: #{forward.1} parent=1 // pred_fallthru
      _
    // Predicated region
    $region114: #{forward.1} parent=1 // pred_check
      _
    $region115: #{forward.1} parent=1 // pred_check_branch
      %242 = sbr.rel (0) target = $region117
    $region116: #{forward.1} parent=1 // pred_region
      _
    $region117: #{forward.1} parent=1 // pred_fallthru
      _
    // Predicated region
    $region118: #{forward.1} parent=1 // pred_check
      _
    $region119: #{forward.1} parent=1 // pred_check_branch
      %244 = sbr.rel (0) target = $region121
    $region120: #{forward.1} parent=1 // pred_region
      %s246 = ssub.s32 192, 192
      %247 = vsyncadd [#allocation21], %s246
      %s248 = sshll.u32 [#allocation20], 4
      %s249 = int_to_ptr.vmem [resolvable:$true] %s248
      %254 = dma.hbm_to_vmem [thread:$0]  %s59, 192, %s249, [#allocation21], 64, 64, 4
    $region121: #{forward.1} parent=1 // pred_fallthru
      _
    // Predicated region
    $region122: #{forward.1} parent=1 // pred_check
      _
    $region123: #{forward.1} parent=1 // pred_check_branch
      %256 = sbr.rel (0) target = $region125
    $region124: #{forward.1} parent=1 // pred_region
      %s258 = ssub.s32 16, 16
      %259 = vsyncadd [#allocation21], %s258
      %s261 = sshll.u32 [#allocation22], 4
      %s262 = int_to_ptr.vmem [resolvable:$true] %s261
      %264 = dma.hbm_to_vmem [thread:$0]  %s61, 16, %s262, [#allocation21]
    $region125: #{forward.1} parent=1 // pred_fallthru
      _
    // Predicated region
    $region126: #{forward.1} parent=1 // pred_check
      _
    $region127: #{forward.1} parent=1 // pred_check_branch
      %266 = sbr.rel (0) target = $region129
    $region128: #{forward.1} parent=1 // pred_region
      %s268 = ssub.s32 256, 256
      %269 = vsyncadd [#allocation24], %s268
      %s270 = sshll.u32 [#allocation23], 4
      %s271 = int_to_ptr.vmem [resolvable:$true] %s270
      %276 = dma.hbm_to_vmem [thread:$0]  %s63, 256, %s271, [#allocation24], 64, 64, 4
    $region129: #{forward.1} parent=1 // pred_fallthru
      _
    // Predicated region
    $region130: #{forward.1} parent=1 // pred_check
      _
    $region131: #{forward.1} parent=1 // pred_check_branch
      %278 = sbr.rel (0) target = $region133
    $region132: #{forward.1} parent=1 // pred_region
      %s280 = ssub.s32 16, 16
      %281 = vsyncadd [#allocation24], %s280
      %s283 = sshll.u32 [#allocation25], 4
      %s284 = int_to_ptr.vmem [resolvable:$true] %s283
      %286 = dma.hbm_to_vmem [thread:$0]  %s65, 16, %s284, [#allocation24]
    $region133: #{forward.1} parent=1 // pred_fallthru
      _
    // Predicated region
    $region134: #{forward.1} parent=1 // pred_check
      _
    $region135: #{forward.1} parent=1 // pred_check_branch
      %288 = sbr.rel (0) target = $region137
    $region136: #{forward.1} parent=1 // pred_region
      _
    $region137: #{forward.1} parent=1 // pred_fallthru
      _
    // Predicated region
    $region138: #{forward.1} parent=1 // pred_check
      _
    $region139: #{forward.1} parent=1 // pred_check_branch
      %290 = sbr.rel (0) target = $region141
    $region140: #{forward.1} parent=1 // pred_region
      _
    $region141: #{forward.1} parent=1 // pred_fallthru
      _
    // Predicated region
    $region142: #{forward.1} parent=1 // pred_check
      _
    $region143: #{forward.1} parent=1 // pred_check_branch
      %292 = sbr.rel (0) target = $region145
    $region144: #{forward.1} parent=1 // pred_region
      %s294 = ssub.s32 256, 256
      %295 = vsyncadd [#allocation27], %s294
      %s296 = sshll.u32 [#allocation26], 4
      %s297 = int_to_ptr.vmem [resolvable:$true] %s296
      %302 = dma.hbm_to_vmem [thread:$0]  %s71, 256, %s297, [#allocation27], 64, 64, 4
    $region145: #{forward.1} parent=1 // pred_fallthru
      _
    // Predicated region
    $region146: #{forward.1} parent=1 // pred_check
      _
    $region147: #{forward.1} parent=1 // pred_check_branch
      %304 = sbr.rel (0) target = $region149
    $region148: #{forward.1} parent=1 // pred_region
      _
    $region149: #{forward.1} parent=1 // pred_fallthru
      _
    // Predicated region
    $region150: #{forward.1} parent=1 // pred_check
      _
    $region151: #{forward.1} parent=1 // pred_check_branch
      %306 = sbr.rel (0) target = $region153
    $region152: #{forward.1} parent=1 // pred_region
      _
    $region153: #{forward.1} parent=1 // pred_fallthru
      _
    // Predicated region
    $region154: #{forward.1} parent=1 // pred_check
      _
    $region155: #{forward.1} parent=1 // pred_check_branch
      %308 = sbr.rel (0) target = $region157
    $region156: #{forward.1} parent=1 // pred_region
      _
    $region157: #{forward.1} parent=1 // pred_fallthru
      _
    // Predicated region
    $region158: #{forward.1} parent=1 // pred_check
      _
    $region159: #{forward.1} parent=1 // pred_check_branch
      %310 = sbr.rel (0) target = $region161
    $region160: #{forward.1} parent=1 // pred_region
      %311 = dma.done [#allocation4], 16
    $region161: #{forward.1} parent=1 // pred_fallthru
      _
    // Predicated region
    $region162: #{forward.1} parent=1 // pred_check
      _
    $region163: #{forward.1} parent=1 // pred_check_branch
      %313 = sbr.rel (0) target = $region165
    $region164: #{forward.1} parent=1 // pred_region
      %314 = dma.done [#allocation6], 16
    $region165: #{forward.1} parent=1 // pred_fallthru
      _
    // Predicated region
    $region166: #{forward.1} parent=1 // pred_check
      _
    $region167: #{forward.1} parent=1 // pred_check_branch
      %316 = sbr.rel (0) target = $region169
    $region168: #{forward.1} parent=1 // pred_region
      %317 = dma.done [#allocation6], 64
    $region169: #{forward.1} parent=1 // pred_fallthru
      _
    // Predicated region
    $region170: #{forward.1} parent=1 // pred_check
      _
    $region171: #{forward.1} parent=1 // pred_check_branch
      %319 = sbr.rel (0) target = $region173
    $region172: #{forward.1} parent=1 // pred_region
      %320 = dma.done [#allocation9], 16
    $region173: #{forward.1} parent=1 // pred_fallthru
      _
    // Predicated region
    $region174: #{forward.1} parent=1 // pred_check
      _
    $region175: #{forward.1} parent=1 // pred_check_branch
      %322 = sbr.rel (0) target = $region177
    $region176: #{forward.1} parent=1 // pred_region
      %323 = dma.done [#allocation9], 16
    $region177: #{forward.1} parent=1 // pred_fallthru
      _
    // Predicated region
    $region178: #{forward.1} parent=1 // pred_check
      _
    $region179: #{forward.1} parent=1 // pred_check_branch
      %325 = sbr.rel (0) target = $region181
    $region180: #{forward.1} parent=1 // pred_region
      %326 = dma.done [#allocation12], 16
    $region181: #{forward.1} parent=1 // pred_fallthru
      _
    // Predicated region
    $region182: #{forward.1} parent=1 // pred_check
      _
    $region183: #{forward.1} parent=1 // pred_check_branch
      %328 = sbr.rel (0) target = $region185
    $region184: #{forward.1} parent=1 // pred_region
      %329 = dma.done [#allocation12], 16
    $region185: #{forward.1} parent=1 // pred_fallthru
      _
    // Predicated region
    $region186: #{forward.1} parent=1 // pred_check
      _
    $region187: #{forward.1} parent=1 // pred_check_branch
      %331 = sbr.rel (0) target = $region189
    $region188: #{forward.1} parent=1 // pred_region
      %332 = dma.done [#allocation15], 256
    $region189: #{forward.1} parent=1 // pred_fallthru
      _
    // Predicated region
    $region190: #{forward.1} parent=1 // pred_check
      _
    $region191: #{forward.1} parent=1 // pred_check_branch
      %334 = sbr.rel (0) target = $region193
    $region192: #{forward.1} parent=1 // pred_region
      %335 = dma.done [#allocation15], 16
    $region193: #{forward.1} parent=1 // pred_fallthru
      _
    // Predicated region
    $region194: #{forward.1} parent=1 // pred_check
      _
    $region195: #{forward.1} parent=1 // pred_check_branch
      %337 = sbr.rel (0) target = $region197
    $region196: #{forward.1} parent=1 // pred_region
      %338 = dma.done [#allocation18], 16
    $region197: #{forward.1} parent=1 // pred_fallthru
      _
    // Predicated region
    $region198: #{forward.1} parent=1 // pred_check
      _
    $region199: #{forward.1} parent=1 // pred_check_branch
      %340 = sbr.rel (0) target = $region201
    $region200: #{forward.1} parent=1 // pred_region
      %341 = dma.done [#allocation18], 16
    $region201: #{forward.1} parent=1 // pred_fallthru
      _
    // Predicated region
    $region202: #{forward.1} parent=1 // pred_check
      _
    $region203: #{forward.1} parent=1 // pred_check_branch
      %343 = sbr.rel (0) target = $region205
    $region204: #{forward.1} parent=1 // pred_region
      %344 = dma.done [#allocation21], 192
    $region205: #{forward.1} parent=1 // pred_fallthru
      _
    // Predicated region
    $region206: #{forward.1} parent=1 // pred_check
      _
    $region207: #{forward.1} parent=1 // pred_check_branch
      %346 = sbr.rel (0) target = $region209
    $region208: #{forward.1} parent=1 // pred_region
      %347 = dma.done [#allocation21], 16
    $region209: #{forward.1} parent=1 // pred_fallthru
      _
    // Predicated region
    $region210: #{forward.1} parent=1 // pred_check
      _
    $region211: #{forward.1} parent=1 // pred_check_branch
      %349 = sbr.rel (0) target = $region213
    $region212: #{forward.1} parent=1 // pred_region
      %350 = dma.done [#allocation24], 256
    $region213: #{forward.1} parent=1 // pred_fallthru
      _
    // Predicated region
    $region214: #{forward.1} parent=1 // pred_check
      _
    $region215: #{forward.1} parent=1 // pred_check_branch
      %352 = sbr.rel (0) target = $region217
    $region216: #{forward.1} parent=1 // pred_region
      %353 = dma.done [#allocation24], 16
    $region217: #{forward.1} parent=1 // pred_fallthru
      _
    // Predicated region
    $region218: #{forward.1} parent=1 // pred_check
      _
    $region219: #{forward.1} parent=1 // pred_check_branch
      %355 = sbr.rel (0) target = $region221
    $region220: #{forward.1} parent=1 // pred_region
      %356 = dma.done [#allocation27], 256
    $region221: #{forward.1} parent=1 // pred_fallthru
      _
    %v358 = vld [vmem:[%s5] sm:$0xf]
    %v359 = vld [vmem:[%s5 + $0x4] sm:$0xf]
    %v360 = vld [vmem:[%s5 + $0x8] sm:$0xf]
    %v361 = vld [vmem:[%s5 + $0xc] sm:$0xf]
    %v362 = vld [vmem:[%s5 + $0x10] sm:$0x3]
    %v363 = vld [vmem:[#allocation3] sm:$0x1]
    %v364 = vld [vmem:[%s9] sm:$0xf]
    %v365 = vld [vmem:[%s9 + $0x4] sm:$0xf]
    %v366 = vld [vmem:[%s9 + $0x8] sm:$0xf]
    %v367 = vld [vmem:[%s9 + $0xc] sm:$0xf]
    %v368 = vld [vmem:[%s9 + $0x10] sm:$0x3]
    %v369 = vld [vmem:[%s11] sm:$0xf]
    %v370 = vld [vmem:[%s11 + $0x4] sm:$0xf]
    %v371 = vld [vmem:[%s11 + $0x8] sm:$0xf]
    %v372 = vld [vmem:[%s11 + $0xc] sm:$0xf]
    %v373 = vld [vmem:[%s11 + $0x10] sm:$0x3]
    %v374 = vld [vmem:[%s13] sm:$0xf]
    %v375 = vld [vmem:[%s13 + $0x4] sm:$0xf]
    %v376 = vld [vmem:[%s13 + $0x8] sm:$0xf]
    %v377 = vld [vmem:[%s13 + $0xc] sm:$0xf]
    %v378 = vld [vmem:[#allocation5] sm:$0x1]
    %v379 = vld [vmem:[%s17] sm:$0xf]
    %v380 = vld [vmem:[%s17 + $0x4] sm:$0xf]
    %v381 = vld [vmem:[%s17 + $0x8] sm:$0xf]
    %v382 = vld [vmem:[%s17 + $0xc] sm:$0xf]
    %v383 = vld [vmem:[%s17 + $0x10] sm:$0x1]
    %v384 = vld [vmem:[%s19] sm:$0xf]
    %v385 = vld [vmem:[%s19 + $0x4] sm:$0xf]
    %v386 = vld [vmem:[%s19 + $0x8] sm:$0xf]
    %v387 = vld [vmem:[%s19 + $0xc] sm:$0xf]
    %v388 = vld [vmem:[%s19 + $0x10] sm:$0x3]
    %v389 = vld [vmem:[%s21] sm:$0xf]
    %v390 = vld [vmem:[%s21 + $0x4] sm:$0xf]
    %v391 = vld [vmem:[%s21 + $0x8] sm:$0xf]
    %v392 = vld [vmem:[%s21 + $0xc] sm:$0xf]
    %v393 = vld [vmem:[#allocation7] sm:$0x7]
    %v394 = vld [vmem:[#allocation8] sm:$0x1]
    %v395 = vld [vmem:[%s27] sm:$0xf]
    %v396 = vld [vmem:[%s27 + $0x4] sm:$0xf]
    %v397 = vld [vmem:[%s27 + $0x8] sm:$0xf]
    %v398 = vld [vmem:[%s27 + $0xc] sm:$0xf]
    %v399 = vld [vmem:[%s27 + $0x10] sm:$0xf]
    %v400 = vld [vmem:[%s27 + $0x14] sm:$0xf]
    %v401 = vld [vmem:[%s27 + $0x18] sm:$0xf]
    %v402 = vld [vmem:[%s27 + $0x1c] sm:$0xf]
    %v403 = vld [vmem:[#allocation10] sm:$0x1]
    %v404 = vld [vmem:[%s31] sm:$0xf]
    %v405 = vld [vmem:[%s31 + $0x4] sm:$0xf]
    %v406 = vld [vmem:[%s31 + $0x8] sm:$0xf]
    %v407 = vld [vmem:[%s31 + $0xc] sm:$0xf]
    %v408 = vld [vmem:[%s31 + $0x10] sm:$0xf]
    %v409 = vld [vmem:[%s31 + $0x14] sm:$0xf]
    %v410 = vld [vmem:[#allocation11] sm:$0x1]
    %v411 = vld [vmem:[%s35] sm:$0xf]
    %v412 = vld [vmem:[%s35 + $0x4] sm:$0xf]
    %v413 = vld [vmem:[%s35 + $0x8] sm:$0xf]
    %v414 = vld [vmem:[%s35 + $0xc] sm:$0xf]
    %v415 = vld [vmem:[#allocation13] sm:$0x1]
    %v416 = vld [vmem:[%s39] sm:$0xf]
    %v417 = vld [vmem:[%s39 + $0x4] sm:$0xf]
    %v418 = vld [vmem:[%s39 + $0x8] sm:$0xf]
    %v419 = vld [vmem:[%s39 + $0xc] sm:$0xf]
    %v420 = vld [vmem:[%s41] sm:$0xf]
    %v421 = vld [vmem:[%s41 + $0x4] sm:$0xf]
    %v422 = vld [vmem:[%s41 + $0x8] sm:$0xf]
    %v423 = vld [vmem:[%s41 + $0xc] sm:$0xf]
    %v424 = vld [vmem:[%s43] sm:$0x1]
    %v425 = vld [vmem:[%s45] sm:$0xf]
    %v426 = vld [vmem:[%s45 + $0x4] sm:$0xf]
    %v427 = vld [vmem:[%s45 + $0x8] sm:$0xf]
    %v428 = vld [vmem:[%s45 + $0xc] sm:$0xf]
    %v429 = vld [vmem:[#allocation14] sm:$0xf]
    %v430 = vld [vmem:[#allocation14 + $0x4] sm:$0xf]
    %v431 = vld [vmem:[#allocation14 + $0x8] sm:$0xf]
    %v432 = vld [vmem:[#allocation14 + $0xc] sm:$0xf]
    %v433 = vld [vmem:[#allocation16] sm:$0x1]
    %v434 = vld [vmem:[#allocation17] sm:$0x1]
    %v435 = vld [vmem:[#allocation19] sm:$0x1]
    %v436 = vld [vmem:[%s55] sm:$0xf]
    %v437 = vld [vmem:[%s55 + $0x4] sm:$0xf]
    %v438 = vld [vmem:[%s55 + $0x8] sm:$0xf]
    %v439 = vld [vmem:[%s55 + $0xc] sm:$0xf]
    %v440 = vld [vmem:[%s57] sm:$0xf]
    %v441 = vld [vmem:[%s57 + $0x4] sm:$0xf]
    %v442 = vld [vmem:[%s57 + $0x8] sm:$0xf]
    %v443 = vld [vmem:[%s57 + $0xc] sm:$0xf]
    %v444 = vld [vmem:[#allocation20] sm:$0xf]
    %v445 = vld [vmem:[#allocation20 + $0x4] sm:$0xf]
    %v446 = vld [vmem:[#allocation20 + $0x8] sm:$0x3]
    %v447 = vld [vmem:[#allocation22] sm:$0x1]
    %v448 = vld [vmem:[#allocation23] sm:$0xf]
    %v449 = vld [vmem:[#allocation23 + $0x4] sm:$0xf]
    %v450 = vld [vmem:[#allocation23 + $0x8] sm:$0xf]
    %v451 = vld [vmem:[#allocation23 + $0xc] sm:$0xf]
    %v452 = vld [vmem:[#allocation25] sm:$0x1]
    %v453 = vld [vmem:[%s67] sm:$0xf]
    %v454 = vld [vmem:[%s67 + $0x4] sm:$0xf]
    %v455 = vld [vmem:[%s67 + $0x8] sm:$0xf]
    %v456 = vld [vmem:[%s67 + $0xc] sm:$0xf]
    %v457 = vld [vmem:[%s69] sm:$0x1]
    %v458 = vld [vmem:[#allocation26] sm:$0xf]
    %v459 = vld [vmem:[#allocation26 + $0x4] sm:$0xf]
    %v460 = vld [vmem:[#allocation26 + $0x8] sm:$0xf]
    %v461 = vld [vmem:[#allocation26 + $0xc] sm:$0xf]
    %v462 = vld [vmem:[%s73] sm:$0x1]
    %v463 = vld [vmem:[%s75] sm:$0xf]
    %v464 = vld [vmem:[%s75 + $0x4] sm:$0xf]
    %v465 = vld [vmem:[%s75 + $0x8] sm:$0xf]
    %v466 = vld [vmem:[%s75 + $0xc] sm:$0xf]
    %v467 = vld [vmem:[#allocation2] sm:$0x1]
    %v468 = vld [vmem:[%s1] sm:$0x3f]
    %v469 = vld [vmem:[%s1 + $0x8] sm:$0x3f]
    %v472 = vrot.slane %v468, 2
    %v473 = vrot.slane %v469, 2
    %474 = vrot.lane.b32.xlu0 %v472, 92
    %v475 = vpop.permute.xlu0 %474
    %476 = vrot.lane.b32.xlu0 %v473, 92
    %v477 = vpop.permute.xlu0 %476
    %vm478 = vcmask 752640
    %v479 = vsel %vm478, %v475, %v477
    %v481 = vrot.slane %v469, 4
    %482 = vrot.lane.b32.xlu0 %v481, 56
    %v483 = vpop.permute.xlu0 %482
    %v485 = vrot.slane %v469, 6
    %486 = vrot.lane.b32.xlu0 %v485, 20
    %v487 = vpop.permute.xlu0 %486
    %vm489 = vcmask 1045504
    %v490 = vsel %vm489, %v468, %v479
    %vm491 = vcmask 1043456
    %v492 = vsel %vm491, %v479, %v483
    %vm493 = vcmask 1041408
    %v494 = vsel %vm493, %v483, %v487
    %v495 = vpack.c.bf16 %v492, %v490
    %v496 = vpack.c.bf16 %v494, %v494
    %v498 = vlaneseq
    %v499 = vshrl.u32 %v498, 7
    %v500 = vsub.s32 0, %v499
    %v501 = vrot.slane %v363, %v500
    %505 = vrot.lane.b32.xlu0 %v495, 59
    %v506 = vpop.permute.xlu0 %505
    %507 = vrot.lane.b32.xlu0 %v496, 59
    %v508 = vpop.permute.xlu0 %507
    %v514 = vunpack.c.l.b16 %v358
    %v515 = vunpack.c.l.b16 %v359
    %v516 = vunpack.c.l.b16 %v360
    %v517 = vunpack.c.l.b16 %v361
    %v518 = vunpack.c.l.b16 %v362
    %v519 = vpack.c.b16 %v515, %v514
    %v520 = vpack.c.b16 %v517, %v516
    %v521 = vpack.c.b16 %v518, %v518
    %vm524 = vcmask 293888
    %v526 = vsel %vm524, %v506, 0
    %v529 = vsel %vm524, %v508, 0
    %v532 = vsel %vm493, %v521, 0
    %534 = vmatprep.subr.bf16.mxu0 0
    %535 = vmatpush1.bf16.msra.mxu0 %v519
    %536 = vmatprep.subr.bf16.mxu0 0
    %537 = vmatpush1.bf16.msra.mxu0 %v520
    %538 = vmatprep.subr.bf16.mxu0 0
    %539 = vmatpush1.bf16.msra.mxu0 %v532
    %540 = vmatprep.subr.bf16.mxu0 0
    %541 = vmatpush1.bf16.msra.mxu0 0
    %542 = vmatprep.subr.bf16.mxu0 0
    %543 = vmatpush1.bf16.msra.mxu0 0
    %544 = vmatprep.subr.bf16.mxu0 0
    %545 = vmatpush1.bf16.msra.mxu0 0
    %546 = vmatprep.subr.bf16.mxu0 0
    %547 = vmatpush1.bf16.msra.mxu0 0
    %548 = vmatprep.subr.bf16.mxu0 0
    %549 = vmatpush1.bf16.msra.mxu0 0
    %550 = vmatprep.subr.bf16.mxu0 0
    %551 = vmatpush1.bf16.msra.mxu0 0
    %552 = vmatprep.subr.bf16.mxu0 0
    %553 = vmatpush1.bf16.msra.mxu0 0
    %554 = vmatprep.subr.bf16.mxu0 0
    %555 = vmatpush1.bf16.msra.mxu0 0
    %556 = vmatprep.subr.bf16.mxu0 0
    %557 = vmatpush1.bf16.msra.mxu0 0
    %558 = vmatprep.subr.bf16.mxu0 0
    %559 = vmatpush1.bf16.msra.mxu0 0
    %560 = vmatprep.subr.bf16.mxu0 0
    %561 = vmatpush1.bf16.msra.mxu0 0
    %562 = vmatprep.subr.bf16.mxu0 0
    %563 = vmatpush1.bf16.msra.mxu0 0
    %564 = vmatprep.subr.bf16.mxu0 0
    %565 = vmatpush1.bf16.msra.mxu0 0
    %566 = vmatprep.mubr.bf16.mxu0 0
    %567 = vmatmul.mubr.bf16.gmra.mrb[0].mxu0 %v526
    %v568 = vpop.f32.mrb[0].mxu0
    %v569 = vadd.f32 %v501, %v568
    %v570 = vpop.f32.mrb[0].mxu0
    %v571 = vpop.f32.mrb[0].mxu0
    %v572 = vadd.f32 %v501, %v571
    %v573 = vpop.f32.mrb[0].mxu0
    %574 = vmatprep.mubr.bf16.mxu0 0
    %575 = vmatmul.mubr.bf16.gmra.mrb[0].mxu0 %v529
    %v576 = vpop.f32.mrb[0].mxu0
    %v577 = vadd.f32 %v501, %v576
    %v578 = vpop.f32.mrb[0].mxu0
    %v579 = vpop.f32.mrb[0].mxu0
    %v580 = vpop.f32.mrb[0].mxu0
    %581 = vdwg.mxu0
    %v582 = vpack.c.bf16 %v572, %v569
    %v583 = vpack.c.bf16 %v577, %v577
    %v589 = vunpack.c.l.b16 %v364
    %v590 = vunpack.c.l.b16 %v365
    %v591 = vunpack.c.l.b16 %v366
    %v592 = vunpack.c.l.b16 %v367
    %v593 = vunpack.c.l.b16 %v368
    %v594 = vpack.c.b16 %v590, %v589
    %v595 = vpack.c.b16 %v592, %v591
    %v596 = vpack.c.b16 %v593, %v593
    %v600 = vsel %vm524, %v582, 0
    %v603 = vsel %vm524, %v583, 0
    %v606 = vsel %vm493, %v596, 0
    %608 = vmatprep.subr.bf16.mxu0 0
    %609 = vmatpush1.bf16.msra.mxu0 %v594
    %610 = vmatprep.subr.bf16.mxu0 0
    %611 = vmatpush1.bf16.msra.mxu0 %v595
    %612 = vmatprep.subr.bf16.mxu0 0
    %613 = vmatpush1.bf16.msra.mxu0 %v606
    %614 = vmatprep.subr.bf16.mxu0 0
    %615 = vmatpush1.bf16.msra.mxu0 0
    %616 = vmatprep.subr.bf16.mxu0 0
    %617 = vmatpush1.bf16.msra.mxu0 0
    %618 = vmatprep.subr.bf16.mxu0 0
    %619 = vmatpush1.bf16.msra.mxu0 0
    %620 = vmatprep.subr.bf16.mxu0 0
    %621 = vmatpush1.bf16.msra.mxu0 0
    %622 = vmatprep.subr.bf16.mxu0 0
    %623 = vmatpush1.bf16.msra.mxu0 0
    %624 = vmatprep.subr.bf16.mxu0 0
    %625 = vmatpush1.bf16.msra.mxu0 0
    %626 = vmatprep.subr.bf16.mxu0 0
    %627 = vmatpush1.bf16.msra.mxu0 0
    %628 = vmatprep.subr.bf16.mxu0 0
    %629 = vmatpush1.bf16.msra.mxu0 0
    %630 = vmatprep.subr.bf16.mxu0 0
    %631 = vmatpush1.bf16.msra.mxu0 0
    %632 = vmatprep.subr.bf16.mxu0 0
    %633 = vmatpush1.bf16.msra.mxu0 0
    %634 = vmatprep.subr.bf16.mxu0 0
    %635 = vmatpush1.bf16.msra.mxu0 0
    %636 = vmatprep.subr.bf16.mxu0 0
    %637 = vmatpush1.bf16.msra.mxu0 0
    %638 = vmatprep.subr.bf16.mxu0 0
    %639 = vmatpush1.bf16.msra.mxu0 0
    %640 = vmatprep.mubr.bf16.mxu0 0
    %641 = vmatmul.mubr.bf16.gmra.mrb[0].mxu0 %v600
    %v642 = vpop.f32.mrb[0].mxu0
    %v643 = vadd.f32 0.0, %v642
    %v644 = vpop.f32.mrb[0].mxu0
    %v645 = vpop.f32.mrb[0].mxu0
    %v646 = vadd.f32 0.0, %v645
    %v647 = vpop.f32.mrb[0].mxu0
    %648 = vmatprep.mubr.bf16.mxu0 0
    %649 = vmatmul.mubr.bf16.gmra.mrb[0].mxu0 %v603
    %v650 = vpop.f32.mrb[0].mxu0
    %v651 = vadd.f32 0.0, %v650
    %v652 = vpop.f32.mrb[0].mxu0
    %v653 = vpop.f32.mrb[0].mxu0
    %v654 = vpop.f32.mrb[0].mxu0
    %655 = vdwg.mxu0
    %v661 = vunpack.c.l.b16 %v369
    %v662 = vunpack.c.l.b16 %v370
    %v663 = vunpack.c.l.b16 %v371
    %v664 = vunpack.c.l.b16 %v372
    %v665 = vunpack.c.l.b16 %v373
    %v666 = vpack.c.b16 %v662, %v661
    %v667 = vpack.c.b16 %v664, %v663
    %v668 = vpack.c.b16 %v665, %v665
    %v672 = vsel %vm493, %v668, 0
    %674 = vmatprep.subr.bf16.mxu0 0
    %675 = vmatpush1.bf16.msra.mxu0 %v666
    %676 = vmatprep.subr.bf16.mxu0 0
    %677 = vmatpush1.bf16.msra.mxu0 %v667
    %678 = vmatprep.subr.bf16.mxu0 0
    %679 = vmatpush1.bf16.msra.mxu0 %v672
    %680 = vmatprep.subr.bf16.mxu0 0
    %681 = vmatpush1.bf16.msra.mxu0 0
    %682 = vmatprep.subr.bf16.mxu0 0
    %683 = vmatpush1.bf16.msra.mxu0 0
    %684 = vmatprep.subr.bf16.mxu0 0
    %685 = vmatpush1.bf16.msra.mxu0 0
    %686 = vmatprep.subr.bf16.mxu0 0
    %687 = vmatpush1.bf16.msra.mxu0 0
    %688 = vmatprep.subr.bf16.mxu0 0
    %689 = vmatpush1.bf16.msra.mxu0 0
    %690 = vmatprep.subr.bf16.mxu0 0
    %691 = vmatpush1.bf16.msra.mxu0 0
    %692 = vmatprep.subr.bf16.mxu0 0
    %693 = vmatpush1.bf16.msra.mxu0 0
    %694 = vmatprep.subr.bf16.mxu0 0
    %695 = vmatpush1.bf16.msra.mxu0 0
    %696 = vmatprep.subr.bf16.mxu0 0
    %697 = vmatpush1.bf16.msra.mxu0 0
    %698 = vmatprep.subr.bf16.mxu0 0
    %699 = vmatpush1.bf16.msra.mxu0 0
    %700 = vmatprep.subr.bf16.mxu0 0
    %701 = vmatpush1.bf16.msra.mxu0 0
    %702 = vmatprep.subr.bf16.mxu0 0
    %703 = vmatpush1.bf16.msra.mxu0 0
    %704 = vmatprep.subr.bf16.mxu0 0
    %705 = vmatpush1.bf16.msra.mxu0 0
    %706 = vmatprep.mubr.bf16.mxu0 0
    %707 = vmatmul.mubr.bf16.gmra.mrb[0].mxu0 %v600
    %v708 = vpop.f32.mrb[0].mxu0
    %v709 = vadd.f32 0.0, %v708
    %v710 = vpop.f32.mrb[0].mxu0
    %v711 = vpop.f32.mrb[0].mxu0
    %v712 = vadd.f32 0.0, %v711
    %v713 = vpop.f32.mrb[0].mxu0
    %714 = vmatprep.mubr.bf16.mxu0 0
    %715 = vmatmul.mubr.bf16.gmra.mrb[0].mxu0 %v603
    %v716 = vpop.f32.mrb[0].mxu0
    %v717 = vadd.f32 0.0, %v716
    %v718 = vpop.f32.mrb[0].mxu0
    %v719 = vpop.f32.mrb[0].mxu0
    %v720 = vpop.f32.mrb[0].mxu0
    %721 = vdwg.mxu0
    %v723 = vrot.slane %v717, 2
    %v725 = vadd.f32 %v643, %v723
    %v727 = vlaneseq
    %v728 = vshrl.u32 %v727, 7
    %v729 = vsub.s32 0, %v728
    %v730 = vrot.slane %v378, %v729
    %v732 = vadd.f32 %v725, %v730
    %v737 = vunpack.c.l.b16 %v374
    %v738 = vunpack.c.l.b16 %v375
    %v739 = vunpack.c.l.b16 %v376
    %v740 = vunpack.c.l.b16 %v377
    %v741 = vpack.c.b16 %v738, %v737
    %v742 = vpack.c.b16 %v740, %v739
    %vm745 = vcmask 261120
    %v747 = vsel %vm745, 0, 0
    %749 = vmatprep.subr.bf16.mxu0 0
    %750 = vmatpush1.bf16.msra.mxu0 %v741
    %751 = vmatprep.subr.bf16.mxu0 0
    %752 = vmatpush1.bf16.msra.mxu0 %v742
    %753 = vmatprep.subr.bf16.mxu0 0
    %754 = vmatpush1.bf16.msra.mxu0 0
    %755 = vmatprep.subr.bf16.mxu0 0
    %756 = vmatpush1.bf16.msra.mxu0 0
    %757 = vmatprep.subr.bf16.mxu0 0
    %758 = vmatpush1.bf16.msra.mxu0 0
    %759 = vmatprep.subr.bf16.mxu0 0
    %760 = vmatpush1.bf16.msra.mxu0 0
    %761 = vmatprep.subr.bf16.mxu0 0
    %762 = vmatpush1.bf16.msra.mxu0 0
    %763 = vmatprep.subr.bf16.mxu0 0
    %764 = vmatpush1.bf16.msra.mxu0 0
    %765 = vmatprep.subr.bf16.mxu0 0
    %766 = vmatpush1.bf16.msra.mxu0 0
    %767 = vmatprep.subr.bf16.mxu0 0
    %768 = vmatpush1.bf16.msra.mxu0 0
    %769 = vmatprep.subr.bf16.mxu0 0
    %770 = vmatpush1.bf16.msra.mxu0 0
    %771 = vmatprep.subr.bf16.mxu0 0
    %772 = vmatpush1.bf16.msra.mxu0 0
    %773 = vmatprep.subr.bf16.mxu0 0
    %774 = vmatpush1.bf16.msra.mxu0 0
    %775 = vmatprep.subr.bf16.mxu0 0
    %776 = vmatpush1.bf16.msra.mxu0 0
    %777 = vmatprep.subr.bf16.mxu0 0
    %778 = vmatpush1.bf16.msra.mxu0 0
    %779 = vmatprep.subr.bf16.mxu0 0
    %780 = vmatpush1.bf16.msra.mxu0 0
    %781 = vmatprep.mubr.bf16.mxu0 0
    %782 = vmatmul.mubr.bf16.gmra.mrb[0].mxu0 %v747
    %v783 = vpop.f32.mrb[0].mxu0
    %v784 = vadd.f32 0.0, %v783
    %v785 = vpop.f32.mrb[0].mxu0
    %v786 = vpop.f32.mrb[0].mxu0
    %v787 = vpop.f32.mrb[0].mxu0
    %788 = vdwg.mxu0
    %v789 = vadd.f32 %v732, %v784
    %v790 = vxor.u32 %v789, 2147483648
    %v791 = vmul.f32 %v790, 1.442695
    %v792 = vpow.pop %v791
    %v793 = vadd.f32 %v792, 1.0
    %v794 = vrcp.pop %v793
    %v795 = vmul.f32 1.0, %v794
    %v796 = vtanh.pop %v789
    %v797 = vmul.f32 %v795, 0.0
    %799 = vrot.lane.b32.xlu0 %v796, 64
    %v800 = vpop.permute.xlu0 %799
    %v802 = vmul.f32 %v795, %v800
    %804 = vrot.lane.b32.xlu0 %v802, 32
    %v805 = vpop.permute.xlu0 %804
    %v807 = vadd.f32 %v797, %v805
    %v808 = vtanh.pop %v807
    %810 = vrot.lane.b32.xlu0 %v808, 64
    %v811 = vpop.permute.xlu0 %810
    %v813 = vmul.f32 %v795, %v811
    %v815 = vrot.slane %v712, 6
    %v816 = vrot.slane %v717, 6
    %v817 = vsel %vm493, %v815, %v816
    %v820 = vadd.f32 %v643, %v815
    %v821 = vadd.f32 %v646, %v817
    %v822 = vadd.f32 %v820, %v730
    %v823 = vadd.f32 %v821, %v730
    %v824 = vpack.c.bf16 %v813, %v813
    %826 = vrot.lane.b32.xlu0 %v824, 32
    %v827 = vpop.permute.xlu0 %826
    %v829 = vsel %vm745, %v827, 0
    %831 = vmatprep.subr.bf16.mxu0 0
    %832 = vmatpush1.bf16.msra.mxu0 %v741
    %833 = vmatprep.subr.bf16.mxu0 0
    %834 = vmatpush1.bf16.msra.mxu0 %v742
    %835 = vmatprep.subr.bf16.mxu0 0
    %836 = vmatpush1.bf16.msra.mxu0 0
    %837 = vmatprep.subr.bf16.mxu0 0
    %838 = vmatpush1.bf16.msra.mxu0 0
    %839 = vmatprep.subr.bf16.mxu0 0
    %840 = vmatpush1.bf16.msra.mxu0 0
    %841 = vmatprep.subr.bf16.mxu0 0
    %842 = vmatpush1.bf16.msra.mxu0 0
    %843 = vmatprep.subr.bf16.mxu0 0
    %844 = vmatpush1.bf16.msra.mxu0 0
    %845 = vmatprep.subr.bf16.mxu0 0
    %846 = vmatpush1.bf16.msra.mxu0 0
    %847 = vmatprep.subr.bf16.mxu0 0
    %848 = vmatpush1.bf16.msra.mxu0 0
    %849 = vmatprep.subr.bf16.mxu0 0
    %850 = vmatpush1.bf16.msra.mxu0 0
    %851 = vmatprep.subr.bf16.mxu0 0
    %852 = vmatpush1.bf16.msra.mxu0 0
    %853 = vmatprep.subr.bf16.mxu0 0
    %854 = vmatpush1.bf16.msra.mxu0 0
    %855 = vmatprep.subr.bf16.mxu0 0
    %856 = vmatpush1.bf16.msra.mxu0 0
    %857 = vmatprep.subr.bf16.mxu0 0
    %858 = vmatpush1.bf16.msra.mxu0 0
    %859 = vmatprep.subr.bf16.mxu0 0
    %860 = vmatpush1.bf16.msra.mxu0 0
    %861 = vmatprep.subr.bf16.mxu0 0
    %862 = vmatpush1.bf16.msra.mxu0 0
    %863 = vmatprep.mubr.bf16.mxu0 0
    %864 = vmatmul.mubr.bf16.gmra.mrb[0].mxu0 %v829
    %v865 = vpop.f32.mrb[0].mxu0
    %v866 = vadd.f32 0.0, %v865
    %v867 = vpop.f32.mrb[0].mxu0
    %v868 = vpop.f32.mrb[0].mxu0
    %v869 = vpop.f32.mrb[0].mxu0
    %870 = vdwg.mxu0
    %v872 = vrot.slane %v866, 2
    %v874 = vadd.f32 %v822, %v872
    %v875 = vadd.f32 %v823, %v872
    %v876 = vxor.u32 %v874, 2147483648
    %v877 = vxor.u32 %v875, 2147483648
    %v878 = vmul.f32 %v876, 1.442695
    %v879 = vpow.pop %v878
    %v880 = vmul.f32 %v877, 1.442695
    %v881 = vpow.pop %v880
    %v882 = vadd.f32 %v879, 1.0
    %v883 = vadd.f32 %v881, 1.0
    %v884 = vrcp.pop %v882
    %v885 = vmul.f32 1.0, %v884
    %v886 = vrcp.pop %v883
    %v887 = vmul.f32 1.0, %v886
    %v888 = vtanh.pop %v874
    %v889 = vtanh.pop %v875
    %v891 = vrot.slane %v807, 2
    %v893 = vmul.f32 %v885, %v891
    %v894 = vmul.f32 %v887, %v891
    %897 = vrot.lane.b32.xlu0 %v888, 64
    %v898 = vpop.permute.xlu0 %897
    %899 = vrot.lane.b32.xlu0 %v889, 64
    %v900 = vpop.permute.xlu0 %899
    %v903 = vmul.f32 %v885, %v898
    %v904 = vmul.f32 %v887, %v900
    %907 = vrot.lane.b32.xlu0 %v903, 32
    %v908 = vpop.permute.xlu0 %907
    %909 = vrot.lane.b32.xlu0 %v904, 32
    %v910 = vpop.permute.xlu0 %909
    %v913 = vadd.f32 %v893, %v908
    %v914 = vadd.f32 %v894, %v910
    %v915 = vtanh.pop %v913
    %v916 = vtanh.pop %v914
    %919 = vrot.lane.b32.xlu0 %v915, 64
    %v920 = vpop.permute.xlu0 %919
    %921 = vrot.lane.b32.xlu0 %v916, 64
    %v922 = vpop.permute.xlu0 %921
    %v925 = vmul.f32 %v885, %v920
    %v926 = vmul.f32 %v887, %v922
    %v928 = vrot.slane %v709, 2
    %v929 = vrot.slane %v712, 2
    %v930 = vsel %vm489, %v928, %v929
    %v933 = vadd.f32 %v646, %v930
    %v934 = vadd.f32 %v651, %v929
    %v935 = vadd.f32 %v933, %v730
    %v936 = vadd.f32 %v934, %v730
    %v937 = vpack.c.bf16 %v926, %v925
    %v939 = vrot.slane %v937, 3
    %940 = vrot.lane.b32.xlu0 %v939, 32
    %v941 = vpop.permute.xlu0 %940
    %v943 = vsel %vm745, %v941, 0
    %945 = vmatprep.subr.bf16.mxu0 0
    %946 = vmatpush1.bf16.msra.mxu0 %v741
    %947 = vmatprep.subr.bf16.mxu0 0
    %948 = vmatpush1.bf16.msra.mxu0 %v742
    %949 = vmatprep.subr.bf16.mxu0 0
    %950 = vmatpush1.bf16.msra.mxu0 0
    %951 = vmatprep.subr.bf16.mxu0 0
    %952 = vmatpush1.bf16.msra.mxu0 0
    %953 = vmatprep.subr.bf16.mxu0 0
    %954 = vmatpush1.bf16.msra.mxu0 0
    %955 = vmatprep.subr.bf16.mxu0 0
    %956 = vmatpush1.bf16.msra.mxu0 0
    %957 = vmatprep.subr.bf16.mxu0 0
    %958 = vmatpush1.bf16.msra.mxu0 0
    %959 = vmatprep.subr.bf16.mxu0 0
    %960 = vmatpush1.bf16.msra.mxu0 0
    %961 = vmatprep.subr.bf16.mxu0 0
    %962 = vmatpush1.bf16.msra.mxu0 0
    %963 = vmatprep.subr.bf16.mxu0 0
    %964 = vmatpush1.bf16.msra.mxu0 0
    %965 = vmatprep.subr.bf16.mxu0 0
    %966 = vmatpush1.bf16.msra.mxu0 0
    %967 = vmatprep.subr.bf16.mxu0 0
    %968 = vmatpush1.bf16.msra.mxu0 0
    %969 = vmatprep.subr.bf16.mxu0 0
    %970 = vmatpush1.bf16.msra.mxu0 0
    %971 = vmatprep.subr.bf16.mxu0 0
    %972 = vmatpush1.bf16.msra.mxu0 0
    %973 = vmatprep.subr.bf16.mxu0 0
    %974 = vmatpush1.bf16.msra.mxu0 0
    %975 = vmatprep.subr.bf16.mxu0 0
    %976 = vmatpush1.bf16.msra.mxu0 0
    %977 = vmatprep.mubr.bf16.mxu0 0
    %978 = vmatmul.mubr.bf16.gmra.mrb[0].mxu0 %v943
    %v979 = vpop.f32.mrb[0].mxu0
    %v980 = vadd.f32 0.0, %v979
    %v981 = vpop.f32.mrb[0].mxu0
    %v982 = vpop.f32.mrb[0].mxu0
    %v983 = vpop.f32.mrb[0].mxu0
    %984 = vdwg.mxu0
    %v986 = vrot.slane %v980, 4
    %v988 = vadd.f32 %v935, %v986
    %v989 = vadd.f32 %v936, %v986
    %v990 = vxor.u32 %v988, 2147483648
    %v991 = vxor.u32 %v989, 2147483648
    %v992 = vmul.f32 %v990, 1.442695
    %v993 = vpow.pop %v992
    %v994 = vmul.f32 %v991, 1.442695
    %v995 = vpow.pop %v994
    %v996 = vadd.f32 %v993, 1.0
    %v997 = vadd.f32 %v995, 1.0
    %v998 = vrcp.pop %v996
    %v999 = vmul.f32 1.0, %v998
    %v1000 = vrcp.pop %v997
    %v1001 = vmul.f32 1.0, %v1000
    %v1002 = vtanh.pop %v988
    %v1003 = vtanh.pop %v989
    %v1006 = vrot.slane %v913, 2
    %v1007 = vrot.slane %v914, 2
    %v1008 = vsel %vm489, %v1006, %v1007
    %v1011 = vmul.f32 %v999, %v1008
    %v1012 = vmul.f32 %v1001, %v1007
    %1015 = vrot.lane.b32.xlu0 %v1002, 64
    %v1016 = vpop.permute.xlu0 %1015
    %1017 = vrot.lane.b32.xlu0 %v1003, 64
    %v1018 = vpop.permute.xlu0 %1017
    %v1021 = vmul.f32 %v999, %v1016
    %v1022 = vmul.f32 %v1001, %v1018
    %1025 = vrot.lane.b32.xlu0 %v1021, 32
    %v1026 = vpop.permute.xlu0 %1025
    %1027 = vrot.lane.b32.xlu0 %v1022, 32
    %v1028 = vpop.permute.xlu0 %1027
    %v1031 = vadd.f32 %v1011, %v1026
    %v1032 = vadd.f32 %v1012, %v1028
    %v1033 = vtanh.pop %v1031
    %v1034 = vtanh.pop %v1032
    %1037 = vrot.lane.b32.xlu0 %v1033, 64
    %v1038 = vpop.permute.xlu0 %1037
    %1039 = vrot.lane.b32.xlu0 %v1034, 64
    %v1040 = vpop.permute.xlu0 %1039
    %v1043 = vmul.f32 %v999, %v1038
    %v1044 = vmul.f32 %v1001, %v1040
    %v1045 = vrot.slane %v709, 6
    %v1047 = vadd.f32 %v651, %v1045
    %v1048 = vadd.f32 %v1047, %v730
    %v1049 = vpack.c.bf16 %v1044, %v1043
    %v1051 = vrot.slane %v1049, 2
    %1052 = vrot.lane.b32.xlu0 %v1051, 32
    %v1053 = vpop.permute.xlu0 %1052
    %v1055 = vsel %vm745, %v1053, 0
    %1057 = vmatprep.subr.bf16.mxu0 0
    %1058 = vmatpush1.bf16.msra.mxu0 %v741
    %1059 = vmatprep.subr.bf16.mxu0 0
    %1060 = vmatpush1.bf16.msra.mxu0 %v742
    %1061 = vmatprep.subr.bf16.mxu0 0
    %1062 = vmatpush1.bf16.msra.mxu0 0
    %1063 = vmatprep.subr.bf16.mxu0 0
    %1064 = vmatpush1.bf16.msra.mxu0 0
    %1065 = vmatprep.subr.bf16.mxu0 0
    %1066 = vmatpush1.bf16.msra.mxu0 0
    %1067 = vmatprep.subr.bf16.mxu0 0
    %1068 = vmatpush1.bf16.msra.mxu0 0
    %1069 = vmatprep.subr.bf16.mxu0 0
    %1070 = vmatpush1.bf16.msra.mxu0 0
    %1071 = vmatprep.subr.bf16.mxu0 0
    %1072 = vmatpush1.bf16.msra.mxu0 0
    %1073 = vmatprep.subr.bf16.mxu0 0
    %1074 = vmatpush1.bf16.msra.mxu0 0
    %1075 = vmatprep.subr.bf16.mxu0 0
    %1076 = vmatpush1.bf16.msra.mxu0 0
    %1077 = vmatprep.subr.bf16.mxu0 0
    %1078 = vmatpush1.bf16.msra.mxu0 0
    %1079 = vmatprep.subr.bf16.mxu0 0
    %1080 = vmatpush1.bf16.msra.mxu0 0
    %1081 = vmatprep.subr.bf16.mxu0 0
    %1082 = vmatpush1.bf16.msra.mxu0 0
    %1083 = vmatprep.subr.bf16.mxu0 0
    %1084 = vmatpush1.bf16.msra.mxu0 0
    %1085 = vmatprep.subr.bf16.mxu0 0
    %1086 = vmatpush1.bf16.msra.mxu0 0
    %1087 = vmatprep.subr.bf16.mxu0 0
    %1088 = vmatpush1.bf16.msra.mxu0 0
    %1089 = vmatprep.mubr.bf16.mxu0 0
    %1090 = vmatmul.mubr.bf16.gmra.mrb[0].mxu0 %v1055
    %v1091 = vpop.f32.mrb[0].mxu0
    %v1092 = vadd.f32 0.0, %v1091
    %v1093 = vpop.f32.mrb[0].mxu0
    %v1094 = vpop.f32.mrb[0].mxu0
    %v1095 = vpop.f32.mrb[0].mxu0
    %1096 = vdwg.mxu0
    %v1098 = vrot.slane %v1092, 6
    %v1100 = vadd.f32 %v1048, %v1098
    %v1101 = vxor.u32 %v1100, 2147483648
    %v1102 = vmul.f32 %v1101, 1.442695
    %v1103 = vpow.pop %v1102
    %v1104 = vadd.f32 %v1103, 1.0
    %v1105 = vrcp.pop %v1104
    %v1106 = vmul.f32 1.0, %v1105
    %v1107 = vtanh.pop %v1100
    %v1110 = vrot.slane %v1031, 2
    %v1111 = vrot.slane %v1032, 2
    %v1112 = vsel %vm489, %v1110, %v1111
    %v1114 = vmul.f32 %v1106, %v1112
    %1116 = vrot.lane.b32.xlu0 %v1107, 64
    %v1117 = vpop.permute.xlu0 %1116
    %v1119 = vmul.f32 %v1106, %v1117
    %1121 = vrot.lane.b32.xlu0 %v1119, 32
    %v1122 = vpop.permute.xlu0 %1121
    %v1124 = vadd.f32 %v1114, %v1122
    %v1125 = vtanh.pop %v1124
    %1127 = vrot.lane.b32.xlu0 %v1125, 64
    %v1128 = vpop.permute.xlu0 %1127
    %v1130 = vmul.f32 %v1106, %v1128
    %v1131 = vpack.c.bf16 %v468, %v468
    %1133 = vrot.lane.b32.xlu0 %v1131, 95
    %v1134 = vpop.permute.xlu0 %1133
    %v1140 = vunpack.c.l.b16 %v384
    %v1141 = vunpack.c.l.b16 %v385
    %v1142 = vunpack.c.l.b16 %v386
    %v1143 = vunpack.c.l.b16 %v387
    %v1144 = vunpack.c.l.b16 %v388
    %v1145 = vpack.c.b16 %v1141, %v1140
    %v1146 = vpack.c.b16 %v1143, %v1142
    %v1147 = vpack.c.b16 %v1144, %v1144
    %v1151 = vsel %vm524, %v1134, 0
    %v1154 = vsel %vm493, %v1147, 0
    %1156 = vmatprep.subr.bf16.mxu0 0
    %1157 = vmatpush1.bf16.msra.mxu0 %v1145
    %1158 = vmatprep.subr.bf16.mxu0 0
    %1159 = vmatpush1.bf16.msra.mxu0 %v1146
    %1160 = vmatprep.subr.bf16.mxu0 0
    %1161 = vmatpush1.bf16.msra.mxu0 %v1154
    %1162 = vmatprep.subr.bf16.mxu0 0
    %1163 = vmatpush1.bf16.msra.mxu0 0
    %1164 = vmatprep.subr.bf16.mxu0 0
    %1165 = vmatpush1.bf16.msra.mxu0 0
    %1166 = vmatprep.subr.bf16.mxu0 0
    %1167 = vmatpush1.bf16.msra.mxu0 0
    %1168 = vmatprep.subr.bf16.mxu0 0
    %1169 = vmatpush1.bf16.msra.mxu0 0
    %1170 = vmatprep.subr.bf16.mxu0 0
    %1171 = vmatpush1.bf16.msra.mxu0 0
    %1172 = vmatprep.subr.bf16.mxu0 0
    %1173 = vmatpush1.bf16.msra.mxu0 0
    %1174 = vmatprep.subr.bf16.mxu0 0
    %1175 = vmatpush1.bf16.msra.mxu0 0
    %1176 = vmatprep.subr.bf16.mxu0 0
    %1177 = vmatpush1.bf16.msra.mxu0 0
    %1178 = vmatprep.subr.bf16.mxu0 0
    %1179 = vmatpush1.bf16.msra.mxu0 0
    %1180 = vmatprep.subr.bf16.mxu0 0
    %1181 = vmatpush1.bf16.msra.mxu0 0
    %1182 = vmatprep.subr.bf16.mxu0 0
    %1183 = vmatpush1.bf16.msra.mxu0 0
    %1184 = vmatprep.subr.bf16.mxu0 0
    %1185 = vmatpush1.bf16.msra.mxu0 0
    %1186 = vmatprep.subr.bf16.mxu0 0
    %1187 = vmatpush1.bf16.msra.mxu0 0
    %1188 = vmatprep.mubr.bf16.mxu0 0
    %1189 = vmatmul.mubr.bf16.gmra.mrb[0].mxu0 %v1151
    %v1190 = vpop.f32.mrb[0].mxu0
    %v1191 = vadd.f32 0.0, %v1190
    %v1192 = vpop.f32.mrb[0].mxu0
    %v1193 = vpop.f32.mrb[0].mxu0
    %v1194 = vpop.f32.mrb[0].mxu0
    %1195 = vdwg.mxu0
    %v1201 = vunpack.c.l.b16 %v379
    %v1202 = vunpack.c.l.b16 %v380
    %v1203 = vunpack.c.l.b16 %v381
    %v1204 = vunpack.c.l.b16 %v382
    %v1205 = vunpack.c.l.b16 %v383
    %v1206 = vpack.c.b16 %v1202, %v1201
    %v1207 = vpack.c.b16 %v1204, %v1203
    %v1208 = vpack.c.b16 %v1205, %v1205
    %vm1211 = vcmask 269312
    %v1213 = vsel %vm1211, %v1131, 0
    %vm1215 = vcmask 1040384
    %v1216 = vsel 0, 4294967295, 65535
    %v1217 = vsel %vm1215, %v1216, 0
    %v1219 = vand.u32 %v1208, %v1217
    %1221 = vmatprep.subr.bf16.mxu0 0
    %1222 = vmatpush1.bf16.msra.mxu0 %v1206
    %1223 = vmatprep.subr.bf16.mxu0 0
    %1224 = vmatpush1.bf16.msra.mxu0 %v1207
    %1225 = vmatprep.subr.bf16.mxu0 0
    %1226 = vmatpush1.bf16.msra.mxu0 %v1219
    %1227 = vmatprep.subr.bf16.mxu0 0
    %1228 = vmatpush1.bf16.msra.mxu0 0
    %1229 = vmatprep.subr.bf16.mxu0 0
    %1230 = vmatpush1.bf16.msra.mxu0 0
    %1231 = vmatprep.subr.bf16.mxu0 0
    %1232 = vmatpush1.bf16.msra.mxu0 0
    %1233 = vmatprep.subr.bf16.mxu0 0
    %1234 = vmatpush1.bf16.msra.mxu0 0
    %1235 = vmatprep.subr.bf16.mxu0 0
    %1236 = vmatpush1.bf16.msra.mxu0 0
    %1237 = vmatprep.subr.bf16.mxu0 0
    %1238 = vmatpush1.bf16.msra.mxu0 0
    %1239 = vmatprep.subr.bf16.mxu0 0
    %1240 = vmatpush1.bf16.msra.mxu0 0
    %1241 = vmatprep.subr.bf16.mxu0 0
    %1242 = vmatpush1.bf16.msra.mxu0 0
    %1243 = vmatprep.subr.bf16.mxu0 0
    %1244 = vmatpush1.bf16.msra.mxu0 0
    %1245 = vmatprep.subr.bf16.mxu0 0
    %1246 = vmatpush1.bf16.msra.mxu0 0
    %1247 = vmatprep.subr.bf16.mxu0 0
    %1248 = vmatpush1.bf16.msra.mxu0 0
    %1249 = vmatprep.subr.bf16.mxu0 0
    %1250 = vmatpush1.bf16.msra.mxu0 0
    %1251 = vmatprep.subr.bf16.mxu0 0
    %1252 = vmatpush1.bf16.msra.mxu0 0
    %1253 = vmatprep.mubr.bf16.mxu0 0
    %1254 = vmatmul.mubr.bf16.gmra.mrb[0].mxu0 %v1213
    %v1255 = vpop.f32.mrb[0].mxu0
    %v1256 = vadd.f32 %v1191, %v1255
    %v1257 = vpop.f32.mrb[0].mxu0
    %v1258 = vpop.f32.mrb[0].mxu0
    %v1259 = vpop.f32.mrb[0].mxu0
    %1260 = vdwg.mxu0
    %v1261 = vpack.c.bf16 %v1130, %v1130
    %v1263 = vrot.slane %v1261, 1
    %1264 = vrot.lane.b32.xlu0 %v1263, 32
    %v1265 = vpop.permute.xlu0 %1264
    %v1270 = vunpack.c.l.b16 %v389
    %v1271 = vunpack.c.l.b16 %v390
    %v1272 = vunpack.c.l.b16 %v391
    %v1273 = vunpack.c.l.b16 %v392
    %v1274 = vpack.c.b16 %v1271, %v1270
    %v1275 = vpack.c.b16 %v1273, %v1272
    %v1279 = vsel %vm745, %v1265, 0
    %1281 = vmatprep.subr.bf16.mxu0 0
    %1282 = vmatpush1.bf16.msra.mxu0 %v1274
    %1283 = vmatprep.subr.bf16.mxu0 0
    %1284 = vmatpush1.bf16.msra.mxu0 %v1275
    %1285 = vmatprep.subr.bf16.mxu0 0
    %1286 = vmatpush1.bf16.msra.mxu0 0
    %1287 = vmatprep.subr.bf16.mxu0 0
    %1288 = vmatpush1.bf16.msra.mxu0 0
    %1289 = vmatprep.subr.bf16.mxu0 0
    %1290 = vmatpush1.bf16.msra.mxu0 0
    %1291 = vmatprep.subr.bf16.mxu0 0
    %1292 = vmatpush1.bf16.msra.mxu0 0
    %1293 = vmatprep.subr.bf16.mxu0 0
    %1294 = vmatpush1.bf16.msra.mxu0 0
    %1295 = vmatprep.subr.bf16.mxu0 0
    %1296 = vmatpush1.bf16.msra.mxu0 0
    %1297 = vmatprep.subr.bf16.mxu0 0
    %1298 = vmatpush1.bf16.msra.mxu0 0
    %1299 = vmatprep.subr.bf16.mxu0 0
    %1300 = vmatpush1.bf16.msra.mxu0 0
    %1301 = vmatprep.subr.bf16.mxu0 0
    %1302 = vmatpush1.bf16.msra.mxu0 0
    %1303 = vmatprep.subr.bf16.mxu0 0
    %1304 = vmatpush1.bf16.msra.mxu0 0
    %1305 = vmatprep.subr.bf16.mxu0 0
    %1306 = vmatpush1.bf16.msra.mxu0 0
    %1307 = vmatprep.subr.bf16.mxu0 0
    %1308 = vmatpush1.bf16.msra.mxu0 0
    %1309 = vmatprep.subr.bf16.mxu0 0
    %1310 = vmatpush1.bf16.msra.mxu0 0
    %1311 = vmatprep.subr.bf16.mxu0 0
    %1312 = vmatpush1.bf16.msra.mxu0 0
    %1313 = vmatprep.mubr.bf16.mxu0 0
    %1314 = vmatmul.mubr.bf16.gmra.mrb[0].mxu0 %v1279
    %v1315 = vpop.f32.mrb[0].mxu0
    %v1316 = vadd.f32 0.0, %v1315
    %v1317 = vpop.f32.mrb[0].mxu0
    %v1318 = vpop.f32.mrb[0].mxu0
    %v1319 = vpop.f32.mrb[0].mxu0
    %1320 = vdwg.mxu0
    %v1321 = vadd.f32 %v1256, %v1316
    %v1322 = vpack.c.bf16 %v469, %v469
    %1324 = vrot.lane.b32.xlu0 %v1322, 43
    %v1325 = vpop.permute.xlu0 %1324
    %vm1326 = vcmask 39936
    %v1328 = vsel %vm1326, %v1325, 0
    %vm1330 = vcmask 1042432
    %v1331 = vsel %vm493, 4294967295, 65535
    %v1332 = vsel %vm1330, %v1331, 0
    %v1334 = vand.u32 %v393, %v1332
    %1336 = vmatprep.subr.bf16.mxu0 0
    %1337 = vmatpush1.bf16.msra.mxu0 %v1334
    %1338 = vmatprep.subr.bf16.mxu0 0
    %1339 = vmatpush1.bf16.msra.mxu0 0
    %1340 = vmatprep.subr.bf16.mxu0 0
    %1341 = vmatpush1.bf16.msra.mxu0 0
    %1342 = vmatprep.subr.bf16.mxu0 0
    %1343 = vmatpush1.bf16.msra.mxu0 0
    %1344 = vmatprep.subr.bf16.mxu0 0
    %1345 = vmatpush1.bf16.msra.mxu0 0
    %1346 = vmatprep.subr.bf16.mxu0 0
    %1347 = vmatpush1.bf16.msra.mxu0 0
    %1348 = vmatprep.subr.bf16.mxu0 0
    %1349 = vmatpush1.bf16.msra.mxu0 0
    %1350 = vmatprep.subr.bf16.mxu0 0
    %1351 = vmatpush1.bf16.msra.mxu0 0
    %1352 = vmatprep.subr.bf16.mxu0 0
    %1353 = vmatpush1.bf16.msra.mxu0 0
    %1354 = vmatprep.subr.bf16.mxu0 0
    %1355 = vmatpush1.bf16.msra.mxu0 0
    %1356 = vmatprep.subr.bf16.mxu0 0
    %1357 = vmatpush1.bf16.msra.mxu0 0
    %1358 = vmatprep.subr.bf16.mxu0 0
    %1359 = vmatpush1.bf16.msra.mxu0 0
    %1360 = vmatprep.subr.bf16.mxu0 0
    %1361 = vmatpush1.bf16.msra.mxu0 0
    %1362 = vmatprep.subr.bf16.mxu0 0
    %1363 = vmatpush1.bf16.msra.mxu0 0
    %1364 = vmatprep.subr.bf16.mxu0 0
    %1365 = vmatpush1.bf16.msra.mxu0 0
    %1366 = vmatprep.subr.bf16.mxu0 0
    %1367 = vmatpush1.bf16.msra.mxu0 0
    %1368 = vmatprep.mubr.bf16.mxu0 0
    %1369 = vmatmul.mubr.bf16.gmra.mrb[0].mxu0 %v1328
    %v1370 = vpop.f32.mrb[0].mxu0
    %v1371 = vadd.f32 0.0, %v1370
    %v1372 = vpop.f32.mrb[0].mxu0
    %v1373 = vpop.f32.mrb[0].mxu0
    %v1374 = vpop.f32.mrb[0].mxu0
    %1375 = vdwg.mxu0
    %v1376 = vadd.f32 %v1321, %v1371
    %v1378 = vlaneseq
    %v1379 = vshrl.u32 %v1378, 7
    %v1380 = vsub.s32 0, %v1379
    %v1381 = vrot.slane %v394, %v1380
    %v1383 = vadd.f32 %v1376, %v1381
    %vm1384 = vcmp.gt.f32.partialorder %v1383, 0.0
    %v1385 = vmin.f32 %v1383, 0.0
    %v1386 = vmul.f32 %v1385, 1.442695
    %v1387 = vpow.pop %v1386
    %v1388 = vsub.f32 %v1387, 1.0
    %v1389 = vsel %vm1384, %v1383, %v1388
    %v1390 = vpack.c.bf16 %v1389, %v1389
    %v1392 = vlaneseq
    %v1393 = vshrl.u32 %v1392, 7
    %v1394 = vsub.s32 0, %v1393
    %v1395 = vrot.slane %v403, %v1394
    %v1405 = vunpack.c.l.b16 %v395
    %v1406 = vunpack.c.l.b16 %v396
    %v1407 = vunpack.c.l.b16 %v397
    %v1408 = vunpack.c.l.b16 %v398
    %v1409 = vunpack.c.l.b16 %v399
    %v1410 = vunpack.c.l.b16 %v400
    %v1411 = vunpack.c.l.b16 %v401
    %v1412 = vunpack.c.l.b16 %v402
    %v1413 = vpack.c.b16 %v1406, %v1405
    %v1414 = vpack.c.b16 %v1408, %v1407
    %v1415 = vpack.c.b16 %v1410, %v1409
    %v1416 = vpack.c.b16 %v1412, %v1411
    %vm1421 = vcmask 523264
    %v1423 = vsel %vm1421, %v1390, 0
    %1425 = vmatprep.subr.bf16.mxu0 0
    %1426 = vmatpush1.bf16.msra.mxu0 %v1413
    %1427 = vmatprep.subr.bf16.mxu0 0
    %1428 = vmatpush1.bf16.msra.mxu0 %v1414
    %1429 = vmatprep.subr.bf16.mxu0 0
    %1430 = vmatpush1.bf16.msra.mxu0 %v1415
    %1431 = vmatprep.subr.bf16.mxu0 0
    %1432 = vmatpush1.bf16.msra.mxu0 %v1416
    %1433 = vmatprep.subr.bf16.mxu0 0
    %1434 = vmatpush1.bf16.msra.mxu0 0
    %1435 = vmatprep.subr.bf16.mxu0 0
    %1436 = vmatpush1.bf16.msra.mxu0 0
    %1437 = vmatprep.subr.bf16.mxu0 0
    %1438 = vmatpush1.bf16.msra.mxu0 0
    %1439 = vmatprep.subr.bf16.mxu0 0
    %1440 = vmatpush1.bf16.msra.mxu0 0
    %1441 = vmatprep.subr.bf16.mxu0 0
    %1442 = vmatpush1.bf16.msra.mxu0 0
    %1443 = vmatprep.subr.bf16.mxu0 0
    %1444 = vmatpush1.bf16.msra.mxu0 0
    %1445 = vmatprep.subr.bf16.mxu0 0
    %1446 = vmatpush1.bf16.msra.mxu0 0
    %1447 = vmatprep.subr.bf16.mxu0 0
    %1448 = vmatpush1.bf16.msra.mxu0 0
    %1449 = vmatprep.subr.bf16.mxu0 0
    %1450 = vmatpush1.bf16.msra.mxu0 0
    %1451 = vmatprep.subr.bf16.mxu0 0
    %1452 = vmatpush1.bf16.msra.mxu0 0
    %1453 = vmatprep.subr.bf16.mxu0 0
    %1454 = vmatpush1.bf16.msra.mxu0 0
    %1455 = vmatprep.subr.bf16.mxu0 0
    %1456 = vmatpush1.bf16.msra.mxu0 0
    %1457 = vmatprep.mubr.bf16.mxu0 0
    %1458 = vmatmul.mubr.bf16.gmra.mrb[0].mxu0 %v1423
    %v1459 = vpop.f32.mrb[0].mxu0
    %v1460 = vadd.f32 %v1395, %v1459
    %v1461 = vpop.f32.mrb[0].mxu0
    %v1462 = vpop.f32.mrb[0].mxu0
    %v1463 = vpop.f32.mrb[0].mxu0
    %1464 = vdwg.mxu0
    %vm1465 = vcmp.gt.f32.partialorder %v1460, 0.0
    %v1466 = vmin.f32 %v1460, 0.0
    %v1467 = vmul.f32 %v1466, 1.442695
    %v1468 = vpow.pop %v1467
    %v1469 = vsub.f32 %v1468, 1.0
    %v1470 = vsel %vm1465, %v1460, %v1469
    %v1471 = vpack.c.bf16 %v1470, %v1470
    %v1473 = vlaneseq
    %v1474 = vshrl.u32 %v1473, 7
    %v1475 = vsub.s32 0, %v1474
    %v1476 = vrot.slane %v410, %v1475
    %v1484 = vunpack.c.l.b16 %v404
    %v1485 = vunpack.c.l.b16 %v405
    %v1486 = vunpack.c.l.b16 %v406
    %v1487 = vunpack.c.l.b16 %v407
    %v1488 = vunpack.c.l.b16 %v408
    %v1489 = vunpack.c.l.b16 %v409
    %v1490 = vpack.c.b16 %v1485, %v1484
    %v1491 = vpack.c.b16 %v1487, %v1486
    %v1492 = vpack.c.b16 %v1489, %v1488
    %vm1496 = vcmask 392192
    %v1498 = vsel %vm1496, %v1471, 0
    %1500 = vmatprep.subr.bf16.mxu0 0
    %1501 = vmatpush1.bf16.msra.mxu0 %v1490
    %1502 = vmatprep.subr.bf16.mxu0 0
    %1503 = vmatpush1.bf16.msra.mxu0 %v1491
    %1504 = vmatprep.subr.bf16.mxu0 0
    %1505 = vmatpush1.bf16.msra.mxu0 %v1492
    %1506 = vmatprep.subr.bf16.mxu0 0
    %1507 = vmatpush1.bf16.msra.mxu0 0
    %1508 = vmatprep.subr.bf16.mxu0 0
    %1509 = vmatpush1.bf16.msra.mxu0 0
    %1510 = vmatprep.subr.bf16.mxu0 0
    %1511 = vmatpush1.bf16.msra.mxu0 0
    %1512 = vmatprep.subr.bf16.mxu0 0
    %1513 = vmatpush1.bf16.msra.mxu0 0
    %1514 = vmatprep.subr.bf16.mxu0 0
    %1515 = vmatpush1.bf16.msra.mxu0 0
    %1516 = vmatprep.subr.bf16.mxu0 0
    %1517 = vmatpush1.bf16.msra.mxu0 0
    %1518 = vmatprep.subr.bf16.mxu0 0
    %1519 = vmatpush1.bf16.msra.mxu0 0
    %1520 = vmatprep.subr.bf16.mxu0 0
    %1521 = vmatpush1.bf16.msra.mxu0 0
    %1522 = vmatprep.subr.bf16.mxu0 0
    %1523 = vmatpush1.bf16.msra.mxu0 0
    %1524 = vmatprep.subr.bf16.mxu0 0
    %1525 = vmatpush1.bf16.msra.mxu0 0
    %1526 = vmatprep.subr.bf16.mxu0 0
    %1527 = vmatpush1.bf16.msra.mxu0 0
    %1528 = vmatprep.subr.bf16.mxu0 0
    %1529 = vmatpush1.bf16.msra.mxu0 0
    %1530 = vmatprep.subr.bf16.mxu0 0
    %1531 = vmatpush1.bf16.msra.mxu0 0
    %1532 = vmatprep.mubr.bf16.mxu0 0
    %1533 = vmatmul.mubr.bf16.gmra.mrb[0].mxu0 %v1498
    %v1534 = vpop.f32.mrb[0].mxu0
    %v1535 = vadd.f32 %v1476, %v1534
    %v1536 = vpop.f32.mrb[0].mxu0
    %v1537 = vpop.f32.mrb[0].mxu0
    %v1538 = vpop.f32.mrb[0].mxu0
    %1539 = vdwg.mxu0
    %vm1540 = vcmp.gt.f32.partialorder %v1535, 0.0
    %v1541 = vmin.f32 %v1535, 0.0
    %v1542 = vmul.f32 %v1541, 1.442695
    %v1543 = vpow.pop %v1542
    %v1544 = vsub.f32 %v1543, 1.0
    %v1545 = vsel %vm1540, %v1535, %v1544
    %v1546 = vpack.c.bf16 %v1545, %v1545
    %v1548 = vlaneseq
    %v1549 = vshrl.u32 %v1548, 7
    %v1550 = vsub.s32 0, %v1549
    %v1551 = vrot.slane %v415, %v1550
    %v1557 = vunpack.c.l.b16 %v411
    %v1558 = vunpack.c.l.b16 %v412
    %v1559 = vunpack.c.l.b16 %v413
    %v1560 = vunpack.c.l.b16 %v414
    %v1561 = vpack.c.b16 %v1558, %v1557
    %v1562 = vpack.c.b16 %v1560, %v1559
    %v1566 = vsel %vm745, %v1546, 0
    %1568 = vmatprep.subr.bf16.mxu0 0
    %1569 = vmatpush1.bf16.msra.mxu0 %v1561
    %1570 = vmatprep.subr.bf16.mxu0 0
    %1571 = vmatpush1.bf16.msra.mxu0 %v1562
    %1572 = vmatprep.subr.bf16.mxu0 0
    %1573 = vmatpush1.bf16.msra.mxu0 0
    %1574 = vmatprep.subr.bf16.mxu0 0
    %1575 = vmatpush1.bf16.msra.mxu0 0
    %1576 = vmatprep.subr.bf16.mxu0 0
    %1577 = vmatpush1.bf16.msra.mxu0 0
    %1578 = vmatprep.subr.bf16.mxu0 0
    %1579 = vmatpush1.bf16.msra.mxu0 0
    %1580 = vmatprep.subr.bf16.mxu0 0
    %1581 = vmatpush1.bf16.msra.mxu0 0
    %1582 = vmatprep.subr.bf16.mxu0 0
    %1583 = vmatpush1.bf16.msra.mxu0 0
    %1584 = vmatprep.subr.bf16.mxu0 0
    %1585 = vmatpush1.bf16.msra.mxu0 0
    %1586 = vmatprep.subr.bf16.mxu0 0
    %1587 = vmatpush1.bf16.msra.mxu0 0
    %1588 = vmatprep.subr.bf16.mxu0 0
    %1589 = vmatpush1.bf16.msra.mxu0 0
    %1590 = vmatprep.subr.bf16.mxu0 0
    %1591 = vmatpush1.bf16.msra.mxu0 0
    %1592 = vmatprep.subr.bf16.mxu0 0
    %1593 = vmatpush1.bf16.msra.mxu0 0
    %1594 = vmatprep.subr.bf16.mxu0 0
    %1595 = vmatpush1.bf16.msra.mxu0 0
    %1596 = vmatprep.subr.bf16.mxu0 0
    %1597 = vmatpush1.bf16.msra.mxu0 0
    %1598 = vmatprep.subr.bf16.mxu0 0
    %1599 = vmatpush1.bf16.msra.mxu0 0
    %1600 = vmatprep.mubr.bf16.mxu0 0
    %1601 = vmatmul.mubr.bf16.gmra.mrb[0].mxu0 %v1566
    %v1602 = vpop.f32.mrb[0].mxu0
    %v1603 = vadd.f32 %v1551, %v1602
    %v1604 = vpop.f32.mrb[0].mxu0
    %v1605 = vpop.f32.mrb[0].mxu0
    %v1606 = vpop.f32.mrb[0].mxu0
    %1607 = vdwg.mxu0
    %vm1608 = vcmp.gt.f32.partialorder %v1603, 0.0
    %v1609 = vmin.f32 %v1603, 0.0
    %v1610 = vmul.f32 %v1609, 1.442695
    %v1611 = vpow.pop %v1610
    %v1612 = vsub.f32 %v1611, 1.0
    %v1613 = vsel %vm1608, %v1603, %v1612
    %v1615 = vlaneseq
    %v1616 = vshrl.u32 %v1615, 7
    %v1617 = vsub.s32 0, %v1616
    %v1618 = vrot.slane %v434, %v1617
    %v1621 = vlaneseq
    %v1622 = vshrl.u32 %v1621, 7
    %v1623 = vsub.s32 0, %v1622
    %v1624 = vrot.slane %v435, %v1623
    %v1626 = vpack.c.bf16 %v1613, %v1613
    %v1628 = vlaneseq
    %v1629 = vshrl.u32 %v1628, 7
    %v1630 = vsub.s32 0, %v1629
    %v1631 = vrot.slane %v433, %v1630
    %v1637 = vunpack.c.l.b16 %v425
    %v1638 = vunpack.c.l.b16 %v426
    %v1639 = vunpack.c.l.b16 %v427
    %v1640 = vunpack.c.l.b16 %v428
    %v1641 = vpack.c.b16 %v1638, %v1637
    %v1642 = vpack.c.b16 %v1640, %v1639
    %v1646 = vsel %vm745, %v1626, 0
    %1648 = vmatprep.subr.bf16.mxu0 0
    %1649 = vmatpush1.bf16.msra.mxu0 %v1641
    %1650 = vmatprep.subr.bf16.mxu0 0
    %1651 = vmatpush1.bf16.msra.mxu0 %v1642
    %1652 = vmatprep.subr.bf16.mxu0 0
    %1653 = vmatpush1.bf16.msra.mxu0 0
    %1654 = vmatprep.subr.bf16.mxu0 0
    %1655 = vmatpush1.bf16.msra.mxu0 0
    %1656 = vmatprep.subr.bf16.mxu0 0
    %1657 = vmatpush1.bf16.msra.mxu0 0
    %1658 = vmatprep.subr.bf16.mxu0 0
    %1659 = vmatpush1.bf16.msra.mxu0 0
    %1660 = vmatprep.subr.bf16.mxu0 0
    %1661 = vmatpush1.bf16.msra.mxu0 0
    %1662 = vmatprep.subr.bf16.mxu0 0
    %1663 = vmatpush1.bf16.msra.mxu0 0
    %1664 = vmatprep.subr.bf16.mxu0 0
    %1665 = vmatpush1.bf16.msra.mxu0 0
    %1666 = vmatprep.subr.bf16.mxu0 0
    %1667 = vmatpush1.bf16.msra.mxu0 0
    %1668 = vmatprep.subr.bf16.mxu0 0
    %1669 = vmatpush1.bf16.msra.mxu0 0
    %1670 = vmatprep.subr.bf16.mxu0 0
    %1671 = vmatpush1.bf16.msra.mxu0 0
    %1672 = vmatprep.subr.bf16.mxu0 0
    %1673 = vmatpush1.bf16.msra.mxu0 0
    %1674 = vmatprep.subr.bf16.mxu0 0
    %1675 = vmatpush1.bf16.msra.mxu0 0
    %1676 = vmatprep.subr.bf16.mxu0 0
    %1677 = vmatpush1.bf16.msra.mxu0 0
    %1678 = vmatprep.subr.bf16.mxu0 0
    %1679 = vmatpush1.bf16.msra.mxu0 0
    %1680 = vmatprep.mubr.bf16.mxu0 0
    %1681 = vmatmul.mubr.bf16.gmra.mrb[0].mxu0 %v1646
    %v1682 = vpop.f32.mrb[0].mxu0
    %v1683 = vadd.f32 %v1631, %v1682
    %v1684 = vpop.f32.mrb[0].mxu0
    %v1685 = vpop.f32.mrb[0].mxu0
    %v1686 = vpop.f32.mrb[0].mxu0
    %1687 = vdwg.mxu0
    %v1692 = vunpack.c.l.b16 %v429
    %v1693 = vunpack.c.l.b16 %v430
    %v1694 = vunpack.c.l.b16 %v431
    %v1695 = vunpack.c.l.b16 %v432
    %v1696 = vpack.c.b16 %v1693, %v1692
    %v1697 = vpack.c.b16 %v1695, %v1694
    %1700 = vmatprep.subr.bf16.mxu0 0
    %1701 = vmatpush1.bf16.msra.mxu0 %v1696
    %1702 = vmatprep.subr.bf16.mxu0 0
    %1703 = vmatpush1.bf16.msra.mxu0 %v1697
    %1704 = vmatprep.subr.bf16.mxu0 0
    %1705 = vmatpush1.bf16.msra.mxu0 0
    %1706 = vmatprep.subr.bf16.mxu0 0
    %1707 = vmatpush1.bf16.msra.mxu0 0
    %1708 = vmatprep.subr.bf16.mxu0 0
    %1709 = vmatpush1.bf16.msra.mxu0 0
    %1710 = vmatprep.subr.bf16.mxu0 0
    %1711 = vmatpush1.bf16.msra.mxu0 0
    %1712 = vmatprep.subr.bf16.mxu0 0
    %1713 = vmatpush1.bf16.msra.mxu0 0
    %1714 = vmatprep.subr.bf16.mxu0 0
    %1715 = vmatpush1.bf16.msra.mxu0 0
    %1716 = vmatprep.subr.bf16.mxu0 0
    %1717 = vmatpush1.bf16.msra.mxu0 0
    %1718 = vmatprep.subr.bf16.mxu0 0
    %1719 = vmatpush1.bf16.msra.mxu0 0
    %1720 = vmatprep.subr.bf16.mxu0 0
    %1721 = vmatpush1.bf16.msra.mxu0 0
    %1722 = vmatprep.subr.bf16.mxu0 0
    %1723 = vmatpush1.bf16.msra.mxu0 0
    %1724 = vmatprep.subr.bf16.mxu0 0
    %1725 = vmatpush1.bf16.msra.mxu0 0
    %1726 = vmatprep.subr.bf16.mxu0 0
    %1727 = vmatpush1.bf16.msra.mxu0 0
    %1728 = vmatprep.subr.bf16.mxu0 0
    %1729 = vmatpush1.bf16.msra.mxu0 0
    %1730 = vmatprep.subr.bf16.mxu0 0
    %1731 = vmatpush1.bf16.msra.mxu0 0
    %1732 = vmatprep.mubr.bf16.mxu0 0
    %1733 = vmatmul.mubr.bf16.gmra.mrb[0].mxu0 %v747
    %v1734 = vpop.f32.mrb[0].mxu0
    %v1735 = vadd.f32 0.0, %v1734
    %v1736 = vpop.f32.mrb[0].mxu0
    %v1737 = vpop.f32.mrb[0].mxu0
    %v1738 = vpop.f32.mrb[0].mxu0
    %1739 = vdwg.mxu0
    %v1740 = vadd.f32 %v1683, %v1735
    %v1741 = vxor.u32 %v1740, 2147483648
    %v1742 = vmul.f32 %v1741, 1.442695
    %v1743 = vpow.pop %v1742
    %v1744 = vadd.f32 %v1743, 1.0
    %v1745 = vrcp.pop %v1744
    %v1746 = vmul.f32 1.0, %v1745
    %v1747 = vtanh.pop %v1740
    %v1748 = vmul.f32 %v1746, 0.0
    %1750 = vrot.lane.b32.xlu0 %v1747, 64
    %v1751 = vpop.permute.xlu0 %1750
    %v1753 = vmul.f32 %v1746, %v1751
    %1755 = vrot.lane.b32.xlu0 %v1753, 32
    %v1756 = vpop.permute.xlu0 %1755
    %v1758 = vadd.f32 %v1748, %v1756
    %v1759 = vtanh.pop %v1758
    %1761 = vrot.lane.b32.xlu0 %v1759, 64
    %v1762 = vpop.permute.xlu0 %1761
    %v1764 = vmul.f32 %v1746, %v1762
    %v1765 = vpack.c.bf16 %v1764, %v1764
    %1767 = vrot.lane.b32.xlu0 %v1765, 32
    %v1768 = vpop.permute.xlu0 %1767
    %v1770 = vsel %vm745, %v1768, 0
    %1772 = vmatprep.subr.bf16.mxu0 0
    %1773 = vmatpush1.bf16.msra.mxu0 %v1696
    %1774 = vmatprep.subr.bf16.mxu0 0
    %1775 = vmatpush1.bf16.msra.mxu0 %v1697
    %1776 = vmatprep.subr.bf16.mxu0 0
    %1777 = vmatpush1.bf16.msra.mxu0 0
    %1778 = vmatprep.subr.bf16.mxu0 0
    %1779 = vmatpush1.bf16.msra.mxu0 0
    %1780 = vmatprep.subr.bf16.mxu0 0
    %1781 = vmatpush1.bf16.msra.mxu0 0
    %1782 = vmatprep.subr.bf16.mxu0 0
    %1783 = vmatpush1.bf16.msra.mxu0 0
    %1784 = vmatprep.subr.bf16.mxu0 0
    %1785 = vmatpush1.bf16.msra.mxu0 0
    %1786 = vmatprep.subr.bf16.mxu0 0
    %1787 = vmatpush1.bf16.msra.mxu0 0
    %1788 = vmatprep.subr.bf16.mxu0 0
    %1789 = vmatpush1.bf16.msra.mxu0 0
    %1790 = vmatprep.subr.bf16.mxu0 0
    %1791 = vmatpush1.bf16.msra.mxu0 0
    %1792 = vmatprep.subr.bf16.mxu0 0
    %1793 = vmatpush1.bf16.msra.mxu0 0
    %1794 = vmatprep.subr.bf16.mxu0 0
    %1795 = vmatpush1.bf16.msra.mxu0 0
    %1796 = vmatprep.subr.bf16.mxu0 0
    %1797 = vmatpush1.bf16.msra.mxu0 0
    %1798 = vmatprep.subr.bf16.mxu0 0
    %1799 = vmatpush1.bf16.msra.mxu0 0
    %1800 = vmatprep.subr.bf16.mxu0 0
    %1801 = vmatpush1.bf16.msra.mxu0 0
    %1802 = vmatprep.subr.bf16.mxu0 0
    %1803 = vmatpush1.bf16.msra.mxu0 0
    %1804 = vmatprep.mubr.bf16.mxu0 0
    %1805 = vmatmul.mubr.bf16.gmra.mrb[0].mxu0 %v1770
    %v1806 = vpop.f32.mrb[0].mxu0
    %v1807 = vadd.f32 0.0, %v1806
    %v1808 = vpop.f32.mrb[0].mxu0
    %v1809 = vpop.f32.mrb[0].mxu0
    %v1810 = vpop.f32.mrb[0].mxu0
    %1811 = vdwg.mxu0
    %v1813 = vrot.slane %v1807, 6
    %v1815 = vadd.f32 %v1683, %v1813
    %v1816 = vxor.u32 %v1815, 2147483648
    %v1817 = vmul.f32 %v1816, 1.442695
    %v1818 = vpow.pop %v1817
    %v1819 = vadd.f32 %v1818, 1.0
    %v1820 = vrcp.pop %v1819
    %v1821 = vmul.f32 1.0, %v1820
    %v1822 = vtanh.pop %v1815
    %v1824 = vrot.slane %v1758, 6
    %v1826 = vmul.f32 %v1821, %v1824
    %1828 = vrot.lane.b32.xlu0 %v1822, 64
    %v1829 = vpop.permute.xlu0 %1828
    %v1831 = vmul.f32 %v1821, %v1829
    %1833 = vrot.lane.b32.xlu0 %v1831, 32
    %v1834 = vpop.permute.xlu0 %1833
    %v1836 = vadd.f32 %v1826, %v1834
    %v1837 = vtanh.pop %v1836
    %1839 = vrot.lane.b32.xlu0 %v1837, 64
    %v1840 = vpop.permute.xlu0 %1839
    %v1842 = vmul.f32 %v1821, %v1840
    %v1844 = vrot.slane %v1842, 2
    %1846 = vrot.lane.b32.xlu0 %v1624, 96
    %v1847 = vpop.permute.xlu0 %1846
    %v1849 = vsel %vm493, %v1844, %v1847
    %s1850 = scalar_lea.vmem %s3, 2
    %v1851 = vld [vmem:[%s1850] sm:$0x3]
    %s1852 = scalar_lea.vmem %s3, 6
    %v1853 = vld [vmem:[%s1852] sm:$0x3]
    %v1855 = vrot.slane %v1853, 6
    %v1857 = vsel %vm493, %v1851, %v1855
    %v1858 = vpack.c.bf16 %v1618, %v1618
    %v1859 = vpack.c.bf16 %v1849, %v1849
    %1861 = vrot.lane.b32.xlu0 %v1859, 32
    %v1862 = vpop.permute.xlu0 %1861
    %v1867 = vunpack.c.l.b16 %v440
    %v1868 = vunpack.c.l.b16 %v441
    %v1869 = vunpack.c.l.b16 %v442
    %v1870 = vunpack.c.l.b16 %v443
    %v1871 = vpack.c.b16 %v1868, %v1867
    %v1872 = vpack.c.b16 %v1870, %v1869
    %v1876 = vsel %vm745, %v1862, 0
    %1878 = vmatprep.subr.bf16.mxu0 0
    %1879 = vmatpush1.bf16.msra.mxu0 %v1871
    %1880 = vmatprep.subr.bf16.mxu0 0
    %1881 = vmatpush1.bf16.msra.mxu0 %v1872
    %1882 = vmatprep.subr.bf16.mxu0 0
    %1883 = vmatpush1.bf16.msra.mxu0 0
    %1884 = vmatprep.subr.bf16.mxu0 0
    %1885 = vmatpush1.bf16.msra.mxu0 0
    %1886 = vmatprep.subr.bf16.mxu0 0
    %1887 = vmatpush1.bf16.msra.mxu0 0
    %1888 = vmatprep.subr.bf16.mxu0 0
    %1889 = vmatpush1.bf16.msra.mxu0 0
    %1890 = vmatprep.subr.bf16.mxu0 0
    %1891 = vmatpush1.bf16.msra.mxu0 0
    %1892 = vmatprep.subr.bf16.mxu0 0
    %1893 = vmatpush1.bf16.msra.mxu0 0
    %1894 = vmatprep.subr.bf16.mxu0 0
    %1895 = vmatpush1.bf16.msra.mxu0 0
    %1896 = vmatprep.subr.bf16.mxu0 0
    %1897 = vmatpush1.bf16.msra.mxu0 0
    %1898 = vmatprep.subr.bf16.mxu0 0
    %1899 = vmatpush1.bf16.msra.mxu0 0
    %1900 = vmatprep.subr.bf16.mxu0 0
    %1901 = vmatpush1.bf16.msra.mxu0 0
    %1902 = vmatprep.subr.bf16.mxu0 0
    %1903 = vmatpush1.bf16.msra.mxu0 0
    %1904 = vmatprep.subr.bf16.mxu0 0
    %1905 = vmatpush1.bf16.msra.mxu0 0
    %1906 = vmatprep.subr.bf16.mxu0 0
    %1907 = vmatpush1.bf16.msra.mxu0 0
    %1908 = vmatprep.subr.bf16.mxu0 0
    %1909 = vmatpush1.bf16.msra.mxu0 0
    %1910 = vmatprep.mubr.bf16.mxu0 0
    %1911 = vmatmul.mubr.bf16.gmra.mrb[0].mxu0 %v1876
    %v1912 = vpop.f32.mrb[0].mxu0
    %v1913 = vadd.f32 0.0, %v1912
    %v1914 = vpop.f32.mrb[0].mxu0
    %v1915 = vpop.f32.mrb[0].mxu0
    %v1916 = vpop.f32.mrb[0].mxu0
    %1917 = vdwg.mxu0
    %v1922 = vunpack.c.l.b16 %v436
    %v1923 = vunpack.c.l.b16 %v437
    %v1924 = vunpack.c.l.b16 %v438
    %v1925 = vunpack.c.l.b16 %v439
    %v1926 = vpack.c.b16 %v1923, %v1922
    %v1927 = vpack.c.b16 %v1925, %v1924
    %v1931 = vsel %vm745, %v1858, 0
    %1933 = vmatprep.subr.bf16.mxu0 0
    %1934 = vmatpush1.bf16.msra.mxu0 %v1926
    %1935 = vmatprep.subr.bf16.mxu0 0
    %1936 = vmatpush1.bf16.msra.mxu0 %v1927
    %1937 = vmatprep.subr.bf16.mxu0 0
    %1938 = vmatpush1.bf16.msra.mxu0 0
    %1939 = vmatprep.subr.bf16.mxu0 0
    %1940 = vmatpush1.bf16.msra.mxu0 0
    %1941 = vmatprep.subr.bf16.mxu0 0
    %1942 = vmatpush1.bf16.msra.mxu0 0
    %1943 = vmatprep.subr.bf16.mxu0 0
    %1944 = vmatpush1.bf16.msra.mxu0 0
    %1945 = vmatprep.subr.bf16.mxu0 0
    %1946 = vmatpush1.bf16.msra.mxu0 0
    %1947 = vmatprep.subr.bf16.mxu0 0
    %1948 = vmatpush1.bf16.msra.mxu0 0
    %1949 = vmatprep.subr.bf16.mxu0 0
    %1950 = vmatpush1.bf16.msra.mxu0 0
    %1951 = vmatprep.subr.bf16.mxu0 0
    %1952 = vmatpush1.bf16.msra.mxu0 0
    %1953 = vmatprep.subr.bf16.mxu0 0
    %1954 = vmatpush1.bf16.msra.mxu0 0
    %1955 = vmatprep.subr.bf16.mxu0 0
    %1956 = vmatpush1.bf16.msra.mxu0 0
    %1957 = vmatprep.subr.bf16.mxu0 0
    %1958 = vmatpush1.bf16.msra.mxu0 0
    %1959 = vmatprep.subr.bf16.mxu0 0
    %1960 = vmatpush1.bf16.msra.mxu0 0
    %1961 = vmatprep.subr.bf16.mxu0 0
    %1962 = vmatpush1.bf16.msra.mxu0 0
    %1963 = vmatprep.subr.bf16.mxu0 0
    %1964 = vmatpush1.bf16.msra.mxu0 0
    %1965 = vmatprep.mubr.bf16.mxu0 0
    %1966 = vmatmul.mubr.bf16.gmra.mrb[0].mxu0 %v1931
    %v1967 = vpop.f32.mrb[0].mxu0
    %v1968 = vadd.f32 %v1913, %v1967
    %v1969 = vpop.f32.mrb[0].mxu0
    %v1970 = vpop.f32.mrb[0].mxu0
    %v1971 = vpop.f32.mrb[0].mxu0
    %1972 = vdwg.mxu0
    %v1973 = vpack.c.bf16 %v1857, %v1857
    %v1977 = vunpack.c.l.b16 %v444
    %v1978 = vunpack.c.l.b16 %v445
    %v1979 = vunpack.c.l.b16 %v446
    %v1980 = vpack.c.b16 %v1978, %v1977
    %v1981 = vpack.c.b16 %v1979, %v1979
    %vm1983 = vcmask 162816
    %v1985 = vsel %vm1983, %v1973, 0
    %v1988 = vsel %vm493, %v1981, 0
    %1990 = vmatprep.subr.bf16.mxu0 0
    %1991 = vmatpush1.bf16.msra.mxu0 %v1980
    %1992 = vmatprep.subr.bf16.mxu0 0
    %1993 = vmatpush1.bf16.msra.mxu0 %v1988
    %1994 = vmatprep.subr.bf16.mxu0 0
    %1995 = vmatpush1.bf16.msra.mxu0 0
    %1996 = vmatprep.subr.bf16.mxu0 0
    %1997 = vmatpush1.bf16.msra.mxu0 0
    %1998 = vmatprep.subr.bf16.mxu0 0
    %1999 = vmatpush1.bf16.msra.mxu0 0
    %2000 = vmatprep.subr.bf16.mxu0 0
    %2001 = vmatpush1.bf16.msra.mxu0 0
    %2002 = vmatprep.subr.bf16.mxu0 0
    %2003 = vmatpush1.bf16.msra.mxu0 0
    %2004 = vmatprep.subr.bf16.mxu0 0
    %2005 = vmatpush1.bf16.msra.mxu0 0
    %2006 = vmatprep.subr.bf16.mxu0 0
    %2007 = vmatpush1.bf16.msra.mxu0 0
    %2008 = vmatprep.subr.bf16.mxu0 0
    %2009 = vmatpush1.bf16.msra.mxu0 0
    %2010 = vmatprep.subr.bf16.mxu0 0
    %2011 = vmatpush1.bf16.msra.mxu0 0
    %2012 = vmatprep.subr.bf16.mxu0 0
    %2013 = vmatpush1.bf16.msra.mxu0 0
    %2014 = vmatprep.subr.bf16.mxu0 0
    %2015 = vmatpush1.bf16.msra.mxu0 0
    %2016 = vmatprep.subr.bf16.mxu0 0
    %2017 = vmatpush1.bf16.msra.mxu0 0
    %2018 = vmatprep.subr.bf16.mxu0 0
    %2019 = vmatpush1.bf16.msra.mxu0 0
    %2020 = vmatprep.subr.bf16.mxu0 0
    %2021 = vmatpush1.bf16.msra.mxu0 0
    %2022 = vmatprep.mubr.bf16.mxu0 0
    %2023 = vmatmul.mubr.bf16.gmra.mrb[0].mxu0 %v1985
    %v2024 = vpop.f32.mrb[0].mxu0
    %v2025 = vadd.f32 0.0, %v2024
    %v2026 = vpop.f32.mrb[0].mxu0
    %v2027 = vpop.f32.mrb[0].mxu0
    %v2028 = vpop.f32.mrb[0].mxu0
    %2029 = vdwg.mxu0
    %v2030 = vadd.f32 %v1968, %v2025
    %v2032 = vlaneseq
    %v2033 = vshrl.u32 %v2032, 7
    %v2034 = vsub.s32 0, %v2033
    %v2035 = vrot.slane %v447, %v2034
    %v2037 = vadd.f32 %v2030, %v2035
    %vm2038 = vcmp.gt.f32.partialorder %v2037, 0.0
    %v2039 = vmin.f32 %v2037, 0.0
    %v2040 = vmul.f32 %v2039, 1.442695
    %v2041 = vpow.pop %v2040
    %v2042 = vsub.f32 %v2041, 1.0
    %v2043 = vsel %vm2038, %v2037, %v2042
    %v2044 = vpack.c.bf16 %v2043, %v2043
    %v2046 = vlaneseq
    %v2047 = vshrl.u32 %v2046, 7
    %v2048 = vsub.s32 0, %v2047
    %v2049 = vrot.slane %v452, %v2048
    %v2055 = vunpack.c.l.b16 %v448
    %v2056 = vunpack.c.l.b16 %v449
    %v2057 = vunpack.c.l.b16 %v450
    %v2058 = vunpack.c.l.b16 %v451
    %v2059 = vpack.c.b16 %v2056, %v2055
    %v2060 = vpack.c.b16 %v2058, %v2057
    %v2064 = vsel %vm745, %v2044, 0
    %2066 = vmatprep.subr.bf16.mxu0 0
    %2067 = vmatpush1.bf16.msra.mxu0 %v2059
    %2068 = vmatprep.subr.bf16.mxu0 0
    %2069 = vmatpush1.bf16.msra.mxu0 %v2060
    %2070 = vmatprep.subr.bf16.mxu0 0
    %2071 = vmatpush1.bf16.msra.mxu0 0
    %2072 = vmatprep.subr.bf16.mxu0 0
    %2073 = vmatpush1.bf16.msra.mxu0 0
    %2074 = vmatprep.subr.bf16.mxu0 0
    %2075 = vmatpush1.bf16.msra.mxu0 0
    %2076 = vmatprep.subr.bf16.mxu0 0
    %2077 = vmatpush1.bf16.msra.mxu0 0
    %2078 = vmatprep.subr.bf16.mxu0 0
    %2079 = vmatpush1.bf16.msra.mxu0 0
    %2080 = vmatprep.subr.bf16.mxu0 0
    %2081 = vmatpush1.bf16.msra.mxu0 0
    %2082 = vmatprep.subr.bf16.mxu0 0
    %2083 = vmatpush1.bf16.msra.mxu0 0
    %2084 = vmatprep.subr.bf16.mxu0 0
    %2085 = vmatpush1.bf16.msra.mxu0 0
    %2086 = vmatprep.subr.bf16.mxu0 0
    %2087 = vmatpush1.bf16.msra.mxu0 0
    %2088 = vmatprep.subr.bf16.mxu0 0
    %2089 = vmatpush1.bf16.msra.mxu0 0
    %2090 = vmatprep.subr.bf16.mxu0 0
    %2091 = vmatpush1.bf16.msra.mxu0 0
    %2092 = vmatprep.subr.bf16.mxu0 0
    %2093 = vmatpush1.bf16.msra.mxu0 0
    %2094 = vmatprep.subr.bf16.mxu0 0
    %2095 = vmatpush1.bf16.msra.mxu0 0
    %2096 = vmatprep.subr.bf16.mxu0 0
    %2097 = vmatpush1.bf16.msra.mxu0 0
    %2098 = vmatprep.mubr.bf16.mxu0 0
    %2099 = vmatmul.mubr.bf16.gmra.mrb[0].mxu0 %v2064
    %v2100 = vpop.f32.mrb[0].mxu0
    %v2101 = vadd.f32 %v2049, %v2100
    %v2102 = vpop.f32.mrb[0].mxu0
    %v2103 = vpop.f32.mrb[0].mxu0
    %v2104 = vpop.f32.mrb[0].mxu0
    %2105 = vdwg.mxu0
    %vm2106 = vcmp.gt.f32.partialorder %v2101, 0.0
    %v2107 = vmin.f32 %v2101, 0.0
    %v2108 = vmul.f32 %v2107, 1.442695
    %v2109 = vpow.pop %v2108
    %v2110 = vsub.f32 %v2109, 1.0
    %v2111 = vsel %vm2106, %v2101, %v2110
    %v2112 = vpack.c.bf16 %v2111, %v2111
    %v2114 = vlaneseq
    %v2115 = vshrl.u32 %v2114, 7
    %v2116 = vsub.s32 0, %v2115
    %v2117 = vrot.slane %v424, %v2116
    %v2120 = vrot.slane %v2112, 1
    %v2125 = vunpack.c.l.b16 %v416
    %v2126 = vunpack.c.l.b16 %v417
    %v2127 = vunpack.c.l.b16 %v418
    %v2128 = vunpack.c.l.b16 %v419
    %v2129 = vpack.c.b16 %v2126, %v2125
    %v2130 = vpack.c.b16 %v2128, %v2127
    %v2134 = vsel %vm745, %v2120, 0
    %2136 = vmatprep.subr.bf16.mxu0 0
    %2137 = vmatpush1.bf16.msra.mxu0 %v2129
    %2138 = vmatprep.subr.bf16.mxu0 0
    %2139 = vmatpush1.bf16.msra.mxu0 %v2130
    %2140 = vmatprep.subr.bf16.mxu0 0
    %2141 = vmatpush1.bf16.msra.mxu0 0
    %2142 = vmatprep.subr.bf16.mxu0 0
    %2143 = vmatpush1.bf16.msra.mxu0 0
    %2144 = vmatprep.subr.bf16.mxu0 0
    %2145 = vmatpush1.bf16.msra.mxu0 0
    %2146 = vmatprep.subr.bf16.mxu0 0
    %2147 = vmatpush1.bf16.msra.mxu0 0
    %2148 = vmatprep.subr.bf16.mxu0 0
    %2149 = vmatpush1.bf16.msra.mxu0 0
    %2150 = vmatprep.subr.bf16.mxu0 0
    %2151 = vmatpush1.bf16.msra.mxu0 0
    %2152 = vmatprep.subr.bf16.mxu0 0
    %2153 = vmatpush1.bf16.msra.mxu0 0
    %2154 = vmatprep.subr.bf16.mxu0 0
    %2155 = vmatpush1.bf16.msra.mxu0 0
    %2156 = vmatprep.subr.bf16.mxu0 0
    %2157 = vmatpush1.bf16.msra.mxu0 0
    %2158 = vmatprep.subr.bf16.mxu0 0
    %2159 = vmatpush1.bf16.msra.mxu0 0
    %2160 = vmatprep.subr.bf16.mxu0 0
    %2161 = vmatpush1.bf16.msra.mxu0 0
    %2162 = vmatprep.subr.bf16.mxu0 0
    %2163 = vmatpush1.bf16.msra.mxu0 0
    %2164 = vmatprep.subr.bf16.mxu0 0
    %2165 = vmatpush1.bf16.msra.mxu0 0
    %2166 = vmatprep.subr.bf16.mxu0 0
    %2167 = vmatpush1.bf16.msra.mxu0 0
    %2168 = vmatprep.mubr.bf16.mxu0 0
    %2169 = vmatmul.mubr.bf16.gmra.mrb[0].mxu0 %v2134
    %v2170 = vpop.f32.mrb[0].mxu0
    %v2171 = vadd.f32 %v2117, %v2170
    %v2172 = vpop.f32.mrb[0].mxu0
    %v2173 = vpop.f32.mrb[0].mxu0
    %v2174 = vpop.f32.mrb[0].mxu0
    %2175 = vdwg.mxu0
    %v2180 = vunpack.c.l.b16 %v420
    %v2181 = vunpack.c.l.b16 %v421
    %v2182 = vunpack.c.l.b16 %v422
    %v2183 = vunpack.c.l.b16 %v423
    %v2184 = vpack.c.b16 %v2181, %v2180
    %v2185 = vpack.c.b16 %v2183, %v2182
    %2188 = vmatprep.subr.bf16.mxu0 0
    %2189 = vmatpush1.bf16.msra.mxu0 %v2184
    %2190 = vmatprep.subr.bf16.mxu0 0
    %2191 = vmatpush1.bf16.msra.mxu0 %v2185
    %2192 = vmatprep.subr.bf16.mxu0 0
    %2193 = vmatpush1.bf16.msra.mxu0 0
    %2194 = vmatprep.subr.bf16.mxu0 0
    %2195 = vmatpush1.bf16.msra.mxu0 0
    %2196 = vmatprep.subr.bf16.mxu0 0
    %2197 = vmatpush1.bf16.msra.mxu0 0
    %2198 = vmatprep.subr.bf16.mxu0 0
    %2199 = vmatpush1.bf16.msra.mxu0 0
    %2200 = vmatprep.subr.bf16.mxu0 0
    %2201 = vmatpush1.bf16.msra.mxu0 0
    %2202 = vmatprep.subr.bf16.mxu0 0
    %2203 = vmatpush1.bf16.msra.mxu0 0
    %2204 = vmatprep.subr.bf16.mxu0 0
    %2205 = vmatpush1.bf16.msra.mxu0 0
    %2206 = vmatprep.subr.bf16.mxu0 0
    %2207 = vmatpush1.bf16.msra.mxu0 0
    %2208 = vmatprep.subr.bf16.mxu0 0
    %2209 = vmatpush1.bf16.msra.mxu0 0
    %2210 = vmatprep.subr.bf16.mxu0 0
    %2211 = vmatpush1.bf16.msra.mxu0 0
    %2212 = vmatprep.subr.bf16.mxu0 0
    %2213 = vmatpush1.bf16.msra.mxu0 0
    %2214 = vmatprep.subr.bf16.mxu0 0
    %2215 = vmatpush1.bf16.msra.mxu0 0
    %2216 = vmatprep.subr.bf16.mxu0 0
    %2217 = vmatpush1.bf16.msra.mxu0 0
    %2218 = vmatprep.subr.bf16.mxu0 0
    %2219 = vmatpush1.bf16.msra.mxu0 0
    %2220 = vmatprep.mubr.bf16.mxu0 0
    %2221 = vmatmul.mubr.bf16.gmra.mrb[0].mxu0 %v747
    %v2222 = vpop.f32.mrb[0].mxu0
    %v2223 = vadd.f32 0.0, %v2222
    %v2224 = vpop.f32.mrb[0].mxu0
    %v2225 = vpop.f32.mrb[0].mxu0
    %v2226 = vpop.f32.mrb[0].mxu0
    %2227 = vdwg.mxu0
    %v2228 = vadd.f32 %v2171, %v2223
    %v2229 = vxor.u32 %v2228, 2147483648
    %v2230 = vmul.f32 %v2229, 1.442695
    %v2231 = vpow.pop %v2230
    %v2232 = vadd.f32 %v2231, 1.0
    %v2233 = vrcp.pop %v2232
    %v2234 = vmul.f32 1.0, %v2233
    %v2235 = vtanh.pop %v2228
    %v2236 = vmul.f32 %v2234, 0.0
    %2238 = vrot.lane.b32.xlu0 %v2235, 64
    %v2239 = vpop.permute.xlu0 %2238
    %v2241 = vmul.f32 %v2234, %v2239
    %2243 = vrot.lane.b32.xlu0 %v2241, 32
    %v2244 = vpop.permute.xlu0 %2243
    %v2246 = vadd.f32 %v2236, %v2244
    %v2247 = vtanh.pop %v2246
    %2249 = vrot.lane.b32.xlu0 %v2247, 64
    %v2250 = vpop.permute.xlu0 %2249
    %v2252 = vmul.f32 %v2234, %v2250
    %v2254 = vrot.slane %v1626, 2
    %v2256 = vsel %vm745, %v2254, 0
    %2258 = vmatprep.subr.bf16.mxu0 0
    %2259 = vmatpush1.bf16.msra.mxu0 %v1641
    %2260 = vmatprep.subr.bf16.mxu0 0
    %2261 = vmatpush1.bf16.msra.mxu0 %v1642
    %2262 = vmatprep.subr.bf16.mxu0 0
    %2263 = vmatpush1.bf16.msra.mxu0 0
    %2264 = vmatprep.subr.bf16.mxu0 0
    %2265 = vmatpush1.bf16.msra.mxu0 0
    %2266 = vmatprep.subr.bf16.mxu0 0
    %2267 = vmatpush1.bf16.msra.mxu0 0
    %2268 = vmatprep.subr.bf16.mxu0 0
    %2269 = vmatpush1.bf16.msra.mxu0 0
    %2270 = vmatprep.subr.bf16.mxu0 0
    %2271 = vmatpush1.bf16.msra.mxu0 0
    %2272 = vmatprep.subr.bf16.mxu0 0
    %2273 = vmatpush1.bf16.msra.mxu0 0
    %2274 = vmatprep.subr.bf16.mxu0 0
    %2275 = vmatpush1.bf16.msra.mxu0 0
    %2276 = vmatprep.subr.bf16.mxu0 0
    %2277 = vmatpush1.bf16.msra.mxu0 0
    %2278 = vmatprep.subr.bf16.mxu0 0
    %2279 = vmatpush1.bf16.msra.mxu0 0
    %2280 = vmatprep.subr.bf16.mxu0 0
    %2281 = vmatpush1.bf16.msra.mxu0 0
    %2282 = vmatprep.subr.bf16.mxu0 0
    %2283 = vmatpush1.bf16.msra.mxu0 0
    %2284 = vmatprep.subr.bf16.mxu0 0
    %2285 = vmatpush1.bf16.msra.mxu0 0
    %2286 = vmatprep.subr.bf16.mxu0 0
    %2287 = vmatpush1.bf16.msra.mxu0 0
    %2288 = vmatprep.subr.bf16.mxu0 0
    %2289 = vmatpush1.bf16.msra.mxu0 0
    %2290 = vmatprep.mubr.bf16.mxu0 0
    %2291 = vmatmul.mubr.bf16.gmra.mrb[0].mxu0 %v2256
    %v2292 = vpop.f32.mrb[0].mxu0
    %v2293 = vadd.f32 %v1631, %v2292
    %v2294 = vpop.f32.mrb[0].mxu0
    %v2295 = vpop.f32.mrb[0].mxu0
    %v2296 = vpop.f32.mrb[0].mxu0
    %2297 = vdwg.mxu0
    %v2298 = vadd.f32 %v2293, %v1735
    %v2299 = vxor.u32 %v2298, 2147483648
    %v2300 = vmul.f32 %v2299, 1.442695
    %v2301 = vpow.pop %v2300
    %v2302 = vadd.f32 %v2301, 1.0
    %v2303 = vrcp.pop %v2302
    %v2304 = vmul.f32 1.0, %v2303
    %v2305 = vtanh.pop %v2298
    %v2306 = vmul.f32 %v2304, 0.0
    %2308 = vrot.lane.b32.xlu0 %v2305, 64
    %v2309 = vpop.permute.xlu0 %2308
    %v2311 = vmul.f32 %v2304, %v2309
    %2313 = vrot.lane.b32.xlu0 %v2311, 32
    %v2314 = vpop.permute.xlu0 %2313
    %v2316 = vadd.f32 %v2306, %v2314
    %v2317 = vtanh.pop %v2316
    %2319 = vrot.lane.b32.xlu0 %v2317, 64
    %v2320 = vpop.permute.xlu0 %2319
    %v2322 = vmul.f32 %v2304, %v2320
    %s2323 = scalar_lea.vmem %s3, 4
    %v2324 = vld [vmem:[%s2323] sm:$0x3]
    %v2325 = vpack.c.bf16 %v2252, %v2252
    %v2326 = vpack.c.bf16 %v2322, %v2322
    %2328 = vrot.lane.b32.xlu0 %v2326, 32
    %v2329 = vpop.permute.xlu0 %2328
    %v2331 = vsel %vm745, %v2329, 0
    %2333 = vmatprep.subr.bf16.mxu0 0
    %2334 = vmatpush1.bf16.msra.mxu0 %v1871
    %2335 = vmatprep.subr.bf16.mxu0 0
    %2336 = vmatpush1.bf16.msra.mxu0 %v1872
    %2337 = vmatprep.subr.bf16.mxu0 0
    %2338 = vmatpush1.bf16.msra.mxu0 0
    %2339 = vmatprep.subr.bf16.mxu0 0
    %2340 = vmatpush1.bf16.msra.mxu0 0
    %2341 = vmatprep.subr.bf16.mxu0 0
    %2342 = vmatpush1.bf16.msra.mxu0 0
    %2343 = vmatprep.subr.bf16.mxu0 0
    %2344 = vmatpush1.bf16.msra.mxu0 0
    %2345 = vmatprep.subr.bf16.mxu0 0
    %2346 = vmatpush1.bf16.msra.mxu0 0
    %2347 = vmatprep.subr.bf16.mxu0 0
    %2348 = vmatpush1.bf16.msra.mxu0 0
    %2349 = vmatprep.subr.bf16.mxu0 0
    %2350 = vmatpush1.bf16.msra.mxu0 0
    %2351 = vmatprep.subr.bf16.mxu0 0
    %2352 = vmatpush1.bf16.msra.mxu0 0
    %2353 = vmatprep.subr.bf16.mxu0 0
    %2354 = vmatpush1.bf16.msra.mxu0 0
    %2355 = vmatprep.subr.bf16.mxu0 0
    %2356 = vmatpush1.bf16.msra.mxu0 0
    %2357 = vmatprep.subr.bf16.mxu0 0
    %2358 = vmatpush1.bf16.msra.mxu0 0
    %2359 = vmatprep.subr.bf16.mxu0 0
    %2360 = vmatpush1.bf16.msra.mxu0 0
    %2361 = vmatprep.subr.bf16.mxu0 0
    %2362 = vmatpush1.bf16.msra.mxu0 0
    %2363 = vmatprep.subr.bf16.mxu0 0
    %2364 = vmatpush1.bf16.msra.mxu0 0
    %2365 = vmatprep.mubr.bf16.mxu0 0
    %2366 = vmatmul.mubr.bf16.gmra.mrb[0].mxu0 %v2331
    %v2367 = vpop.f32.mrb[0].mxu0
    %v2368 = vadd.f32 0.0, %v2367
    %v2369 = vpop.f32.mrb[0].mxu0
    %v2370 = vpop.f32.mrb[0].mxu0
    %v2371 = vpop.f32.mrb[0].mxu0
    %2372 = vdwg.mxu0
    %2374 = vrot.lane.b32.xlu0 %v2325, 32
    %v2375 = vpop.permute.xlu0 %2374
    %v2377 = vsel %vm745, %v2375, 0
    %2379 = vmatprep.subr.bf16.mxu0 0
    %2380 = vmatpush1.bf16.msra.mxu0 %v1926
    %2381 = vmatprep.subr.bf16.mxu0 0
    %2382 = vmatpush1.bf16.msra.mxu0 %v1927
    %2383 = vmatprep.subr.bf16.mxu0 0
    %2384 = vmatpush1.bf16.msra.mxu0 0
    %2385 = vmatprep.subr.bf16.mxu0 0
    %2386 = vmatpush1.bf16.msra.mxu0 0
    %2387 = vmatprep.subr.bf16.mxu0 0
    %2388 = vmatpush1.bf16.msra.mxu0 0
    %2389 = vmatprep.subr.bf16.mxu0 0
    %2390 = vmatpush1.bf16.msra.mxu0 0
    %2391 = vmatprep.subr.bf16.mxu0 0
    %2392 = vmatpush1.bf16.msra.mxu0 0
    %2393 = vmatprep.subr.bf16.mxu0 0
    %2394 = vmatpush1.bf16.msra.mxu0 0
    %2395 = vmatprep.subr.bf16.mxu0 0
    %2396 = vmatpush1.bf16.msra.mxu0 0
    %2397 = vmatprep.subr.bf16.mxu0 0
    %2398 = vmatpush1.bf16.msra.mxu0 0
    %2399 = vmatprep.subr.bf16.mxu0 0
    %2400 = vmatpush1.bf16.msra.mxu0 0
    %2401 = vmatprep.subr.bf16.mxu0 0
    %2402 = vmatpush1.bf16.msra.mxu0 0
    %2403 = vmatprep.subr.bf16.mxu0 0
    %2404 = vmatpush1.bf16.msra.mxu0 0
    %2405 = vmatprep.subr.bf16.mxu0 0
    %2406 = vmatpush1.bf16.msra.mxu0 0
    %2407 = vmatprep.subr.bf16.mxu0 0
    %2408 = vmatpush1.bf16.msra.mxu0 0
    %2409 = vmatprep.subr.bf16.mxu0 0
    %2410 = vmatpush1.bf16.msra.mxu0 0
    %2411 = vmatprep.mubr.bf16.mxu0 0
    %2412 = vmatmul.mubr.bf16.gmra.mrb[0].mxu0 %v2377
    %v2413 = vpop.f32.mrb[0].mxu0
    %v2414 = vadd.f32 %v2368, %v2413
    %v2415 = vpop.f32.mrb[0].mxu0
    %v2416 = vpop.f32.mrb[0].mxu0
    %v2417 = vpop.f32.mrb[0].mxu0
    %2418 = vdwg.mxu0
    %v2419 = vpack.c.bf16 %v2324, %v2324
    %v2421 = vsel %vm1983, %v2419, 0
    %2423 = vmatprep.subr.bf16.mxu0 0
    %2424 = vmatpush1.bf16.msra.mxu0 %v1980
    %2425 = vmatprep.subr.bf16.mxu0 0
    %2426 = vmatpush1.bf16.msra.mxu0 %v1988
    %2427 = vmatprep.subr.bf16.mxu0 0
    %2428 = vmatpush1.bf16.msra.mxu0 0
    %2429 = vmatprep.subr.bf16.mxu0 0
    %2430 = vmatpush1.bf16.msra.mxu0 0
    %2431 = vmatprep.subr.bf16.mxu0 0
    %2432 = vmatpush1.bf16.msra.mxu0 0
    %2433 = vmatprep.subr.bf16.mxu0 0
    %2434 = vmatpush1.bf16.msra.mxu0 0
    %2435 = vmatprep.subr.bf16.mxu0 0
    %2436 = vmatpush1.bf16.msra.mxu0 0
    %2437 = vmatprep.subr.bf16.mxu0 0
    %2438 = vmatpush1.bf16.msra.mxu0 0
    %2439 = vmatprep.subr.bf16.mxu0 0
    %2440 = vmatpush1.bf16.msra.mxu0 0
    %2441 = vmatprep.subr.bf16.mxu0 0
    %2442 = vmatpush1.bf16.msra.mxu0 0
    %2443 = vmatprep.subr.bf16.mxu0 0
    %2444 = vmatpush1.bf16.msra.mxu0 0
    %2445 = vmatprep.subr.bf16.mxu0 0
    %2446 = vmatpush1.bf16.msra.mxu0 0
    %2447 = vmatprep.subr.bf16.mxu0 0
    %2448 = vmatpush1.bf16.msra.mxu0 0
    %2449 = vmatprep.subr.bf16.mxu0 0
    %2450 = vmatpush1.bf16.msra.mxu0 0
    %2451 = vmatprep.subr.bf16.mxu0 0
    %2452 = vmatpush1.bf16.msra.mxu0 0
    %2453 = vmatprep.subr.bf16.mxu0 0
    %2454 = vmatpush1.bf16.msra.mxu0 0
    %2455 = vmatprep.mubr.bf16.mxu0 0
    %2456 = vmatmul.mubr.bf16.gmra.mrb[0].mxu0 %v2421
    %v2457 = vpop.f32.mrb[0].mxu0
    %v2458 = vadd.f32 0.0, %v2457
    %v2459 = vpop.f32.mrb[0].mxu0
    %v2460 = vpop.f32.mrb[0].mxu0
    %v2461 = vpop.f32.mrb[0].mxu0
    %2462 = vdwg.mxu0
    %v2463 = vadd.f32 %v2414, %v2458
    %v2464 = vadd.f32 %v2463, %v2035
    %vm2465 = vcmp.gt.f32.partialorder %v2464, 0.0
    %v2466 = vmin.f32 %v2464, 0.0
    %v2467 = vmul.f32 %v2466, 1.442695
    %v2468 = vpow.pop %v2467
    %v2469 = vsub.f32 %v2468, 1.0
    %v2470 = vsel %vm2465, %v2464, %v2469
    %v2471 = vpack.c.bf16 %v2470, %v2470
    %v2473 = vsel %vm745, %v2471, 0
    %2475 = vmatprep.subr.bf16.mxu0 0
    %2476 = vmatpush1.bf16.msra.mxu0 %v2059
    %2477 = vmatprep.subr.bf16.mxu0 0
    %2478 = vmatpush1.bf16.msra.mxu0 %v2060
    %2479 = vmatprep.subr.bf16.mxu0 0
    %2480 = vmatpush1.bf16.msra.mxu0 0
    %2481 = vmatprep.subr.bf16.mxu0 0
    %2482 = vmatpush1.bf16.msra.mxu0 0
    %2483 = vmatprep.subr.bf16.mxu0 0
    %2484 = vmatpush1.bf16.msra.mxu0 0
    %2485 = vmatprep.subr.bf16.mxu0 0
    %2486 = vmatpush1.bf16.msra.mxu0 0
    %2487 = vmatprep.subr.bf16.mxu0 0
    %2488 = vmatpush1.bf16.msra.mxu0 0
    %2489 = vmatprep.subr.bf16.mxu0 0
    %2490 = vmatpush1.bf16.msra.mxu0 0
    %2491 = vmatprep.subr.bf16.mxu0 0
    %2492 = vmatpush1.bf16.msra.mxu0 0
    %2493 = vmatprep.subr.bf16.mxu0 0
    %2494 = vmatpush1.bf16.msra.mxu0 0
    %2495 = vmatprep.subr.bf16.mxu0 0
    %2496 = vmatpush1.bf16.msra.mxu0 0
    %2497 = vmatprep.subr.bf16.mxu0 0
    %2498 = vmatpush1.bf16.msra.mxu0 0
    %2499 = vmatprep.subr.bf16.mxu0 0
    %2500 = vmatpush1.bf16.msra.mxu0 0
    %2501 = vmatprep.subr.bf16.mxu0 0
    %2502 = vmatpush1.bf16.msra.mxu0 0
    %2503 = vmatprep.subr.bf16.mxu0 0
    %2504 = vmatpush1.bf16.msra.mxu0 0
    %2505 = vmatprep.subr.bf16.mxu0 0
    %2506 = vmatpush1.bf16.msra.mxu0 0
    %2507 = vmatprep.mubr.bf16.mxu0 0
    %2508 = vmatmul.mubr.bf16.gmra.mrb[0].mxu0 %v2473
    %v2509 = vpop.f32.mrb[0].mxu0
    %v2510 = vadd.f32 %v2049, %v2509
    %v2511 = vpop.f32.mrb[0].mxu0
    %v2512 = vpop.f32.mrb[0].mxu0
    %v2513 = vpop.f32.mrb[0].mxu0
    %2514 = vdwg.mxu0
    %vm2515 = vcmp.gt.f32.partialorder %v2510, 0.0
    %v2516 = vmin.f32 %v2510, 0.0
    %v2517 = vmul.f32 %v2516, 1.442695
    %v2518 = vpow.pop %v2517
    %v2519 = vsub.f32 %v2518, 1.0
    %v2520 = vsel %vm2515, %v2510, %v2519
    %v2522 = vrot.slane %v2520, 6
    %v2524 = vsel %vm493, %v2111, %v2522
    %v2525 = vpack.c.bf16 %v2524, %v2524
    %v2527 = vsel %vm745, %v2525, 0
    %2529 = vmatprep.subr.bf16.mxu0 0
    %2530 = vmatpush1.bf16.msra.mxu0 %v2129
    %2531 = vmatprep.subr.bf16.mxu0 0
    %2532 = vmatpush1.bf16.msra.mxu0 %v2130
    %2533 = vmatprep.subr.bf16.mxu0 0
    %2534 = vmatpush1.bf16.msra.mxu0 0
    %2535 = vmatprep.subr.bf16.mxu0 0
    %2536 = vmatpush1.bf16.msra.mxu0 0
    %2537 = vmatprep.subr.bf16.mxu0 0
    %2538 = vmatpush1.bf16.msra.mxu0 0
    %2539 = vmatprep.subr.bf16.mxu0 0
    %2540 = vmatpush1.bf16.msra.mxu0 0
    %2541 = vmatprep.subr.bf16.mxu0 0
    %2542 = vmatpush1.bf16.msra.mxu0 0
    %2543 = vmatprep.subr.bf16.mxu0 0
    %2544 = vmatpush1.bf16.msra.mxu0 0
    %2545 = vmatprep.subr.bf16.mxu0 0
    %2546 = vmatpush1.bf16.msra.mxu0 0
    %2547 = vmatprep.subr.bf16.mxu0 0
    %2548 = vmatpush1.bf16.msra.mxu0 0
    %2549 = vmatprep.subr.bf16.mxu0 0
    %2550 = vmatpush1.bf16.msra.mxu0 0
    %2551 = vmatprep.subr.bf16.mxu0 0
    %2552 = vmatpush1.bf16.msra.mxu0 0
    %2553 = vmatprep.subr.bf16.mxu0 0
    %2554 = vmatpush1.bf16.msra.mxu0 0
    %2555 = vmatprep.subr.bf16.mxu0 0
    %2556 = vmatpush1.bf16.msra.mxu0 0
    %2557 = vmatprep.subr.bf16.mxu0 0
    %2558 = vmatpush1.bf16.msra.mxu0 0
    %2559 = vmatprep.subr.bf16.mxu0 0
    %2560 = vmatpush1.bf16.msra.mxu0 0
    %2561 = vmatprep.mubr.bf16.mxu0 0
    %2562 = vmatmul.mubr.bf16.gmra.mrb[0].mxu0 %v2527
    %v2563 = vpop.f32.mrb[0].mxu0
    %v2564 = vadd.f32 %v2117, %v2563
    %v2565 = vpop.f32.mrb[0].mxu0
    %v2566 = vpop.f32.mrb[0].mxu0
    %v2567 = vpop.f32.mrb[0].mxu0
    %2568 = vdwg.mxu0
    %v2569 = vadd.f32 %v2564, %v2223
    %v2570 = vxor.u32 %v2569, 2147483648
    %v2571 = vmul.f32 %v2570, 1.442695
    %v2572 = vpow.pop %v2571
    %v2573 = vadd.f32 %v2572, 1.0
    %v2574 = vrcp.pop %v2573
    %v2575 = vmul.f32 1.0, %v2574
    %v2576 = vtanh.pop %v2569
    %v2577 = vmul.f32 %v2575, 0.0
    %2579 = vrot.lane.b32.xlu0 %v2576, 64
    %v2580 = vpop.permute.xlu0 %2579
    %v2582 = vmul.f32 %v2575, %v2580
    %2584 = vrot.lane.b32.xlu0 %v2582, 32
    %v2585 = vpop.permute.xlu0 %2584
    %v2587 = vadd.f32 %v2577, %v2585
    %v2588 = vtanh.pop %v2587
    %2590 = vrot.lane.b32.xlu0 %v2588, 64
    %v2591 = vpop.permute.xlu0 %2590
    %v2593 = vmul.f32 %v2575, %v2591
    %v2594 = vpack.c.bf16 %v2593, %v2593
    %2596 = vrot.lane.b32.xlu0 %v2594, 32
    %v2597 = vpop.permute.xlu0 %2596
    %v2599 = vsel %vm745, %v2597, 0
    %2601 = vmatprep.subr.bf16.mxu0 0
    %2602 = vmatpush1.bf16.msra.mxu0 %v2184
    %2603 = vmatprep.subr.bf16.mxu0 0
    %2604 = vmatpush1.bf16.msra.mxu0 %v2185
    %2605 = vmatprep.subr.bf16.mxu0 0
    %2606 = vmatpush1.bf16.msra.mxu0 0
    %2607 = vmatprep.subr.bf16.mxu0 0
    %2608 = vmatpush1.bf16.msra.mxu0 0
    %2609 = vmatprep.subr.bf16.mxu0 0
    %2610 = vmatpush1.bf16.msra.mxu0 0
    %2611 = vmatprep.subr.bf16.mxu0 0
    %2612 = vmatpush1.bf16.msra.mxu0 0
    %2613 = vmatprep.subr.bf16.mxu0 0
    %2614 = vmatpush1.bf16.msra.mxu0 0
    %2615 = vmatprep.subr.bf16.mxu0 0
    %2616 = vmatpush1.bf16.msra.mxu0 0
    %2617 = vmatprep.subr.bf16.mxu0 0
    %2618 = vmatpush1.bf16.msra.mxu0 0
    %2619 = vmatprep.subr.bf16.mxu0 0
    %2620 = vmatpush1.bf16.msra.mxu0 0
    %2621 = vmatprep.subr.bf16.mxu0 0
    %2622 = vmatpush1.bf16.msra.mxu0 0
    %2623 = vmatprep.subr.bf16.mxu0 0
    %2624 = vmatpush1.bf16.msra.mxu0 0
    %2625 = vmatprep.subr.bf16.mxu0 0
    %2626 = vmatpush1.bf16.msra.mxu0 0
    %2627 = vmatprep.subr.bf16.mxu0 0
    %2628 = vmatpush1.bf16.msra.mxu0 0
    %2629 = vmatprep.subr.bf16.mxu0 0
    %2630 = vmatpush1.bf16.msra.mxu0 0
    %2631 = vmatprep.subr.bf16.mxu0 0
    %2632 = vmatpush1.bf16.msra.mxu0 0
    %2633 = vmatprep.mubr.bf16.mxu0 0
    %2634 = vmatmul.mubr.bf16.gmra.mrb[0].mxu0 %v2599
    %v2635 = vpop.f32.mrb[0].mxu0
    %v2636 = vadd.f32 0.0, %v2635
    %v2637 = vpop.f32.mrb[0].mxu0
    %v2638 = vpop.f32.mrb[0].mxu0
    %v2639 = vpop.f32.mrb[0].mxu0
    %2640 = vdwg.mxu0
    %v2642 = vrot.slane %v2636, 6
    %v2644 = vadd.f32 %v2564, %v2642
    %v2645 = vxor.u32 %v2644, 2147483648
    %v2646 = vmul.f32 %v2645, 1.442695
    %v2647 = vpow.pop %v2646
    %v2648 = vadd.f32 %v2647, 1.0
    %v2649 = vrcp.pop %v2648
    %v2650 = vmul.f32 1.0, %v2649
    %v2651 = vtanh.pop %v2644
    %v2653 = vrot.slane %v2587, 6
    %v2655 = vmul.f32 %v2650, %v2653
    %2657 = vrot.lane.b32.xlu0 %v2651, 64
    %v2658 = vpop.permute.xlu0 %2657
    %v2660 = vmul.f32 %v2650, %v2658
    %2662 = vrot.lane.b32.xlu0 %v2660, 32
    %v2663 = vpop.permute.xlu0 %2662
    %v2665 = vadd.f32 %v2655, %v2663
    %v2666 = vtanh.pop %v2665
    %2668 = vrot.lane.b32.xlu0 %v2666, 64
    %v2669 = vpop.permute.xlu0 %2668
    %v2671 = vmul.f32 %v2650, %v2669
    %v2672 = vld [vmem:[%s3] sm:$0x3]
    %v2673 = vpack.c.bf16 %v2671, %v2671
    %v2674 = vpack.c.bf16 %v1624, %v1624
    %v2676 = vsel %vm745, %v2674, 0
    %2678 = vmatprep.subr.bf16.mxu0 0
    %2679 = vmatpush1.bf16.msra.mxu0 %v1871
    %2680 = vmatprep.subr.bf16.mxu0 0
    %2681 = vmatpush1.bf16.msra.mxu0 %v1872
    %2682 = vmatprep.subr.bf16.mxu0 0
    %2683 = vmatpush1.bf16.msra.mxu0 0
    %2684 = vmatprep.subr.bf16.mxu0 0
    %2685 = vmatpush1.bf16.msra.mxu0 0
    %2686 = vmatprep.subr.bf16.mxu0 0
    %2687 = vmatpush1.bf16.msra.mxu0 0
    %2688 = vmatprep.subr.bf16.mxu0 0
    %2689 = vmatpush1.bf16.msra.mxu0 0
    %2690 = vmatprep.subr.bf16.mxu0 0
    %2691 = vmatpush1.bf16.msra.mxu0 0
    %2692 = vmatprep.subr.bf16.mxu0 0
    %2693 = vmatpush1.bf16.msra.mxu0 0
    %2694 = vmatprep.subr.bf16.mxu0 0
    %2695 = vmatpush1.bf16.msra.mxu0 0
    %2696 = vmatprep.subr.bf16.mxu0 0
    %2697 = vmatpush1.bf16.msra.mxu0 0
    %2698 = vmatprep.subr.bf16.mxu0 0
    %2699 = vmatpush1.bf16.msra.mxu0 0
    %2700 = vmatprep.subr.bf16.mxu0 0
    %2701 = vmatpush1.bf16.msra.mxu0 0
    %2702 = vmatprep.subr.bf16.mxu0 0
    %2703 = vmatpush1.bf16.msra.mxu0 0
    %2704 = vmatprep.subr.bf16.mxu0 0
    %2705 = vmatpush1.bf16.msra.mxu0 0
    %2706 = vmatprep.subr.bf16.mxu0 0
    %2707 = vmatpush1.bf16.msra.mxu0 0
    %2708 = vmatprep.subr.bf16.mxu0 0
    %2709 = vmatpush1.bf16.msra.mxu0 0
    %2710 = vmatprep.mubr.bf16.mxu0 0
    %2711 = vmatmul.mubr.bf16.gmra.mrb[0].mxu0 %v2676
    %v2712 = vpop.f32.mrb[0].mxu0
    %v2713 = vadd.f32 0.0, %v2712
    %v2714 = vpop.f32.mrb[0].mxu0
    %v2715 = vpop.f32.mrb[0].mxu0
    %v2716 = vpop.f32.mrb[0].mxu0
    %2717 = vdwg.mxu0
    %v2719 = vrot.slane %v2673, 1
    %2720 = vrot.lane.b32.xlu0 %v2719, 32
    %v2721 = vpop.permute.xlu0 %2720
    %v2723 = vsel %vm745, %v2721, 0
    %2725 = vmatprep.subr.bf16.mxu0 0
    %2726 = vmatpush1.bf16.msra.mxu0 %v1926
    %2727 = vmatprep.subr.bf16.mxu0 0
    %2728 = vmatpush1.bf16.msra.mxu0 %v1927
    %2729 = vmatprep.subr.bf16.mxu0 0
    %2730 = vmatpush1.bf16.msra.mxu0 0
    %2731 = vmatprep.subr.bf16.mxu0 0
    %2732 = vmatpush1.bf16.msra.mxu0 0
    %2733 = vmatprep.subr.bf16.mxu0 0
    %2734 = vmatpush1.bf16.msra.mxu0 0
    %2735 = vmatprep.subr.bf16.mxu0 0
    %2736 = vmatpush1.bf16.msra.mxu0 0
    %2737 = vmatprep.subr.bf16.mxu0 0
    %2738 = vmatpush1.bf16.msra.mxu0 0
    %2739 = vmatprep.subr.bf16.mxu0 0
    %2740 = vmatpush1.bf16.msra.mxu0 0
    %2741 = vmatprep.subr.bf16.mxu0 0
    %2742 = vmatpush1.bf16.msra.mxu0 0
    %2743 = vmatprep.subr.bf16.mxu0 0
    %2744 = vmatpush1.bf16.msra.mxu0 0
    %2745 = vmatprep.subr.bf16.mxu0 0
    %2746 = vmatpush1.bf16.msra.mxu0 0
    %2747 = vmatprep.subr.bf16.mxu0 0
    %2748 = vmatpush1.bf16.msra.mxu0 0
    %2749 = vmatprep.subr.bf16.mxu0 0
    %2750 = vmatpush1.bf16.msra.mxu0 0
    %2751 = vmatprep.subr.bf16.mxu0 0
    %2752 = vmatpush1.bf16.msra.mxu0 0
    %2753 = vmatprep.subr.bf16.mxu0 0
    %2754 = vmatpush1.bf16.msra.mxu0 0
    %2755 = vmatprep.subr.bf16.mxu0 0
    %2756 = vmatpush1.bf16.msra.mxu0 0
    %2757 = vmatprep.mubr.bf16.mxu0 0
    %2758 = vmatmul.mubr.bf16.gmra.mrb[0].mxu0 %v2723
    %v2759 = vpop.f32.mrb[0].mxu0
    %v2760 = vadd.f32 %v2713, %v2759
    %v2761 = vpop.f32.mrb[0].mxu0
    %v2762 = vpop.f32.mrb[0].mxu0
    %v2763 = vpop.f32.mrb[0].mxu0
    %2764 = vdwg.mxu0
    %v2765 = vpack.c.bf16 %v2672, %v2672
    %v2767 = vsel %vm1983, %v2765, 0
    %2769 = vmatprep.subr.bf16.mxu0 0
    %2770 = vmatpush1.bf16.msra.mxu0 %v1980
    %2771 = vmatprep.subr.bf16.mxu0 0
    %2772 = vmatpush1.bf16.msra.mxu0 %v1988
    %2773 = vmatprep.subr.bf16.mxu0 0
    %2774 = vmatpush1.bf16.msra.mxu0 0
    %2775 = vmatprep.subr.bf16.mxu0 0
    %2776 = vmatpush1.bf16.msra.mxu0 0
    %2777 = vmatprep.subr.bf16.mxu0 0
    %2778 = vmatpush1.bf16.msra.mxu0 0
    %2779 = vmatprep.subr.bf16.mxu0 0
    %2780 = vmatpush1.bf16.msra.mxu0 0
    %2781 = vmatprep.subr.bf16.mxu0 0
    %2782 = vmatpush1.bf16.msra.mxu0 0
    %2783 = vmatprep.subr.bf16.mxu0 0
    %2784 = vmatpush1.bf16.msra.mxu0 0
    %2785 = vmatprep.subr.bf16.mxu0 0
    %2786 = vmatpush1.bf16.msra.mxu0 0
    %2787 = vmatprep.subr.bf16.mxu0 0
    %2788 = vmatpush1.bf16.msra.mxu0 0
    %2789 = vmatprep.subr.bf16.mxu0 0
    %2790 = vmatpush1.bf16.msra.mxu0 0
    %2791 = vmatprep.subr.bf16.mxu0 0
    %2792 = vmatpush1.bf16.msra.mxu0 0
    %2793 = vmatprep.subr.bf16.mxu0 0
    %2794 = vmatpush1.bf16.msra.mxu0 0
    %2795 = vmatprep.subr.bf16.mxu0 0
    %2796 = vmatpush1.bf16.msra.mxu0 0
    %2797 = vmatprep.subr.bf16.mxu0 0
    %2798 = vmatpush1.bf16.msra.mxu0 0
    %2799 = vmatprep.subr.bf16.mxu0 0
    %2800 = vmatpush1.bf16.msra.mxu0 0
    %2801 = vmatprep.mubr.bf16.mxu0 0
    %2802 = vmatmul.mubr.bf16.gmra.mrb[0].mxu0 %v2767
    %v2803 = vpop.f32.mrb[0].mxu0
    %v2804 = vadd.f32 0.0, %v2803
    %v2805 = vpop.f32.mrb[0].mxu0
    %v2806 = vpop.f32.mrb[0].mxu0
    %v2807 = vpop.f32.mrb[0].mxu0
    %2808 = vdwg.mxu0
    %v2809 = vadd.f32 %v2760, %v2804
    %v2810 = vadd.f32 %v2809, %v2035
    %vm2811 = vcmp.gt.f32.partialorder %v2810, 0.0
    %v2812 = vmin.f32 %v2810, 0.0
    %v2813 = vmul.f32 %v2812, 1.442695
    %v2814 = vpow.pop %v2813
    %v2815 = vsub.f32 %v2814, 1.0
    %v2816 = vsel %vm2811, %v2810, %v2815
    %v2817 = vpack.c.bf16 %v2816, %v2816
    %v2819 = vsel %vm745, %v2817, 0
    %2821 = vmatprep.subr.bf16.mxu0 0
    %2822 = vmatpush1.bf16.msra.mxu0 %v2059
    %2823 = vmatprep.subr.bf16.mxu0 0
    %2824 = vmatpush1.bf16.msra.mxu0 %v2060
    %2825 = vmatprep.subr.bf16.mxu0 0
    %2826 = vmatpush1.bf16.msra.mxu0 0
    %2827 = vmatprep.subr.bf16.mxu0 0
    %2828 = vmatpush1.bf16.msra.mxu0 0
    %2829 = vmatprep.subr.bf16.mxu0 0
    %2830 = vmatpush1.bf16.msra.mxu0 0
    %2831 = vmatprep.subr.bf16.mxu0 0
    %2832 = vmatpush1.bf16.msra.mxu0 0
    %2833 = vmatprep.subr.bf16.mxu0 0
    %2834 = vmatpush1.bf16.msra.mxu0 0
    %2835 = vmatprep.subr.bf16.mxu0 0
    %2836 = vmatpush1.bf16.msra.mxu0 0
    %2837 = vmatprep.subr.bf16.mxu0 0
    %2838 = vmatpush1.bf16.msra.mxu0 0
    %2839 = vmatprep.subr.bf16.mxu0 0
    %2840 = vmatpush1.bf16.msra.mxu0 0
    %2841 = vmatprep.subr.bf16.mxu0 0
    %2842 = vmatpush1.bf16.msra.mxu0 0
    %2843 = vmatprep.subr.bf16.mxu0 0
    %2844 = vmatpush1.bf16.msra.mxu0 0
    %2845 = vmatprep.subr.bf16.mxu0 0
    %2846 = vmatpush1.bf16.msra.mxu0 0
    %2847 = vmatprep.subr.bf16.mxu0 0
    %2848 = vmatpush1.bf16.msra.mxu0 0
    %2849 = vmatprep.subr.bf16.mxu0 0
    %2850 = vmatpush1.bf16.msra.mxu0 0
    %2851 = vmatprep.subr.bf16.mxu0 0
    %2852 = vmatpush1.bf16.msra.mxu0 0
    %2853 = vmatprep.mubr.bf16.mxu0 0
    %2854 = vmatmul.mubr.bf16.gmra.mrb[0].mxu0 %v2819
    %v2855 = vpop.f32.mrb[0].mxu0
    %v2856 = vadd.f32 %v2049, %v2855
    %v2857 = vpop.f32.mrb[0].mxu0
    %v2858 = vpop.f32.mrb[0].mxu0
    %v2859 = vpop.f32.mrb[0].mxu0
    %2860 = vdwg.mxu0
    %vm2861 = vcmp.gt.f32.partialorder %v2856, 0.0
    %v2862 = vmin.f32 %v2856, 0.0
    %v2863 = vmul.f32 %v2862, 1.442695
    %v2864 = vpow.pop %v2863
    %v2865 = vsub.f32 %v2864, 1.0
    %v2866 = vsel %vm2861, %v2856, %v2865
    %v2867 = vpack.c.bf16 %v2866, %v2866
    %v2869 = vlaneseq
    %v2870 = vshrl.u32 %v2869, 7
    %v2871 = vsub.s32 0, %v2870
    %v2872 = vrot.slane %v457, %v2871
    %v2878 = vunpack.c.l.b16 %v453
    %v2879 = vunpack.c.l.b16 %v454
    %v2880 = vunpack.c.l.b16 %v455
    %v2881 = vunpack.c.l.b16 %v456
    %v2882 = vpack.c.b16 %v2879, %v2878
    %v2883 = vpack.c.b16 %v2881, %v2880
    %v2887 = vsel %vm745, %v2867, 0
    %2889 = vmatprep.subr.bf16.mxu0 0
    %2890 = vmatpush1.bf16.msra.mxu0 %v2882
    %2891 = vmatprep.subr.bf16.mxu0 0
    %2892 = vmatpush1.bf16.msra.mxu0 %v2883
    %2893 = vmatprep.subr.bf16.mxu0 0
    %2894 = vmatpush1.bf16.msra.mxu0 0
    %2895 = vmatprep.subr.bf16.mxu0 0
    %2896 = vmatpush1.bf16.msra.mxu0 0
    %2897 = vmatprep.subr.bf16.mxu0 0
    %2898 = vmatpush1.bf16.msra.mxu0 0
    %2899 = vmatprep.subr.bf16.mxu0 0
    %2900 = vmatpush1.bf16.msra.mxu0 0
    %2901 = vmatprep.subr.bf16.mxu0 0
    %2902 = vmatpush1.bf16.msra.mxu0 0
    %2903 = vmatprep.subr.bf16.mxu0 0
    %2904 = vmatpush1.bf16.msra.mxu0 0
    %2905 = vmatprep.subr.bf16.mxu0 0
    %2906 = vmatpush1.bf16.msra.mxu0 0
    %2907 = vmatprep.subr.bf16.mxu0 0
    %2908 = vmatpush1.bf16.msra.mxu0 0
    %2909 = vmatprep.subr.bf16.mxu0 0
    %2910 = vmatpush1.bf16.msra.mxu0 0
    %2911 = vmatprep.subr.bf16.mxu0 0
    %2912 = vmatpush1.bf16.msra.mxu0 0
    %2913 = vmatprep.subr.bf16.mxu0 0
    %2914 = vmatpush1.bf16.msra.mxu0 0
    %2915 = vmatprep.subr.bf16.mxu0 0
    %2916 = vmatpush1.bf16.msra.mxu0 0
    %2917 = vmatprep.subr.bf16.mxu0 0
    %2918 = vmatpush1.bf16.msra.mxu0 0
    %2919 = vmatprep.subr.bf16.mxu0 0
    %2920 = vmatpush1.bf16.msra.mxu0 0
    %2921 = vmatprep.mubr.bf16.mxu0 0
    %2922 = vmatmul.mubr.bf16.gmra.mrb[0].mxu0 %v2887
    %v2923 = vpop.f32.mrb[0].mxu0
    %v2924 = vadd.f32 %v2872, %v2923
    %v2925 = vpop.f32.mrb[0].mxu0
    %v2926 = vpop.f32.mrb[0].mxu0
    %v2927 = vpop.f32.mrb[0].mxu0
    %2928 = vdwg.mxu0
    %vm2929 = vcmp.gt.f32.partialorder %v2924, 0.0
    %v2930 = vmin.f32 %v2924, 0.0
    %v2931 = vmul.f32 %v2930, 1.442695
    %v2932 = vpow.pop %v2931
    %v2933 = vsub.f32 %v2932, 1.0
    %v2934 = vsel %vm2929, %v2924, %v2933
    %v2935 = vpack.c.bf16 %v2934, %v2934
    %v2937 = vlaneseq
    %v2938 = vshrl.u32 %v2937, 7
    %v2939 = vsub.s32 0, %v2938
    %v2940 = vrot.slane %v462, %v2939
    %v2946 = vunpack.c.l.b16 %v458
    %v2947 = vunpack.c.l.b16 %v459
    %v2948 = vunpack.c.l.b16 %v460
    %v2949 = vunpack.c.l.b16 %v461
    %v2950 = vpack.c.b16 %v2947, %v2946
    %v2951 = vpack.c.b16 %v2949, %v2948
    %v2955 = vsel %vm745, %v2935, 0
    %2957 = vmatprep.subr.bf16.mxu0 0
    %2958 = vmatpush1.bf16.msra.mxu0 %v2950
    %2959 = vmatprep.subr.bf16.mxu0 0
    %2960 = vmatpush1.bf16.msra.mxu0 %v2951
    %2961 = vmatprep.subr.bf16.mxu0 0
    %2962 = vmatpush1.bf16.msra.mxu0 0
    %2963 = vmatprep.subr.bf16.mxu0 0
    %2964 = vmatpush1.bf16.msra.mxu0 0
    %2965 = vmatprep.subr.bf16.mxu0 0
    %2966 = vmatpush1.bf16.msra.mxu0 0
    %2967 = vmatprep.subr.bf16.mxu0 0
    %2968 = vmatpush1.bf16.msra.mxu0 0
    %2969 = vmatprep.subr.bf16.mxu0 0
    %2970 = vmatpush1.bf16.msra.mxu0 0
    %2971 = vmatprep.subr.bf16.mxu0 0
    %2972 = vmatpush1.bf16.msra.mxu0 0
    %2973 = vmatprep.subr.bf16.mxu0 0
    %2974 = vmatpush1.bf16.msra.mxu0 0
    %2975 = vmatprep.subr.bf16.mxu0 0
    %2976 = vmatpush1.bf16.msra.mxu0 0
    %2977 = vmatprep.subr.bf16.mxu0 0
    %2978 = vmatpush1.bf16.msra.mxu0 0
    %2979 = vmatprep.subr.bf16.mxu0 0
    %2980 = vmatpush1.bf16.msra.mxu0 0
    %2981 = vmatprep.subr.bf16.mxu0 0
    %2982 = vmatpush1.bf16.msra.mxu0 0
    %2983 = vmatprep.subr.bf16.mxu0 0
    %2984 = vmatpush1.bf16.msra.mxu0 0
    %2985 = vmatprep.subr.bf16.mxu0 0
    %2986 = vmatpush1.bf16.msra.mxu0 0
    %2987 = vmatprep.subr.bf16.mxu0 0
    %2988 = vmatpush1.bf16.msra.mxu0 0
    %2989 = vmatprep.mubr.bf16.mxu0 0
    %2990 = vmatmul.mubr.bf16.gmra.mrb[0].mxu0 %v2955
    %v2991 = vpop.f32.mrb[0].mxu0
    %v2992 = vadd.f32 %v2940, %v2991
    %v2993 = vpop.f32.mrb[0].mxu0
    %v2994 = vpop.f32.mrb[0].mxu0
    %v2995 = vpop.f32.mrb[0].mxu0
    %2996 = vdwg.mxu0
    %vm2997 = vcmp.gt.f32.partialorder %v2992, 0.0
    %v2998 = vmin.f32 %v2992, 0.0
    %v2999 = vmul.f32 %v2998, 1.442695
    %v3000 = vpow.pop %v2999
    %v3001 = vsub.f32 %v3000, 1.0
    %v3002 = vsel %vm2997, %v2992, %v3001
    %v3003 = vpack.c.bf16 %v3002, %v3002
    %v3005 = vlaneseq
    %v3006 = vshrl.u32 %v3005, 7
    %v3007 = vsub.s32 0, %v3006
    %v3008 = vrot.slane %v467, %v3007
    %v3014 = vunpack.c.l.b16 %v463
    %v3015 = vunpack.c.l.b16 %v464
    %v3016 = vunpack.c.l.b16 %v465
    %v3017 = vunpack.c.l.b16 %v466
    %v3018 = vpack.c.b16 %v3015, %v3014
    %v3019 = vpack.c.b16 %v3017, %v3016
    %v3023 = vsel %vm745, %v3003, 0
    %3025 = vmatprep.subr.bf16.mxu0 0
    %3026 = vmatpush1.bf16.msra.mxu0 %v3018
    %3027 = vmatprep.subr.bf16.mxu0 0
    %3028 = vmatpush1.bf16.msra.mxu0 %v3019
    %3029 = vmatprep.subr.bf16.mxu0 0
    %3030 = vmatpush1.bf16.msra.mxu0 0
    %3031 = vmatprep.subr.bf16.mxu0 0
    %3032 = vmatpush1.bf16.msra.mxu0 0
    %3033 = vmatprep.subr.bf16.mxu0 0
    %3034 = vmatpush1.bf16.msra.mxu0 0
    %3035 = vmatprep.subr.bf16.mxu0 0
    %3036 = vmatpush1.bf16.msra.mxu0 0
    %3037 = vmatprep.subr.bf16.mxu0 0
    %3038 = vmatpush1.bf16.msra.mxu0 0
    %3039 = vmatprep.subr.bf16.mxu0 0
    %3040 = vmatpush1.bf16.msra.mxu0 0
    %3041 = vmatprep.subr.bf16.mxu0 0
    %3042 = vmatpush1.bf16.msra.mxu0 0
    %3043 = vmatprep.subr.bf16.mxu0 0
    %3044 = vmatpush1.bf16.msra.mxu0 0
    %3045 = vmatprep.subr.bf16.mxu0 0
    %3046 = vmatpush1.bf16.msra.mxu0 0
    %3047 = vmatprep.subr.bf16.mxu0 0
    %3048 = vmatpush1.bf16.msra.mxu0 0
    %3049 = vmatprep.subr.bf16.mxu0 0
    %3050 = vmatpush1.bf16.msra.mxu0 0
    %3051 = vmatprep.subr.bf16.mxu0 0
    %3052 = vmatpush1.bf16.msra.mxu0 0
    %3053 = vmatprep.subr.bf16.mxu0 0
    %3054 = vmatpush1.bf16.msra.mxu0 0
    %3055 = vmatprep.subr.bf16.mxu0 0
    %3056 = vmatpush1.bf16.msra.mxu0 0
    %3057 = vmatprep.mubr.bf16.mxu0 0
    %3058 = vmatmul.mubr.bf16.gmra.mrb[0].mxu0 %v3023
    %v3059 = vpop.f32.mrb[0].mxu0
    %v3060 = vadd.f32 %v3008, %v3059
    %v3061 = vpop.f32.mrb[0].mxu0
    %v3062 = vpop.f32.mrb[0].mxu0
    %v3063 = vpop.f32.mrb[0].mxu0
    %3064 = vdwg.mxu0
    %v3065 = vmax.f32 %v3060, 0.0
    %vm3066 = vcmask 1024
    %3067 = vst.msk [vmem:[%s79] sm:$0x3] %vm3066, %v3065
    // Predicated region
    $region222: #{forward.1} parent=1 // pred_check
      _
    $region223: #{forward.1} parent=1 // pred_check_branch
      %3069 = sbr.rel (0) target = $region225
    $region224: #{forward.1} parent=1 // pred_region
      _
    $region225: #{forward.1} parent=1 // pred_fallthru
      _
    // Predicated region
    $region226: #{forward.1} parent=1 // pred_check
      _
    $region227: #{forward.1} parent=1 // pred_check_branch
      %3071 = sbr.rel (0) target = $region229
    $region228: #{forward.1} parent=1 // pred_region
      _
    $region229: #{forward.1} parent=1 // pred_fallthru
      _
    %3072 = vsyncpa [#allocation4], 1
    %3073 = vsyncpa [#allocation6], 1
    %3074 = vsyncpa [#allocation9], 1
    %3075 = vsyncpa [#allocation12], 1
    %3076 = vsyncpa [#allocation15], 1
    %3077 = vsyncpa [#allocation18], 1
    %3078 = vsyncpa [#allocation21], 1
    %3079 = vsyncpa [#allocation24], 1
    %3080 = vsyncpa [#allocation27], 1

</llo_original>
